<compile_context>
chip_gen: v6e
topology: v6e:2x2x1
jax: 0.10.0
libtpu: 0.0.40
codegen_flags: <defaults>
</compile_context>

<pallas_src>
import math

import numpy as np

import jax
import jax.numpy as jnp
from jax.experimental import pallas as pl
from jax.experimental.pallas import tpu as pltpu


# ---- static network geometry (matches the PyTorch Net on 3x32x32 input) ----
KH = KW = 5
C1, H1, W1 = 3, 32, 32
OC1 = 6
OH1, OW1 = H1 - KH + 1, W1 - KW + 1          # 28, 28
PH1, PW1 = OH1 // 2, OW1 // 2                # 14, 14  (after pool)
C2 = OC1                                     # 6
OC2 = 16
OH2, OW2 = PH1 - KH + 1, PW1 - KW + 1        # 10, 10
PH2, PW2 = OH2 // 2, OW2 // 2                # 5, 5
FC1_OUT, FC2_OUT, FC3_OUT = 120, 84, 10
LANES = 128                                   # lane-dense padded width
TB = 8                                        # batch elements per grid step


# ------------------------------ fused kernel --------------------------------

def _net_kernel(x_ref, t1_ref, bc1_ref, sel1_ref, t2_ref, bc2_ref, sel2_ref,
                w1_ref, b1_ref, w2_ref, b2_ref, w3_ref, b3_ref, o_ref):
    """Whole forward for TB images.

    x_ref : (TB*H1, 128)  channels-in-lanes input, lane = c*W1 + w, rows = b*H1 + h.
    t*_ref: (KH, 128, 256) Toeplitz slabs; output cols parity-major
            col = dw*128 + oc*(ow//2) + owp with ow = 2*owp + dw, so the 2x2
            maxpool is max(half0, half1) + adjacent-row max + even-row select.
    sel*_ref: precomputed even-row selection matrices (H-pool via one matmul).
    o_ref : (TB, 128) logits rows (lanes >= 10 are padding).
    """
    tb = o_ref.shape[0]
    mr1 = tb * H1 - KH + 1        # conv1 valid rows per block (+ inter-image junk rows)
    mr2 = tb * PH1 - KH + 1

    # ---- conv1 + bias + ReLU + 2x2 pool (channels folded into K) ----
    acc = jnp.dot(x_ref[0:mr1, :], t1_ref[0], preferred_element_type=jnp.float32)
    for kh in range(1, KH):
        acc = acc + jnp.dot(x_ref[kh:kh + mr1, :], t1_ref[kh],
                            preferred_element_type=jnp.float32)
    acc = jnp.maximum(acc + bc1_ref[...], 0.0)
    wp = jnp.maximum(acc[:, :LANES], acc[:, LANES:])          # pool along W
    hm = jnp.maximum(wp[:mr1 - 1, :], wp[1:, :])              # adjacent-row max
    pool1 = jnp.dot(sel1_ref[...], hm,                        # (tb*PH1, 128)
                    preferred_element_type=jnp.float32)       # row = b*14 + p

    # ---- conv2 + bias + ReLU + 2x2 pool ----
    acc = jnp.dot(pool1[0:mr2, :], t2_ref[0], preferred_element_type=jnp.float32)
    for kh in range(1, KH):
        acc = acc + jnp.dot(pool1[kh:kh + mr2, :], t2_ref[kh],
                            preferred_element_type=jnp.float32)
    acc = jnp.maximum(acc + bc2_ref[...], 0.0)
    wp = jnp.maximum(acc[:, :LANES], acc[:, LANES:])
    hm = jnp.maximum(wp[:mr2 - 1, :], wp[1:, :])
    pool2 = jnp.dot(sel2_ref[...], hm,                        # (PH2*tb, 128)
                    preferred_element_type=jnp.float32)       # row = p*tb + b

    # ---- fc1 (NCHW flatten folded into w1p), fc2, fc3 -- all with M = tb ----
    h1 = jnp.dot(pool2[0:tb, :], w1_ref[0], preferred_element_type=jnp.float32)
    for h in range(1, PH2):
        h1 = h1 + jnp.dot(pool2[h * tb:(h + 1) * tb, :], w1_ref[h],
                          preferred_element_type=jnp.float32)
    h1 = jnp.maximum(h1 + b1_ref[...], 0.0)
    h2 = jnp.maximum(jnp.dot(h1, w2_ref[...], preferred_element_type=jnp.float32)
                     + b2_ref[...], 0.0)
    o_ref[...] = (jnp.dot(h2, w3_ref[...], preferred_element_type=jnp.float32)
                  + b3_ref[...])


# ----------------------- one-time parameter preparation ----------------------

def _toeplitz_conv(w_oihw, bias, in_w):
    """Lower a 5x5 valid conv to KH Toeplitz slabs (channels folded into K).

    Input lane = c*in_w + iw; output col = dw*128 + oc*(ow//2) + owp with
    ow = 2*owp + dw (parity-major so W-pooling is max of the two 128-lane halves).
    """
    w = np.asarray(w_oihw, np.float32)
    b = np.asarray(bias, np.float32)
    oc, c_in, kh_n, kw_n = w.shape
    ow = in_w - kw_n + 1
    owh = ow // 2
    assert oc * owh <= LANES and c_in * in_w <= LANES
    t = np.zeros((kh_n, LANES, 2 * LANES), np.float32)
    ocs = np.arange(oc)
    for kh in range(kh_n):
        for c in range(c_in):
            for dw in range(2):
                for op in range(owh):
                    ow_full = 2 * op + dw
                    cols = dw * LANES + ocs * owh + op
                    for kw in range(kw_n):
                        t[kh, c * in_w + ow_full + kw, cols] = w[:, c, kh, kw]
    brow = np.zeros((1, 2 * LANES), np.float32)
    for dw in range(2):
        for o in range(oc):
            brow[0, dw * LANES + o * owh: dw * LANES + (o + 1) * owh] = b[o]
    return jnp.asarray(t), jnp.asarray(brow)


def _pool_select(tb, rows_per_img, pooled_per_img, pool_major):
    """Even-row selection matrix S: pooled = S @ hm with hm[m]=max(wp[m],wp[m+1]).

    S[out_row, b*rows_per_img + 2*p] = 1, out_row = b*pooled+p (batch-major) or
    p*tb+b (pool-major, so fc1 can slice contiguous M=tb slabs)."""
    cols = tb * rows_per_img - KH
    s = np.zeros((tb * pooled_per_img, cols), np.float32)
    for b in range(tb):
        for p in range(pooled_per_img):
            r = p * tb + b if pool_major else b * pooled_per_img + p
            s[r, b * rows_per_img + 2 * p] = 1.0
    return jnp.asarray(s)


def _fold_fc1(w, b):
    """fc1 (120,400): fold torch's view(-1,16*5*5) NCHW flatten into the packed
    pooled-conv2 layout (row = p*tb+b, lane = c*PW2 + w); pad out-dim to 128."""
    w = np.asarray(w, np.float32)
    b = np.asarray(b, np.float32)
    w1p = np.zeros((PH2, LANES, LANES), np.float32)
    for h in range(PH2):
        for c in range(OC2):
            for ww in range(PW2):
                col = c * PW2 + ww                       # lane in pooled conv2 tile
                feat = c * (PH2 * PW2) + h * PW2 + ww    # torch flat index
                w1p[h, col, :FC1_OUT] = w[:, feat]
    b1 = np.zeros((1, LANES), np.float32)
    b1[0, :FC1_OUT] = b
    return jnp.asarray(w1p), jnp.asarray(b1)


def _pad_fc(w, b):
    """torch Linear (out,in) -> pre-transposed, zero-padded (128, 128)."""
    w = np.asarray(w, np.float32)
    b = np.asarray(b, np.float32)
    out_d, in_d = w.shape
    wp = np.zeros((LANES, LANES), np.float32)
    wp[:in_d, :out_d] = w.T
    bp = np.zeros((1, LANES), np.float32)
    bp[0, :out_d] = b
    return jnp.asarray(wp), jnp.asarray(bp)


def prepare_params(params, tb=TB):
    """One-time packing of torch-layout params into kernel-ready tensors."""
    t1, b1row = _toeplitz_conv(params["conv1_w"], params["conv1_b"], W1)
    t2, b2row = _toeplitz_conv(params["conv2_w"], params["conv2_b"], PW1)
    w1p, b1p = _fold_fc1(params["fc1_w"], params["fc1_b"])
    w2p, b2p = _pad_fc(params["fc2_w"], params["fc2_b"])
    w3p, b3p = _pad_fc(params["fc3_w"], params["fc3_b"])
    sel1 = _pool_select(tb, H1, PH1, pool_major=False)   # (tb*14, tb*32-5)
    sel2 = _pool_select(tb, PH1, PH2, pool_major=True)   # (5*tb,  tb*14-5)
    return dict(t1=t1, b1row=b1row, t2=t2, b2row=b2row, sel1=sel1, sel2=sel2,
                w1p=w1p, b1p=b1p, w2p=w2p, b2p=b2p, w3p=w3p, b3p=b3p)


# ------------------------------- Net forward ---------------------------------

def net_forward(prep, x_nchw):
    tb = TB
    n = x_nchw.shape[0]
    nb = pl.cdiv(n, tb)
    n_pad = nb * tb

    # One-time per-forward input packing (single XLA transpose/pad/reshape):
    # channels-in-lanes, batch and height flattened into the matmul M dim.
    xp = jnp.transpose(x_nchw, (0, 2, 1, 3)).reshape(n, H1, C1 * W1)
    xp = jnp.pad(xp, ((0, n_pad - n), (0, 0), (0, LANES - C1 * W1)))
    xp = xp.reshape(n_pad * H1, LANES)

    mr1 = tb * H1 - KH + 1
    mr2 = tb * PH1 - KH + 1

    out = pl.pallas_call(
        _net_kernel,
        grid=(nb,),
        in_specs=[
            pl.BlockSpec((tb * H1, LANES), lambda i: (i, 0)),            # x
            pl.BlockSpec((KH, LANES, 2 * LANES), lambda i: (0, 0, 0)),   # t1
            pl.BlockSpec((1, 2 * LANES), lambda i: (0, 0)),              # conv1 bias row
            pl.BlockSpec((tb * PH1, mr1 - 1), lambda i: (0, 0)),         # sel1
            pl.BlockSpec((KH, LANES, 2 * LANES), lambda i: (0, 0, 0)),   # t2
            pl.BlockSpec((1, 2 * LANES), lambda i: (0, 0)),              # conv2 bias row
            pl.BlockSpec((PH2 * tb, mr2 - 1), lambda i: (0, 0)),         # sel2
            pl.BlockSpec((PH2, LANES, LANES), lambda i: (0, 0, 0)),      # w1p
            pl.BlockSpec((1, LANES), lambda i: (0, 0)),                  # b1p
            pl.BlockSpec((LANES, LANES), lambda i: (0, 0)),              # w2p
            pl.BlockSpec((1, LANES), lambda i: (0, 0)),                  # b2p
            pl.BlockSpec((LANES, LANES), lambda i: (0, 0)),              # w3p
            pl.BlockSpec((1, LANES), lambda i: (0, 0)),                  # b3p
        ],
        out_specs=pl.BlockSpec((tb, LANES), lambda i: (i, 0)),
        out_shape=jax.ShapeDtypeStruct((n_pad, LANES), jnp.float32),
        compiler_params=pltpu.CompilerParams(
            dimension_semantics=("parallel",)),
    )(xp, prep["t1"], prep["b1row"], prep["sel1"], prep["t2"], prep["b2row"],
      prep["sel2"], prep["w1p"], prep["b1p"], prep["w2p"], prep["b2p"],
      prep["w3p"], prep["b3p"])

    return out[:n, :FC3_OUT]


# ------------------------------ init + reference -----------------------------

def init_params(key):
    """Deterministic init mirroring torch's default U(-1/sqrt(fan_in), ...)."""
    def uni(k, shape, fan_in):
        bound = 1.0 / math.sqrt(fan_in)
        return jax.random.uniform(k, shape, jnp.float32, -bound, bound)

    ks = jax.random.split(key, 10)
    return {
        "conv1_w": uni(ks[0], (OC1, C1, KH, KW), C1 * KH * KW),
        "conv1_b": uni(ks[1], (OC1,), C1 * KH * KW),
        "conv2_w": uni(ks[2], (OC2, C2, KH, KW), C2 * KH * KW),
        "conv2_b": uni(ks[3], (OC2,), C2 * KH * KW),
        "fc1_w": uni(ks[4], (FC1_OUT, OC2 * PH2 * PW2), OC2 * PH2 * PW2),
        "fc1_b": uni(ks[5], (FC1_OUT,), OC2 * PH2 * PW2),
        "fc2_w": uni(ks[6], (FC2_OUT, FC1_OUT), FC1_OUT),
        "fc2_b": uni(ks[7], (FC2_OUT,), FC1_OUT),
        "fc3_w": uni(ks[8], (FC3_OUT, FC2_OUT), FC2_OUT),
        "fc3_b": uni(ks[9], (FC3_OUT,), FC2_OUT),
    }


def reference_forward(params, x):
    """Pure-JAX reference of the PyTorch forward (for the built-in self-check)."""
    hi = jax.lax.Precision.HIGHEST
    dn = ("NCHW", "OIHW", "NCHW")
    y = jax.lax.conv_general_dilated(x, params["conv1_w"], (1, 1), "VALID",
                                     dimension_numbers=dn, precision=hi)
    y = jax.nn.relu(y + params["conv1_b"][None, :, None, None])
    y = jax.lax.reduce_window(y, -jnp.inf, jax.lax.max,
                              (1, 1, 2, 2), (1, 1, 2, 2), "VALID")
    y = jax.lax.conv_general_dilated(y, params["conv2_w"], (1, 1), "VALID",
                                     dimension_numbers=dn, precision=hi)
    y = jax.nn.relu(y + params["conv2_b"][None, :, None, None])
    y = jax.lax.reduce_window(y, -jnp.inf, jax.lax.max,
                              (1, 1, 2, 2), (1, 1, 2, 2), "VALID")
    y = y.reshape(y.shape[0], -1)
    y = jax.nn.relu(jnp.dot(y, params["fc1_w"].T, precision=hi) + params["fc1_b"])
    y = jax.nn.relu(jnp.dot(y, params["fc2_w"].T, precision=hi) + params["fc2_b"])
    return jnp.dot(y, params["fc3_w"].T, precision=hi) + params["fc3_b"]


if __name__ == "__main__":
    key = jax.random.PRNGKey(0)
    pkey, xkey = jax.random.split(key)
    params = init_params(pkey)
    prep = prepare_params(params)        # one-time weight packing (no per-forward .T / reshapes)

    # Input must be 3x32x32 so the flatten matches fc1's 16*5*5 input.
    # Batch 16 with TB=8 -> 2 grid steps (even split across v7x's two TensorCores).
    n = 16
    x = jax.random.normal(xkey, (n, C1, H1, W1), jnp.float32)

    out = jax.jit(net_forward)(prep, x)
    out = jax.block_until_ready(out)
    assert out.shape == (n, FC3_OUT) and out.dtype == jnp.float32

    ref = reference_forward(params, x)
    err = float(jnp.max(jnp.abs(out - ref)))
    assert err < 3e-2, f"mismatch vs reference: {err}"
    print("KERNEL_OK")
</pallas_src>

<mosaic_0001>
module attributes {stable_mosaic.version = 11 : i64} {
  func.func @_net_kernel(%arg0: i32, %arg1: memref<256x128xf32, #tpu.memory_space<vmem>>, %arg2: memref<5x128x256xf32, #tpu.memory_space<vmem>>, %arg3: memref<1x256xf32, #tpu.memory_space<vmem>>, %arg4: memref<112x251xf32, #tpu.memory_space<vmem>>, %arg5: memref<5x128x256xf32, #tpu.memory_space<vmem>>, %arg6: memref<1x256xf32, #tpu.memory_space<vmem>>, %arg7: memref<40x107xf32, #tpu.memory_space<vmem>>, %arg8: memref<5x128x128xf32, #tpu.memory_space<vmem>>, %arg9: memref<1x128xf32, #tpu.memory_space<vmem>>, %arg10: memref<128x128xf32, #tpu.memory_space<vmem>>, %arg11: memref<1x128xf32, #tpu.memory_space<vmem>>, %arg12: memref<128x128xf32, #tpu.memory_space<vmem>>, %arg13: memref<1x128xf32, #tpu.memory_space<vmem>>, %arg14: memref<8x128xf32, #tpu.memory_space<vmem>>) attributes {dimension_semantics = [#tpu.dimension_semantics<parallel>], iteration_bounds = array<i64: 2>, scalar_prefetch = 0 : i64, scratch_operands = 0 : i64, tpu.core_type = #tpu.core_type<tc>, window_params = [{transform_indices = @transform_0, window_bounds = array<i64: 256, 128>}, {pipeline_mode = #tpu.pipeline_mode<synchronous>, transform_indices = @transform_1, window_bounds = array<i64: 5, 128, 256>}, {pipeline_mode = #tpu.pipeline_mode<synchronous>, transform_indices = @transform_2, window_bounds = array<i64: 1, 256>}, {pipeline_mode = #tpu.pipeline_mode<synchronous>, transform_indices = @transform_3, window_bounds = array<i64: 112, 251>}, {pipeline_mode = #tpu.pipeline_mode<synchronous>, transform_indices = @transform_4, window_bounds = array<i64: 5, 128, 256>}, {pipeline_mode = #tpu.pipeline_mode<synchronous>, transform_indices = @transform_5, window_bounds = array<i64: 1, 256>}, {pipeline_mode = #tpu.pipeline_mode<synchronous>, transform_indices = @transform_6, window_bounds = array<i64: 40, 107>}, {pipeline_mode = #tpu.pipeline_mode<synchronous>, transform_indices = @transform_7, window_bounds = array<i64: 5, 128, 128>}, {pipeline_mode = #tpu.pipeline_mode<synchronous>, transform_indices = @transform_8, window_bounds = array<i64: 1, 128>}, {pipeline_mode = #tpu.pipeline_mode<synchronous>, transform_indices = @transform_9, window_bounds = array<i64: 128, 128>}, {pipeline_mode = #tpu.pipeline_mode<synchronous>, transform_indices = @transform_10, window_bounds = array<i64: 1, 128>}, {pipeline_mode = #tpu.pipeline_mode<synchronous>, transform_indices = @transform_11, window_bounds = array<i64: 128, 128>}, {pipeline_mode = #tpu.pipeline_mode<synchronous>, transform_indices = @transform_12, window_bounds = array<i64: 1, 128>}, {transform_indices = @transform_13, window_bounds = array<i64: 8, 128>}]} {
    %c0 = arith.constant 0 : index
    %c0_0 = arith.constant 0 : index
    %0 = vector.load %arg1[%c0, %c0_0] : memref<256x128xf32, #tpu.memory_space<vmem>>, vector<252x128xf32>
    %c0_1 = arith.constant 0 : index
    %c0_2 = arith.constant 0 : index
    %c0_3 = arith.constant 0 : index
    %1 = vector.load %arg2[%c0_1, %c0_2, %c0_3] : memref<5x128x256xf32, #tpu.memory_space<vmem>>, vector<1x128x256xf32>
    %2 = vector.shape_cast %1 : vector<1x128x256xf32> to vector<128x256xf32>
    %cst = arith.constant dense<0.000000e+00> : vector<252x256xf32>
    %3 = tpu.matmul %0, %2, %cst {dimension_numbers = #tpu.dot_dimension_numbers<[1], [0], [0], [1], [0, 0, 1, 1], [], []>} : vector<252x128xf32>, vector<128x256xf32>, vector<252x256xf32> -> vector<252x256xf32>
    %c1 = arith.constant 1 : index
    %c0_4 = arith.constant 0 : index
    %4 = vector.load %arg1[%c1, %c0_4] : memref<256x128xf32, #tpu.memory_space<vmem>>, vector<252x128xf32>
    %c1_5 = arith.constant 1 : index
    %c0_6 = arith.constant 0 : index
    %c0_7 = arith.constant 0 : index
    %5 = vector.load %arg2[%c1_5, %c0_6, %c0_7] : memref<5x128x256xf32, #tpu.memory_space<vmem>>, vector<1x128x256xf32>
    %6 = vector.shape_cast %5 : vector<1x128x256xf32> to vector<128x256xf32>
    %cst_8 = arith.constant dense<0.000000e+00> : vector<252x256xf32>
    %7 = tpu.matmul %4, %6, %cst_8 {dimension_numbers = #tpu.dot_dimension_numbers<[1], [0], [0], [1], [0, 0, 1, 1], [], []>} : vector<252x128xf32>, vector<128x256xf32>, vector<252x256xf32> -> vector<252x256xf32>
    %8 = arith.addf %3, %7 : vector<252x256xf32>
    %c2 = arith.constant 2 : index
    %c0_9 = arith.constant 0 : index
    %9 = vector.load %arg1[%c2, %c0_9] : memref<256x128xf32, #tpu.memory_space<vmem>>, vector<252x128xf32>
    %c2_10 = arith.constant 2 : index
    %c0_11 = arith.constant 0 : index
    %c0_12 = arith.constant 0 : index
    %10 = vector.load %arg2[%c2_10, %c0_11, %c0_12] : memref<5x128x256xf32, #tpu.memory_space<vmem>>, vector<1x128x256xf32>
    %11 = vector.shape_cast %10 : vector<1x128x256xf32> to vector<128x256xf32>
    %cst_13 = arith.constant dense<0.000000e+00> : vector<252x256xf32>
    %12 = tpu.matmul %9, %11, %cst_13 {dimension_numbers = #tpu.dot_dimension_numbers<[1], [0], [0], [1], [0, 0, 1, 1], [], []>} : vector<252x128xf32>, vector<128x256xf32>, vector<252x256xf32> -> vector<252x256xf32>
    %13 = arith.addf %8, %12 : vector<252x256xf32>
    %c3 = arith.constant 3 : index
    %c0_14 = arith.constant 0 : index
    %14 = vector.load %arg1[%c3, %c0_14] : memref<256x128xf32, #tpu.memory_space<vmem>>, vector<252x128xf32>
    %c3_15 = arith.constant 3 : index
    %c0_16 = arith.constant 0 : index
    %c0_17 = arith.constant 0 : index
    %15 = vector.load %arg2[%c3_15, %c0_16, %c0_17] : memref<5x128x256xf32, #tpu.memory_space<vmem>>, vector<1x128x256xf32>
    %16 = vector.shape_cast %15 : vector<1x128x256xf32> to vector<128x256xf32>
    %cst_18 = arith.constant dense<0.000000e+00> : vector<252x256xf32>
    %17 = tpu.matmul %14, %16, %cst_18 {dimension_numbers = #tpu.dot_dimension_numbers<[1], [0], [0], [1], [0, 0, 1, 1], [], []>} : vector<252x128xf32>, vector<128x256xf32>, vector<252x256xf32> -> vector<252x256xf32>
    %18 = arith.addf %13, %17 : vector<252x256xf32>
    %c4 = arith.constant 4 : index
    %c0_19 = arith.constant 0 : index
    %19 = vector.load %arg1[%c4, %c0_19] : memref<256x128xf32, #tpu.memory_space<vmem>>, vector<252x128xf32>
    %c4_20 = arith.constant 4 : index
    %c0_21 = arith.constant 0 : index
    %c0_22 = arith.constant 0 : index
    %20 = vector.load %arg2[%c4_20, %c0_21, %c0_22] : memref<5x128x256xf32, #tpu.memory_space<vmem>>, vector<1x128x256xf32>
    %21 = vector.shape_cast %20 : vector<1x128x256xf32> to vector<128x256xf32>
    %cst_23 = arith.constant dense<0.000000e+00> : vector<252x256xf32>
    %22 = tpu.matmul %19, %21, %cst_23 {dimension_numbers = #tpu.dot_dimension_numbers<[1], [0], [0], [1], [0, 0, 1, 1], [], []>} : vector<252x128xf32>, vector<128x256xf32>, vector<252x256xf32> -> vector<252x256xf32>
    %23 = arith.addf %18, %22 : vector<252x256xf32>
    %c0_24 = arith.constant 0 : index
    %c0_25 = arith.constant 0 : index
    %24 = vector.load %arg3[%c0_24, %c0_25] : memref<1x256xf32, #tpu.memory_space<vmem>>, vector<1x256xf32>
    %25 = vector.broadcast %24 : vector<1x256xf32> to vector<252x256xf32>
    %26 = arith.addf %23, %25 : vector<252x256xf32>
    %cst_26 = arith.constant 0.000000e+00 : f32
    %27 = vector.broadcast %cst_26 : f32 to vector<252x256xf32>
    %28 = arith.maximumf %26, %27 : vector<252x256xf32>
    %29 = vector.extract_strided_slice %28 {offsets = [0, 0], sizes = [252, 128], strides = [1, 1]} : vector<252x256xf32> to vector<252x128xf32>
    %30 = vector.extract_strided_slice %28 {offsets = [0, 128], sizes = [252, 128], strides = [1, 1]} : vector<252x256xf32> to vector<252x128xf32>
    %31 = arith.maximumf %29, %30 : vector<252x128xf32>
    %32 = vector.extract_strided_slice %31 {offsets = [0, 0], sizes = [251, 128], strides = [1, 1]} : vector<252x128xf32> to vector<251x128xf32>
    %33 = vector.extract_strided_slice %31 {offsets = [1, 0], sizes = [251, 128], strides = [1, 1]} : vector<252x128xf32> to vector<251x128xf32>
    %34 = arith.maximumf %32, %33 : vector<251x128xf32>
    %c0_27 = arith.constant 0 : index
    %c0_28 = arith.constant 0 : index
    %35 = vector.load %arg4[%c0_27, %c0_28] : memref<112x251xf32, #tpu.memory_space<vmem>>, vector<112x251xf32>
    %cst_29 = arith.constant dense<0.000000e+00> : vector<112x128xf32>
    %36 = tpu.matmul %35, %34, %cst_29 {dimension_numbers = #tpu.dot_dimension_numbers<[1], [0], [0], [1], [0, 0, 1, 1], [], []>} : vector<112x251xf32>, vector<251x128xf32>, vector<112x128xf32> -> vector<112x128xf32>
    %37 = vector.extract_strided_slice %36 {offsets = [0, 0], sizes = [108, 128], strides = [1, 1]} : vector<112x128xf32> to vector<108x128xf32>
    %c0_30 = arith.constant 0 : index
    %c0_31 = arith.constant 0 : index
    %c0_32 = arith.constant 0 : index
    %38 = vector.load %arg5[%c0_30, %c0_31, %c0_32] : memref<5x128x256xf32, #tpu.memory_space<vmem>>, vector<1x128x256xf32>
    %39 = vector.shape_cast %38 : vector<1x128x256xf32> to vector<128x256xf32>
    %cst_33 = arith.constant dense<0.000000e+00> : vector<108x256xf32>
    %40 = tpu.matmul %37, %39, %cst_33 {dimension_numbers = #tpu.dot_dimension_numbers<[1], [0], [0], [1], [0, 0, 1, 1], [], []>} : vector<108x128xf32>, vector<128x256xf32>, vector<108x256xf32> -> vector<108x256xf32>
    %41 = vector.extract_strided_slice %36 {offsets = [1, 0], sizes = [108, 128], strides = [1, 1]} : vector<112x128xf32> to vector<108x128xf32>
    %c1_34 = arith.constant 1 : index
    %c0_35 = arith.constant 0 : index
    %c0_36 = arith.constant 0 : index
    %42 = vector.load %arg5[%c1_34, %c0_35, %c0_36] : memref<5x128x256xf32, #tpu.memory_space<vmem>>, vector<1x128x256xf32>
    %43 = vector.shape_cast %42 : vector<1x128x256xf32> to vector<128x256xf32>
    %cst_37 = arith.constant dense<0.000000e+00> : vector<108x256xf32>
    %44 = tpu.matmul %41, %43, %cst_37 {dimension_numbers = #tpu.dot_dimension_numbers<[1], [0], [0], [1], [0, 0, 1, 1], [], []>} : vector<108x128xf32>, vector<128x256xf32>, vector<108x256xf32> -> vector<108x256xf32>
    %45 = arith.addf %40, %44 : vector<108x256xf32>
    %46 = vector.extract_strided_slice %36 {offsets = [2, 0], sizes = [108, 128], strides = [1, 1]} : vector<112x128xf32> to vector<108x128xf32>
    %c2_38 = arith.constant 2 : index
    %c0_39 = arith.constant 0 : index
    %c0_40 = arith.constant 0 : index
    %47 = vector.load %arg5[%c2_38, %c0_39, %c0_40] : memref<5x128x256xf32, #tpu.memory_space<vmem>>, vector<1x128x256xf32>
    %48 = vector.shape_cast %47 : vector<1x128x256xf32> to vector<128x256xf32>
    %cst_41 = arith.constant dense<0.000000e+00> : vector<108x256xf32>
    %49 = tpu.matmul %46, %48, %cst_41 {dimension_numbers = #tpu.dot_dimension_numbers<[1], [0], [0], [1], [0, 0, 1, 1], [], []>} : vector<108x128xf32>, vector<128x256xf32>, vector<108x256xf32> -> vector<108x256xf32>
    %50 = arith.addf %45, %49 : vector<108x256xf32>
    %51 = vector.extract_strided_slice %36 {offsets = [3, 0], sizes = [108, 128], strides = [1, 1]} : vector<112x128xf32> to vector<108x128xf32>
    %c3_42 = arith.constant 3 : index
    %c0_43 = arith.constant 0 : index
    %c0_44 = arith.constant 0 : index
    %52 = vector.load %arg5[%c3_42, %c0_43, %c0_44] : memref<5x128x256xf32, #tpu.memory_space<vmem>>, vector<1x128x256xf32>
    %53 = vector.shape_cast %52 : vector<1x128x256xf32> to vector<128x256xf32>
    %cst_45 = arith.constant dense<0.000000e+00> : vector<108x256xf32>
    %54 = tpu.matmul %51, %53, %cst_45 {dimension_numbers = #tpu.dot_dimension_numbers<[1], [0], [0], [1], [0, 0, 1, 1], [], []>} : vector<108x128xf32>, vector<128x256xf32>, vector<108x256xf32> -> vector<108x256xf32>
    %55 = arith.addf %50, %54 : vector<108x256xf32>
    %56 = vector.extract_strided_slice %36 {offsets = [4, 0], sizes = [108, 128], strides = [1, 1]} : vector<112x128xf32> to vector<108x128xf32>
    %c4_46 = arith.constant 4 : index
    %c0_47 = arith.constant 0 : index
    %c0_48 = arith.constant 0 : index
    %57 = vector.load %arg5[%c4_46, %c0_47, %c0_48] : memref<5x128x256xf32, #tpu.memory_space<vmem>>, vector<1x128x256xf32>
    %58 = vector.shape_cast %57 : vector<1x128x256xf32> to vector<128x256xf32>
    %cst_49 = arith.constant dense<0.000000e+00> : vector<108x256xf32>
    %59 = tpu.matmul %56, %58, %cst_49 {dimension_numbers = #tpu.dot_dimension_numbers<[1], [0], [0], [1], [0, 0, 1, 1], [], []>} : vector<108x128xf32>, vector<128x256xf32>, vector<108x256xf32> -> vector<108x256xf32>
    %60 = arith.addf %55, %59 : vector<108x256xf32>
    %c0_50 = arith.constant 0 : index
    %c0_51 = arith.constant 0 : index
    %61 = vector.load %arg6[%c0_50, %c0_51] : memref<1x256xf32, #tpu.memory_space<vmem>>, vector<1x256xf32>
    %62 = vector.broadcast %61 : vector<1x256xf32> to vector<108x256xf32>
    %63 = arith.addf %60, %62 : vector<108x256xf32>
    %cst_52 = arith.constant 0.000000e+00 : f32
    %64 = vector.broadcast %cst_52 : f32 to vector<108x256xf32>
    %65 = arith.maximumf %63, %64 : vector<108x256xf32>
    %66 = vector.extract_strided_slice %65 {offsets = [0, 0], sizes = [108, 128], strides = [1, 1]} : vector<108x256xf32> to vector<108x128xf32>
    %67 = vector.extract_strided_slice %65 {offsets = [0, 128], sizes = [108, 128], strides = [1, 1]} : vector<108x256xf32> to vector<108x128xf32>
    %68 = arith.maximumf %66, %67 : vector<108x128xf32>
    %69 = vector.extract_strided_slice %68 {offsets = [0, 0], sizes = [107, 128], strides = [1, 1]} : vector<108x128xf32> to vector<107x128xf32>
    %70 = vector.extract_strided_slice %68 {offsets = [1, 0], sizes = [107, 128], strides = [1, 1]} : vector<108x128xf32> to vector<107x128xf32>
    %71 = arith.maximumf %69, %70 : vector<107x128xf32>
    %c0_53 = arith.constant 0 : index
    %c0_54 = arith.constant 0 : index
    %72 = vector.load %arg7[%c0_53, %c0_54] : memref<40x107xf32, #tpu.memory_space<vmem>>, vector<40x107xf32>
    %cst_55 = arith.constant dense<0.000000e+00> : vector<40x128xf32>
    %73 = tpu.matmul %72, %71, %cst_55 {dimension_numbers = #tpu.dot_dimension_numbers<[1], [0], [0], [1], [0, 0, 1, 1], [], []>} : vector<40x107xf32>, vector<107x128xf32>, vector<40x128xf32> -> vector<40x128xf32>
    %74 = vector.extract_strided_slice %73 {offsets = [0, 0], sizes = [8, 128], strides = [1, 1]} : vector<40x128xf32> to vector<8x128xf32>
    %c0_56 = arith.constant 0 : index
    %c0_57 = arith.constant 0 : index
    %c0_58 = arith.constant 0 : index
    %75 = vector.load %arg8[%c0_56, %c0_57, %c0_58] : memref<5x128x128xf32, #tpu.memory_space<vmem>>, vector<1x128x128xf32>
    %76 = vector.shape_cast %75 : vector<1x128x128xf32> to vector<128x128xf32>
    %cst_59 = arith.constant dense<0.000000e+00> : vector<8x128xf32>
    %77 = tpu.matmul %74, %76, %cst_59 {dimension_numbers = #tpu.dot_dimension_numbers<[1], [0], [0], [1], [0, 0, 1, 1], [], []>} : vector<8x128xf32>, vector<128x128xf32>, vector<8x128xf32> -> vector<8x128xf32>
    %78 = vector.extract_strided_slice %73 {offsets = [8, 0], sizes = [8, 128], strides = [1, 1]} : vector<40x128xf32> to vector<8x128xf32>
    %c1_60 = arith.constant 1 : index
    %c0_61 = arith.constant 0 : index
    %c0_62 = arith.constant 0 : index
    %79 = vector.load %arg8[%c1_60, %c0_61, %c0_62] : memref<5x128x128xf32, #tpu.memory_space<vmem>>, vector<1x128x128xf32>
    %80 = vector.shape_cast %79 : vector<1x128x128xf32> to vector<128x128xf32>
    %cst_63 = arith.constant dense<0.000000e+00> : vector<8x128xf32>
    %81 = tpu.matmul %78, %80, %cst_63 {dimension_numbers = #tpu.dot_dimension_numbers<[1], [0], [0], [1], [0, 0, 1, 1], [], []>} : vector<8x128xf32>, vector<128x128xf32>, vector<8x128xf32> -> vector<8x128xf32>
    %82 = arith.addf %77, %81 : vector<8x128xf32>
    %83 = vector.extract_strided_slice %73 {offsets = [16, 0], sizes = [8, 128], strides = [1, 1]} : vector<40x128xf32> to vector<8x128xf32>
    %c2_64 = arith.constant 2 : index
    %c0_65 = arith.constant 0 : index
    %c0_66 = arith.constant 0 : index
    %84 = vector.load %arg8[%c2_64, %c0_65, %c0_66] : memref<5x128x128xf32, #tpu.memory_space<vmem>>, vector<1x128x128xf32>
    %85 = vector.shape_cast %84 : vector<1x128x128xf32> to vector<128x128xf32>
    %cst_67 = arith.constant dense<0.000000e+00> : vector<8x128xf32>
    %86 = tpu.matmul %83, %85, %cst_67 {dimension_numbers = #tpu.dot_dimension_numbers<[1], [0], [0], [1], [0, 0, 1, 1], [], []>} : vector<8x128xf32>, vector<128x128xf32>, vector<8x128xf32> -> vector<8x128xf32>
    %87 = arith.addf %82, %86 : vector<8x128xf32>
    %88 = vector.extract_strided_slice %73 {offsets = [24, 0], sizes = [8, 128], strides = [1, 1]} : vector<40x128xf32> to vector<8x128xf32>
    %c3_68 = arith.constant 3 : index
    %c0_69 = arith.constant 0 : index
    %c0_70 = arith.constant 0 : index
    %89 = vector.load %arg8[%c3_68, %c0_69, %c0_70] : memref<5x128x128xf32, #tpu.memory_space<vmem>>, vector<1x128x128xf32>
    %90 = vector.shape_cast %89 : vector<1x128x128xf32> to vector<128x128xf32>
    %cst_71 = arith.constant dense<0.000000e+00> : vector<8x128xf32>
    %91 = tpu.matmul %88, %90, %cst_71 {dimension_numbers = #tpu.dot_dimension_numbers<[1], [0], [0], [1], [0, 0, 1, 1], [], []>} : vector<8x128xf32>, vector<128x128xf32>, vector<8x128xf32> -> vector<8x128xf32>
    %92 = arith.addf %87, %91 : vector<8x128xf32>
    %93 = vector.extract_strided_slice %73 {offsets = [32, 0], sizes = [8, 128], strides = [1, 1]} : vector<40x128xf32> to vector<8x128xf32>
    %c4_72 = arith.constant 4 : index
    %c0_73 = arith.constant 0 : index
    %c0_74 = arith.constant 0 : index
    %94 = vector.load %arg8[%c4_72, %c0_73, %c0_74] : memref<5x128x128xf32, #tpu.memory_space<vmem>>, vector<1x128x128xf32>
    %95 = vector.shape_cast %94 : vector<1x128x128xf32> to vector<128x128xf32>
    %cst_75 = arith.constant dense<0.000000e+00> : vector<8x128xf32>
    %96 = tpu.matmul %93, %95, %cst_75 {dimension_numbers = #tpu.dot_dimension_numbers<[1], [0], [0], [1], [0, 0, 1, 1], [], []>} : vector<8x128xf32>, vector<128x128xf32>, vector<8x128xf32> -> vector<8x128xf32>
    %97 = arith.addf %92, %96 : vector<8x128xf32>
    %c0_76 = arith.constant 0 : index
    %c0_77 = arith.constant 0 : index
    %98 = vector.load %arg9[%c0_76, %c0_77] : memref<1x128xf32, #tpu.memory_space<vmem>>, vector<1x128xf32>
    %99 = vector.broadcast %98 : vector<1x128xf32> to vector<8x128xf32>
    %100 = arith.addf %97, %99 : vector<8x128xf32>
    %cst_78 = arith.constant 0.000000e+00 : f32
    %101 = vector.broadcast %cst_78 : f32 to vector<8x128xf32>
    %102 = arith.maximumf %100, %101 : vector<8x128xf32>
    %c0_79 = arith.constant 0 : index
    %c0_80 = arith.constant 0 : index
    %103 = vector.load %arg10[%c0_79, %c0_80] : memref<128x128xf32, #tpu.memory_space<vmem>>, vector<128x128xf32>
    %cst_81 = arith.constant dense<0.000000e+00> : vector<8x128xf32>
    %104 = tpu.matmul %102, %103, %cst_81 {dimension_numbers = #tpu.dot_dimension_numbers<[1], [0], [0], [1], [0, 0, 1, 1], [], []>} : vector<8x128xf32>, vector<128x128xf32>, vector<8x128xf32> -> vector<8x128xf32>
    %c0_82 = arith.constant 0 : index
    %c0_83 = arith.constant 0 : index
    %105 = vector.load %arg11[%c0_82, %c0_83] : memref<1x128xf32, #tpu.memory_space<vmem>>, vector<1x128xf32>
    %106 = vector.broadcast %105 : vector<1x128xf32> to vector<8x128xf32>
    %107 = arith.addf %104, %106 : vector<8x128xf32>
    %cst_84 = arith.constant 0.000000e+00 : f32
    %108 = vector.broadcast %cst_84 : f32 to vector<8x128xf32>
    %109 = arith.maximumf %107, %108 : vector<8x128xf32>
    %c0_85 = arith.constant 0 : index
    %c0_86 = arith.constant 0 : index
    %110 = vector.load %arg12[%c0_85, %c0_86] : memref<128x128xf32, #tpu.memory_space<vmem>>, vector<128x128xf32>
    %cst_87 = arith.constant dense<0.000000e+00> : vector<8x128xf32>
    %111 = tpu.matmul %109, %110, %cst_87 {dimension_numbers = #tpu.dot_dimension_numbers<[1], [0], [0], [1], [0, 0, 1, 1], [], []>} : vector<8x128xf32>, vector<128x128xf32>, vector<8x128xf32> -> vector<8x128xf32>
    %c0_88 = arith.constant 0 : index
    %c0_89 = arith.constant 0 : index
    %112 = vector.load %arg13[%c0_88, %c0_89] : memref<1x128xf32, #tpu.memory_space<vmem>>, vector<1x128xf32>
    %113 = vector.broadcast %112 : vector<1x128xf32> to vector<8x128xf32>
    %114 = arith.addf %111, %113 : vector<8x128xf32>
    %c0_90 = arith.constant 0 : index
    %c0_91 = arith.constant 0 : index
    %115 = vector.load %arg14[%c0_90, %c0_91] : memref<8x128xf32, #tpu.memory_space<vmem>>, vector<8x128xf32>
    tpu.vector_store %arg14[%c0_90, %c0_91], %114 {strides = array<i32>} : memref<8x128xf32, #tpu.memory_space<vmem>>, vector<8x128xf32>,
    return
  }
  func.func @transform_0(%arg0: i32) -> (i32, i32) {
    %c0_i32 = arith.constant 0 : i32
    %c0_i32_0 = arith.constant 0 : i32
    return %arg0, %c0_i32 : i32, i32
  }
  func.func @transform_1(%arg0: i32) -> (i32, i32, i32) {
    %c0_i32 = arith.constant 0 : i32
    %c0_i32_0 = arith.constant 0 : i32
    %c0_i32_1 = arith.constant 0 : i32
    %c0_i32_2 = arith.constant 0 : i32
    return %c0_i32, %c0_i32_0, %c0_i32_1 : i32, i32, i32
  }
  func.func @transform_2(%arg0: i32) -> (i32, i32) {
    %c0_i32 = arith.constant 0 : i32
    %c0_i32_0 = arith.constant 0 : i32
    %c0_i32_1 = arith.constant 0 : i32
    return %c0_i32, %c0_i32_0 : i32, i32
  }
  func.func @transform_3(%arg0: i32) -> (i32, i32) {
    %c0_i32 = arith.constant 0 : i32
    %c0_i32_0 = arith.constant 0 : i32
    %c0_i32_1 = arith.constant 0 : i32
    return %c0_i32, %c0_i32_0 : i32, i32
  }
  func.func @transform_4(%arg0: i32) -> (i32, i32, i32) {
    %c0_i32 = arith.constant 0 : i32
    %c0_i32_0 = arith.constant 0 : i32
    %c0_i32_1 = arith.constant 0 : i32
    %c0_i32_2 = arith.constant 0 : i32
    return %c0_i32, %c0_i32_0, %c0_i32_1 : i32, i32, i32
  }
  func.func @transform_5(%arg0: i32) -> (i32, i32) {
    %c0_i32 = arith.constant 0 : i32
    %c0_i32_0 = arith.constant 0 : i32
    %c0_i32_1 = arith.constant 0 : i32
    return %c0_i32, %c0_i32_0 : i32, i32
  }
  func.func @transform_6(%arg0: i32) -> (i32, i32) {
    %c0_i32 = arith.constant 0 : i32
    %c0_i32_0 = arith.constant 0 : i32
    %c0_i32_1 = arith.constant 0 : i32
    return %c0_i32, %c0_i32_0 : i32, i32
  }
  func.func @transform_7(%arg0: i32) -> (i32, i32, i32) {
    %c0_i32 = arith.constant 0 : i32
    %c0_i32_0 = arith.constant 0 : i32
    %c0_i32_1 = arith.constant 0 : i32
    %c0_i32_2 = arith.constant 0 : i32
    return %c0_i32, %c0_i32_0, %c0_i32_1 : i32, i32, i32
  }
  func.func @transform_8(%arg0: i32) -> (i32, i32) {
    %c0_i32 = arith.constant 0 : i32
    %c0_i32_0 = arith.constant 0 : i32
    %c0_i32_1 = arith.constant 0 : i32
    return %c0_i32, %c0_i32_0 : i32, i32
  }
  func.func @transform_9(%arg0: i32) -> (i32, i32) {
    %c0_i32 = arith.constant 0 : i32
    %c0_i32_0 = arith.constant 0 : i32
    %c0_i32_1 = arith.constant 0 : i32
    return %c0_i32, %c0_i32_0 : i32, i32
  }
  func.func @transform_10(%arg0: i32) -> (i32, i32) {
    %c0_i32 = arith.constant 0 : i32
    %c0_i32_0 = arith.constant 0 : i32
    %c0_i32_1 = arith.constant 0 : i32
    return %c0_i32, %c0_i32_0 : i32, i32
  }
  func.func @transform_11(%arg0: i32) -> (i32, i32) {
    %c0_i32 = arith.constant 0 : i32
    %c0_i32_0 = arith.constant 0 : i32
    %c0_i32_1 = arith.constant 0 : i32
    return %c0_i32, %c0_i32_0 : i32, i32
  }
  func.func @transform_12(%arg0: i32) -> (i32, i32) {
    %c0_i32 = arith.constant 0 : i32
    %c0_i32_0 = arith.constant 0 : i32
    %c0_i32_1 = arith.constant 0 : i32
    return %c0_i32, %c0_i32_0 : i32, i32
  }
  func.func @transform_13(%arg0: i32) -> (i32, i32) {
    %c0_i32 = arith.constant 0 : i32
    %c0_i32_0 = arith.constant 0 : i32
    return %arg0, %c0_i32 : i32, i32
  }
}

</mosaic_0001>

<llo_original>
// kernel: net_forward.1
$region0: #{net_forward.1}
  #allocation0 [shape = 'u32[]', space=smem, size = 0x4, offset = 0x4, fixed_abs, tag = 'smem constant byte address 0x4 - core index']
  #allocation1 [shape = 'u32[144,128]{1,0:T(1,128)}', space=vmem, size = 0x12000, scoped, tag = 'internal scratch']
  %s0 = inlined_call_operand.vmem [shape: f32[512,128], index: 0, kind: input, shape index: {}]
  %s1 = inlined_call_operand.vmem [shape: f32[5,128,256], index: 1, kind: input, shape index: {}]
  %s2 = inlined_call_operand.vmem [shape: f32[1,256], index: 2, kind: input, shape index: {}]
  %s3 = inlined_call_operand.vmem [shape: f32[112,251], index: 3, kind: input, shape index: {}]
  %s4 = inlined_call_operand.vmem [shape: f32[5,128,256], index: 4, kind: input, shape index: {}]
  %s5 = inlined_call_operand.vmem [shape: f32[1,256], index: 5, kind: input, shape index: {}]
  %s6 = inlined_call_operand.vmem [shape: f32[40,107], index: 6, kind: input, shape index: {}]
  %s7 = inlined_call_operand.vmem [shape: f32[5,128,128], index: 7, kind: input, shape index: {}]
  %s8 = inlined_call_operand.vmem [shape: f32[1,128], index: 8, kind: input, shape index: {}]
  %s9 = inlined_call_operand.vmem [shape: f32[128,128], index: 9, kind: input, shape index: {}]
  %s10 = inlined_call_operand.vmem [shape: f32[1,128], index: 10, kind: input, shape index: {}]
  %s11 = inlined_call_operand.vmem [shape: f32[128,128], index: 11, kind: input, shape index: {}]
  %s12 = inlined_call_operand.vmem [shape: f32[1,128], index: 12, kind: input, shape index: {}]
  %s13 = inlined_call_operand.hbm [shape: f32[16,128], index: 13, kind: output, shape index: {}]
  %s14 = sld [smem:[#allocation0]]
  $region85: #{net_forward.1} parent=0
    _
  %s16 = ssub.s32 1, %s14
  %s17 = scalar_select 0, %s16, %s14
  $region1: #{net_forward.1} parent=0
    #allocation2 [shape = 'u8[8192]{0}', space=vmem, size = 0x2000, scoped, tag = 'output window, operand 0']
    #allocation3 [shape = 's32[2]{0}', space=sflag, size = 0x8, scoped, tag = 'scoped memory for net_forward.1']
    %18 = vsyncpa [#allocation3], 0
    %s19 = scalar_lea.sflag [#allocation3], 1
    %20 = vsyncpa %s19, 0
    loop: start=0, step=1, limit=4
    $region2: #{net_forward.1} parent=1 // loop_pre_header
      _
    $region3: #{net_forward.1} parent=1 // loop_header
      %s22 = sphi 0, %s26
      %p23 = scmp.ge.s32.totalorder %s22, 4
      %s32 = sphi 0, %s34
      %s35 = sphi 0, %s32
      %s36 = sphi 0, %s35
      %s52 = sphi 0, %s36
      %s56 = sphi 0, %s56
      %s58 = sphi 0, %s56
      %s59 = sphi 0, %s58
      %s73 = sphi 0, %s59
      %s77 = sphi 0, %s77
      %s79 = sphi 0, %s77
      %s80 = sphi 0, %s79
      %s94 = sphi 0, %s80
      %s98 = sphi 0, %s98
      %s100 = sphi 0, %s98
      %s101 = sphi 0, %s100
      %s115 = sphi 0, %s101
      %s119 = sphi 0, %s119
      %s121 = sphi 0, %s119
      %s122 = sphi 0, %s121
      %s136 = sphi 0, %s122
      %s140 = sphi 0, %s140
      %s142 = sphi 0, %s140
      %s143 = sphi 0, %s142
      %s157 = sphi 0, %s143
      %s161 = sphi 0, %s161
      %s163 = sphi 0, %s161
      %s164 = sphi 0, %s163
      %s178 = sphi 0, %s164
      %s182 = sphi 0, %s182
      %s184 = sphi 0, %s182
      %s185 = sphi 0, %s184
      %s199 = sphi 0, %s185
      %s203 = sphi 0, %s203
      %s205 = sphi 0, %s203
      %s206 = sphi 0, %s205
      %s220 = sphi 0, %s206
      %s224 = sphi 0, %s224
      %s226 = sphi 0, %s224
      %s227 = sphi 0, %s226
      %s241 = sphi 0, %s227
      %s245 = sphi 0, %s245
      %s247 = sphi 0, %s245
      %s248 = sphi 0, %s247
      %s262 = sphi 0, %s248
      %s266 = sphi 0, %s266
      %s268 = sphi 0, %s266
      %s269 = sphi 0, %s268
      %s283 = sphi 0, %s269
      %s287 = sphi 0, %s287
      %s289 = sphi 0, %s287
      %s290 = sphi 0, %s289
      %s304 = sphi 0, %s290
      %s310 = sphi 0, %s312
      %s313 = sphi 0, %s310
      %s314 = sphi 0, %s313
      %s330 = sphi 0, %s314
    $region4: #{net_forward.1} parent=1 // loop_header_branch
      %25 = sbr.rel (%p23) target = $region8
    $region5: #{net_forward.1} parent=1 // loop_body
      %s27 = ssub.s32 %s22, 1
      %s28 = ssub.s32 %s22, 2
      %s29 = sadd.s32 %s22, 1
      %s30 = ssub.s32 %s22, %s29
      %p31 = scmp.eq.s32.totalorder %s30, 0
      %s33 = sadd.s32 %s32, 1
      %s34 = scalar_select %p31, %s32, %s33
      %p37 = pneg %p31
      %p38 = scmp.eq.s32.totalorder %s22, 1
      %p39 = por %p37, %p38
      %p40 = scmp.ne.s32.totalorder %s32, %s35
      %p41 = scmp.eq.s32.totalorder %s22, 0
      %p42 = por %p40, %p41
      %p43 = scmp.ne.s32.totalorder %s32, %s35
      %p44 = scmp.eq.s32.totalorder %s27, 1
      %p45 = por %p43, %p44
      %p46 = scmp.ne.s32.totalorder %s35, %s36
      %p47 = scmp.eq.s32.totalorder %s27, 0
      %p48 = por %p46, %p47
      %p49 = scmp.ne.s32.totalorder %s35, %s36
      %p50 = scmp.eq.s32.totalorder %s28, 1
      %p51 = por %p49, %p50
      %p53 = scmp.ne.s32.totalorder %s36, %s52
      %p54 = scmp.eq.s32.totalorder %s28, 0
      %p55 = por %p53, %p54
      %s57 = sadd.s32 %s56, 1
      %p60 = scmp.eq.s32.totalorder %s22, 1
      %p61 = scmp.ne.s32.totalorder %s56, %s58
      %p62 = scmp.eq.s32.totalorder %s22, 0
      %p63 = por %p61, %p62
      %p64 = scmp.ne.s32.totalorder %s56, %s58
      %p65 = scmp.eq.s32.totalorder %s27, 1
      %p66 = por %p64, %p65
      %p67 = scmp.ne.s32.totalorder %s58, %s59
      %p68 = scmp.eq.s32.totalorder %s27, 0
      %p69 = por %p67, %p68
      %p70 = scmp.ne.s32.totalorder %s58, %s59
      %p71 = scmp.eq.s32.totalorder %s28, 1
      %p72 = por %p70, %p71
      %p74 = scmp.ne.s32.totalorder %s59, %s73
      %p75 = scmp.eq.s32.totalorder %s28, 0
      %p76 = por %p74, %p75
      %s78 = sadd.s32 %s77, 1
      %p81 = scmp.eq.s32.totalorder %s22, 1
      %p82 = scmp.ne.s32.totalorder %s77, %s79
      %p83 = scmp.eq.s32.totalorder %s22, 0
      %p84 = por %p82, %p83
      %p85 = scmp.ne.s32.totalorder %s77, %s79
      %p86 = scmp.eq.s32.totalorder %s27, 1
      %p87 = por %p85, %p86
      %p88 = scmp.ne.s32.totalorder %s79, %s80
      %p89 = scmp.eq.s32.totalorder %s27, 0
      %p90 = por %p88, %p89
      %p91 = scmp.ne.s32.totalorder %s79, %s80
      %p92 = scmp.eq.s32.totalorder %s28, 1
      %p93 = por %p91, %p92
      %p95 = scmp.ne.s32.totalorder %s80, %s94
      %p96 = scmp.eq.s32.totalorder %s28, 0
      %p97 = por %p95, %p96
      %s99 = sadd.s32 %s98, 1
      %p102 = scmp.eq.s32.totalorder %s22, 1
      %p103 = scmp.ne.s32.totalorder %s98, %s100
      %p104 = scmp.eq.s32.totalorder %s22, 0
      %p105 = por %p103, %p104
      %p106 = scmp.ne.s32.totalorder %s98, %s100
      %p107 = scmp.eq.s32.totalorder %s27, 1
      %p108 = por %p106, %p107
      %p109 = scmp.ne.s32.totalorder %s100, %s101
      %p110 = scmp.eq.s32.totalorder %s27, 0
      %p111 = por %p109, %p110
      %p112 = scmp.ne.s32.totalorder %s100, %s101
      %p113 = scmp.eq.s32.totalorder %s28, 1
      %p114 = por %p112, %p113
      %p116 = scmp.ne.s32.totalorder %s101, %s115
      %p117 = scmp.eq.s32.totalorder %s28, 0
      %p118 = por %p116, %p117
      %s120 = sadd.s32 %s119, 1
      %p123 = scmp.eq.s32.totalorder %s22, 1
      %p124 = scmp.ne.s32.totalorder %s119, %s121
      %p125 = scmp.eq.s32.totalorder %s22, 0
      %p126 = por %p124, %p125
      %p127 = scmp.ne.s32.totalorder %s119, %s121
      %p128 = scmp.eq.s32.totalorder %s27, 1
      %p129 = por %p127, %p128
      %p130 = scmp.ne.s32.totalorder %s121, %s122
      %p131 = scmp.eq.s32.totalorder %s27, 0
      %p132 = por %p130, %p131
      %p133 = scmp.ne.s32.totalorder %s121, %s122
      %p134 = scmp.eq.s32.totalorder %s28, 1
      %p135 = por %p133, %p134
      %p137 = scmp.ne.s32.totalorder %s122, %s136
      %p138 = scmp.eq.s32.totalorder %s28, 0
      %p139 = por %p137, %p138
      %s141 = sadd.s32 %s140, 1
      %p144 = scmp.eq.s32.totalorder %s22, 1
      %p145 = scmp.ne.s32.totalorder %s140, %s142
      %p146 = scmp.eq.s32.totalorder %s22, 0
      %p147 = por %p145, %p146
      %p148 = scmp.ne.s32.totalorder %s140, %s142
      %p149 = scmp.eq.s32.totalorder %s27, 1
      %p150 = por %p148, %p149
      %p151 = scmp.ne.s32.totalorder %s142, %s143
      %p152 = scmp.eq.s32.totalorder %s27, 0
      %p153 = por %p151, %p152
      %p154 = scmp.ne.s32.totalorder %s142, %s143
      %p155 = scmp.eq.s32.totalorder %s28, 1
      %p156 = por %p154, %p155
      %p158 = scmp.ne.s32.totalorder %s143, %s157
      %p159 = scmp.eq.s32.totalorder %s28, 0
      %p160 = por %p158, %p159
      %s162 = sadd.s32 %s161, 1
      %p165 = scmp.eq.s32.totalorder %s22, 1
      %p166 = scmp.ne.s32.totalorder %s161, %s163
      %p167 = scmp.eq.s32.totalorder %s22, 0
      %p168 = por %p166, %p167
      %p169 = scmp.ne.s32.totalorder %s161, %s163
      %p170 = scmp.eq.s32.totalorder %s27, 1
      %p171 = por %p169, %p170
      %p172 = scmp.ne.s32.totalorder %s163, %s164
      %p173 = scmp.eq.s32.totalorder %s27, 0
      %p174 = por %p172, %p173
      %p175 = scmp.ne.s32.totalorder %s163, %s164
      %p176 = scmp.eq.s32.totalorder %s28, 1
      %p177 = por %p175, %p176
      %p179 = scmp.ne.s32.totalorder %s164, %s178
      %p180 = scmp.eq.s32.totalorder %s28, 0
      %p181 = por %p179, %p180
      %s183 = sadd.s32 %s182, 1
      %p186 = scmp.eq.s32.totalorder %s22, 1
      %p187 = scmp.ne.s32.totalorder %s182, %s184
      %p188 = scmp.eq.s32.totalorder %s22, 0
      %p189 = por %p187, %p188
      %p190 = scmp.ne.s32.totalorder %s182, %s184
      %p191 = scmp.eq.s32.totalorder %s27, 1
      %p192 = por %p190, %p191
      %p193 = scmp.ne.s32.totalorder %s184, %s185
      %p194 = scmp.eq.s32.totalorder %s27, 0
      %p195 = por %p193, %p194
      %p196 = scmp.ne.s32.totalorder %s184, %s185
      %p197 = scmp.eq.s32.totalorder %s28, 1
      %p198 = por %p196, %p197
      %p200 = scmp.ne.s32.totalorder %s185, %s199
      %p201 = scmp.eq.s32.totalorder %s28, 0
      %p202 = por %p200, %p201
      %s204 = sadd.s32 %s203, 1
      %p207 = scmp.eq.s32.totalorder %s22, 1
      %p208 = scmp.ne.s32.totalorder %s203, %s205
      %p209 = scmp.eq.s32.totalorder %s22, 0
      %p210 = por %p208, %p209
      %p211 = scmp.ne.s32.totalorder %s203, %s205
      %p212 = scmp.eq.s32.totalorder %s27, 1
      %p213 = por %p211, %p212
      %p214 = scmp.ne.s32.totalorder %s205, %s206
      %p215 = scmp.eq.s32.totalorder %s27, 0
      %p216 = por %p214, %p215
      %p217 = scmp.ne.s32.totalorder %s205, %s206
      %p218 = scmp.eq.s32.totalorder %s28, 1
      %p219 = por %p217, %p218
      %p221 = scmp.ne.s32.totalorder %s206, %s220
      %p222 = scmp.eq.s32.totalorder %s28, 0
      %p223 = por %p221, %p222
      %s225 = sadd.s32 %s224, 1
      %p228 = scmp.eq.s32.totalorder %s22, 1
      %p229 = scmp.ne.s32.totalorder %s224, %s226
      %p230 = scmp.eq.s32.totalorder %s22, 0
      %p231 = por %p229, %p230
      %p232 = scmp.ne.s32.totalorder %s224, %s226
      %p233 = scmp.eq.s32.totalorder %s27, 1
      %p234 = por %p232, %p233
      %p235 = scmp.ne.s32.totalorder %s226, %s227
      %p236 = scmp.eq.s32.totalorder %s27, 0
      %p237 = por %p235, %p236
      %p238 = scmp.ne.s32.totalorder %s226, %s227
      %p239 = scmp.eq.s32.totalorder %s28, 1
      %p240 = por %p238, %p239
      %p242 = scmp.ne.s32.totalorder %s227, %s241
      %p243 = scmp.eq.s32.totalorder %s28, 0
      %p244 = por %p242, %p243
      %s246 = sadd.s32 %s245, 1
      %p249 = scmp.eq.s32.totalorder %s22, 1
      %p250 = scmp.ne.s32.totalorder %s245, %s247
      %p251 = scmp.eq.s32.totalorder %s22, 0
      %p252 = por %p250, %p251
      %p253 = scmp.ne.s32.totalorder %s245, %s247
      %p254 = scmp.eq.s32.totalorder %s27, 1
      %p255 = por %p253, %p254
      %p256 = scmp.ne.s32.totalorder %s247, %s248
      %p257 = scmp.eq.s32.totalorder %s27, 0
      %p258 = por %p256, %p257
      %p259 = scmp.ne.s32.totalorder %s247, %s248
      %p260 = scmp.eq.s32.totalorder %s28, 1
      %p261 = por %p259, %p260
      %p263 = scmp.ne.s32.totalorder %s248, %s262
      %p264 = scmp.eq.s32.totalorder %s28, 0
      %p265 = por %p263, %p264
      %s267 = sadd.s32 %s266, 1
      %p270 = scmp.eq.s32.totalorder %s22, 1
      %p271 = scmp.ne.s32.totalorder %s266, %s268
      %p272 = scmp.eq.s32.totalorder %s22, 0
      %p273 = por %p271, %p272
      %p274 = scmp.ne.s32.totalorder %s266, %s268
      %p275 = scmp.eq.s32.totalorder %s27, 1
      %p276 = por %p274, %p275
      %p277 = scmp.ne.s32.totalorder %s268, %s269
      %p278 = scmp.eq.s32.totalorder %s27, 0
      %p279 = por %p277, %p278
      %p280 = scmp.ne.s32.totalorder %s268, %s269
      %p281 = scmp.eq.s32.totalorder %s28, 1
      %p282 = por %p280, %p281
      %p284 = scmp.ne.s32.totalorder %s269, %s283
      %p285 = scmp.eq.s32.totalorder %s28, 0
      %p286 = por %p284, %p285
      %s288 = sadd.s32 %s287, 1
      %p291 = scmp.eq.s32.totalorder %s22, 1
      %p292 = scmp.ne.s32.totalorder %s287, %s289
      %p293 = scmp.eq.s32.totalorder %s22, 0
      %p294 = por %p292, %p293
      %p295 = scmp.ne.s32.totalorder %s287, %s289
      %p296 = scmp.eq.s32.totalorder %s27, 1
      %p297 = por %p295, %p296
      %p298 = scmp.ne.s32.totalorder %s289, %s290
      %p299 = scmp.eq.s32.totalorder %s27, 0
      %p300 = por %p298, %p299
      %p301 = scmp.ne.s32.totalorder %s289, %s290
      %p302 = scmp.eq.s32.totalorder %s28, 1
      %p303 = por %p301, %p302
      %p305 = scmp.ne.s32.totalorder %s290, %s304
      %p306 = scmp.eq.s32.totalorder %s28, 0
      %p307 = por %p305, %p306
      %s308 = ssub.s32 %s22, %s29
      %p309 = scmp.eq.s32.totalorder %s308, 0
      %s311 = sadd.s32 %s310, 1
      %s312 = scalar_select %p309, %s310, %s311
      %p315 = pneg %p309
      %p316 = scmp.eq.s32.totalorder %s22, 1
      %p317 = por %p315, %p316
      %p318 = scmp.ne.s32.totalorder %s310, %s313
      %p319 = scmp.eq.s32.totalorder %s22, 0
      %p320 = por %p318, %p319
      %p321 = scmp.ne.s32.totalorder %s310, %s313
      %p322 = scmp.eq.s32.totalorder %s27, 1
      %p323 = por %p321, %p322
      %p324 = scmp.ne.s32.totalorder %s313, %s314
      %p325 = scmp.eq.s32.totalorder %s27, 0
      %p326 = por %p324, %p325
      %p327 = scmp.ne.s32.totalorder %s313, %s314
      %p328 = scmp.eq.s32.totalorder %s28, 1
      %p329 = por %p327, %p328
      %p331 = scmp.ne.s32.totalorder %s314, %s330
      %p332 = scmp.eq.s32.totalorder %s28, 0
      %p333 = por %p331, %p332
      %p334 = scmp.le.s32.totalorder 1, %s22
      %p335 = scmp.lt.s32.totalorder %s22, 3
      %p336 = pnand %p334, %p335
      %p337 = pneg %p336
      // Predicated region
      $region9: #{net_forward.1} parent=5 // pred_check
        _
      $region10: #{net_forward.1} parent=5 // pred_check_branch
        %339 = sbr.rel (%p336) target = $region12
      $region11: #{net_forward.1} parent=5 // pred_region
        %s340 = ssub.s32 %s22, 1
        // Predicated region
        $region13: #{net_forward.1} parent=11 // pred_check
          %p341 = pneg %p69
        $region14: #{net_forward.1} parent=11 // pred_check_branch
          %343 = sbr.rel (%p341) target = $region16
        $region15: #{net_forward.1} parent=11 // pred_region
          _
        $region16: #{net_forward.1} parent=11 // pred_fallthru
          _
        // Predicated region
        $region17: #{net_forward.1} parent=11 // pred_check
          %p344 = pneg %p90
        $region18: #{net_forward.1} parent=11 // pred_check_branch
          %346 = sbr.rel (%p344) target = $region20
        $region19: #{net_forward.1} parent=11 // pred_region
          _
        $region20: #{net_forward.1} parent=11 // pred_fallthru
          _
        // Predicated region
        $region21: #{net_forward.1} parent=11 // pred_check
          %p347 = pneg %p111
        $region22: #{net_forward.1} parent=11 // pred_check_branch
          %349 = sbr.rel (%p347) target = $region24
        $region23: #{net_forward.1} parent=11 // pred_region
          _
        $region24: #{net_forward.1} parent=11 // pred_fallthru
          _
        // Predicated region
        $region25: #{net_forward.1} parent=11 // pred_check
          %p350 = pneg %p132
        $region26: #{net_forward.1} parent=11 // pred_check_branch
          %352 = sbr.rel (%p350) target = $region28
        $region27: #{net_forward.1} parent=11 // pred_region
          _
        $region28: #{net_forward.1} parent=11 // pred_fallthru
          _
        // Predicated region
        $region29: #{net_forward.1} parent=11 // pred_check
          %p353 = pneg %p153
        $region30: #{net_forward.1} parent=11 // pred_check_branch
          %355 = sbr.rel (%p353) target = $region32
        $region31: #{net_forward.1} parent=11 // pred_region
          _
        $region32: #{net_forward.1} parent=11 // pred_fallthru
          _
        // Predicated region
        $region33: #{net_forward.1} parent=11 // pred_check
          %p356 = pneg %p174
        $region34: #{net_forward.1} parent=11 // pred_check_branch
          %358 = sbr.rel (%p356) target = $region36
        $region35: #{net_forward.1} parent=11 // pred_region
          _
        $region36: #{net_forward.1} parent=11 // pred_fallthru
          _
        // Predicated region
        $region37: #{net_forward.1} parent=11 // pred_check
          %p359 = pneg %p195
        $region38: #{net_forward.1} parent=11 // pred_check_branch
          %361 = sbr.rel (%p359) target = $region40
        $region39: #{net_forward.1} parent=11 // pred_region
          _
        $region40: #{net_forward.1} parent=11 // pred_fallthru
          _
        // Predicated region
        $region41: #{net_forward.1} parent=11 // pred_check
          %p362 = pneg %p216
        $region42: #{net_forward.1} parent=11 // pred_check_branch
          %364 = sbr.rel (%p362) target = $region44
        $region43: #{net_forward.1} parent=11 // pred_region
          _
        $region44: #{net_forward.1} parent=11 // pred_fallthru
          _
        // Predicated region
        $region45: #{net_forward.1} parent=11 // pred_check
          %p365 = pneg %p237
        $region46: #{net_forward.1} parent=11 // pred_check_branch
          %367 = sbr.rel (%p365) target = $region48
        $region47: #{net_forward.1} parent=11 // pred_region
          _
        $region48: #{net_forward.1} parent=11 // pred_fallthru
          _
        // Predicated region
        $region49: #{net_forward.1} parent=11 // pred_check
          %p368 = pneg %p258
        $region50: #{net_forward.1} parent=11 // pred_check_branch
          %370 = sbr.rel (%p368) target = $region52
        $region51: #{net_forward.1} parent=11 // pred_region
          _
        $region52: #{net_forward.1} parent=11 // pred_fallthru
          _
        // Predicated region
        $region53: #{net_forward.1} parent=11 // pred_check
          %p371 = pneg %p279
        $region54: #{net_forward.1} parent=11 // pred_check_branch
          %373 = sbr.rel (%p371) target = $region56
        $region55: #{net_forward.1} parent=11 // pred_region
          _
        $region56: #{net_forward.1} parent=11 // pred_fallthru
          _
        // Predicated region
        $region57: #{net_forward.1} parent=11 // pred_check
          %p374 = pneg %p300
        $region58: #{net_forward.1} parent=11 // pred_check_branch
          %376 = sbr.rel (%p374) target = $region60
        $region59: #{net_forward.1} parent=11 // pred_region
          _
        $region60: #{net_forward.1} parent=11 // pred_fallthru
          _
      $region12: #{net_forward.1} parent=5 // pred_fallthru
        _
      %p377 = scmp.lt.s32.totalorder %s22, 2
      // Predicated region
      $region61: #{net_forward.1} parent=5 // pred_check
        %p378 = pneg %p377
      $region62: #{net_forward.1} parent=5 // pred_check_branch
        %380 = sbr.rel (%p378) target = $region64
      $region63: #{net_forward.1} parent=5 // pred_region
        // Predicated region
        $region65: #{net_forward.1} parent=63 // pred_check
          %p381 = pneg %p42
        $region66: #{net_forward.1} parent=63 // pred_check_branch
          %383 = sbr.rel (%p381) target = $region68
        $region67: #{net_forward.1} parent=63 // pred_region
          %s384 = smul.u32 32, %s22
          %p385 = scmp.lt.s32.totalorder %s384, 63
          %s386 = scalar_select %p385, %s384, 63
          %s387 = smul.addr %s386, 8
          %s388 = scalar_lea.vmem %s0, %s387
          %s389 = smul.u32 32, %s22
        $region68: #{net_forward.1} parent=63 // pred_fallthru
          _
      $region64: #{net_forward.1} parent=5 // pred_fallthru
        _
      %p390 = scmp.le.s32.totalorder 1, %s22
      %p391 = scmp.lt.s32.totalorder %s22, 3
      %p392 = pnand %p390, %p391
      %p393 = pneg %p392
      // Predicated region
      $region69: #{net_forward.1} parent=5 // pred_check
        _
      $region70: #{net_forward.1} parent=5 // pred_check_branch
        %395 = sbr.rel (%p392) target = $region72
      $region71: #{net_forward.1} parent=5 // pred_region
        %s396 = ssub.s32 %s22, 1
        %s397 = smul.u32 32, %s27
        %p398 = scmp.lt.s32.totalorder %s397, 63
        %s399 = scalar_select %p398, %s397, 63
        %s400 = smul.addr %s399, 8
        %s401 = scalar_lea.vmem %s0, %s400
        %p402 = pneg %p48
        %p403 = pneg %p45
        %p404 = pneg %p69
        %p405 = pneg %p66
        %p406 = pneg %p90
        %p407 = pneg %p87
        %p408 = pneg %p111
        %p409 = pneg %p108
        %p410 = pneg %p132
        %p411 = pneg %p129
        %p412 = pneg %p153
        %p413 = pneg %p150
        %p414 = pneg %p174
        %p415 = pneg %p171
        %p416 = pneg %p195
        %p417 = pneg %p192
        %p418 = pneg %p216
        %p419 = pneg %p213
        %p420 = pneg %p237
        %p421 = pneg %p234
        %p422 = pneg %p258
        %p423 = pneg %p255
        %p424 = pneg %p279
        %p425 = pneg %p276
        %p426 = pneg %p300
        %p427 = pneg %p297
        %p428 = pneg %p326
        %p429 = pneg %p323
        %s430 = sand.u32 %s313, 1
        %s431 = scalar_lea.sflag [#allocation3], %s430
        %s432 = sand.u32 %s313, 1
        %s433 = smul.addr %s432, 8
        %s434 = scalar_lea.vmem [#allocation2], %s433
        %s435 = smul.u32 32, %s27
        %p436 = scmp.lt.s32.totalorder %s435, 63
        %s437 = scalar_select %p436, %s435, 63
        %s438 = smul.addr %s437, 8
        %s439 = scalar_lea.vmem %s0, %s438
        %s440 = smul.u32 32, %s27
        %v441 = vld [vmem:[%s439] sm:$0xff]
        %v442 = vld [vmem:[%s439 + $0x8] sm:$0xff]
        %v443 = vld [vmem:[%s439 + $0x10] sm:$0xff]
        %v444 = vld [vmem:[%s439 + $0x18] sm:$0xff]
        %v445 = vld [vmem:[%s439 + $0x20] sm:$0xff]
        %v446 = vld [vmem:[%s439 + $0x28] sm:$0xff]
        %v447 = vld [vmem:[%s439 + $0x30] sm:$0xff]
        %v448 = vld [vmem:[%s439 + $0x38] sm:$0xff]
        %v449 = vld [vmem:[%s439 + $0x40] sm:$0xff]
        %v450 = vld [vmem:[%s439 + $0x48] sm:$0xff]
        %v451 = vld [vmem:[%s439 + $0x50] sm:$0xff]
        %v452 = vld [vmem:[%s439 + $0x58] sm:$0xff]
        %v453 = vld [vmem:[%s439 + $0x60] sm:$0xff]
        %v454 = vld [vmem:[%s439 + $0x68] sm:$0xff]
        %v455 = vld [vmem:[%s439 + $0x70] sm:$0xff]
        %v456 = vld [vmem:[%s439 + $0x78] sm:$0xff]
        %v457 = vld [vmem:[%s439 + $0x80] sm:$0xff]
        %v458 = vld [vmem:[%s439 + $0x88] sm:$0xff]
        %v459 = vld [vmem:[%s439 + $0x90] sm:$0xff]
        %v460 = vld [vmem:[%s439 + $0x98] sm:$0xff]
        %v461 = vld [vmem:[%s439 + $0xa0] sm:$0xff]
        %v462 = vld [vmem:[%s439 + $0xa8] sm:$0xff]
        %v463 = vld [vmem:[%s439 + $0xb0] sm:$0xff]
        %v464 = vld [vmem:[%s439 + $0xb8] sm:$0xff]
        %v465 = vld [vmem:[%s439 + $0xc0] sm:$0xff]
        %v466 = vld [vmem:[%s439 + $0xc8] sm:$0xff]
        %v467 = vld [vmem:[%s439 + $0xd0] sm:$0xff]
        %v468 = vld [vmem:[%s439 + $0xd8] sm:$0xff]
        %v469 = vld [vmem:[%s439 + $0xe0] sm:$0xff]
        %v470 = vld [vmem:[%s439 + $0xe8] sm:$0xff]
        %v471 = vld [vmem:[%s439 + $0xf0] sm:$0xff]
        %v472 = vld [vmem:[%s439 + $0xf8] sm:$0xf]
        %v473 = vld [vmem:[%s1] sm:$0xff]
        %v474 = vld [vmem:[%s1 + $0x8] sm:$0xff]
        %v475 = vld [vmem:[%s1 + $0x10] sm:$0xff]
        %v476 = vld [vmem:[%s1 + $0x18] sm:$0xff]
        %v477 = vld [vmem:[%s1 + $0x20] sm:$0xff]
        %v478 = vld [vmem:[%s1 + $0x28] sm:$0xff]
        %v479 = vld [vmem:[%s1 + $0x30] sm:$0xff]
        %v480 = vld [vmem:[%s1 + $0x38] sm:$0xff]
        %v481 = vld [vmem:[%s1 + $0x40] sm:$0xff]
        %v482 = vld [vmem:[%s1 + $0x48] sm:$0xff]
        %v483 = vld [vmem:[%s1 + $0x50] sm:$0xff]
        %v484 = vld [vmem:[%s1 + $0x58] sm:$0xff]
        %v485 = vld [vmem:[%s1 + $0x60] sm:$0xff]
        %v486 = vld [vmem:[%s1 + $0x68] sm:$0xff]
        %v487 = vld [vmem:[%s1 + $0x70] sm:$0xff]
        %v488 = vld [vmem:[%s1 + $0x78] sm:$0xff]
        %v489 = vld [vmem:[%s1 + $0x80] sm:$0xff]
        %v490 = vld [vmem:[%s1 + $0x88] sm:$0xff]
        %v491 = vld [vmem:[%s1 + $0x90] sm:$0xff]
        %v492 = vld [vmem:[%s1 + $0x98] sm:$0xff]
        %v493 = vld [vmem:[%s1 + $0xa0] sm:$0xff]
        %v494 = vld [vmem:[%s1 + $0xa8] sm:$0xff]
        %v495 = vld [vmem:[%s1 + $0xb0] sm:$0xff]
        %v496 = vld [vmem:[%s1 + $0xb8] sm:$0xff]
        %v497 = vld [vmem:[%s1 + $0xc0] sm:$0xff]
        %v498 = vld [vmem:[%s1 + $0xc8] sm:$0xff]
        %v499 = vld [vmem:[%s1 + $0xd0] sm:$0xff]
        %v500 = vld [vmem:[%s1 + $0xd8] sm:$0xff]
        %v501 = vld [vmem:[%s1 + $0xe0] sm:$0xff]
        %v502 = vld [vmem:[%s1 + $0xe8] sm:$0xff]
        %v503 = vld [vmem:[%s1 + $0xf0] sm:$0xff]
        %v504 = vld [vmem:[%s1 + $0xf8] sm:$0xff]
        %v505 = vld [vmem:[%s439 + $0x1] sm:$0xff]
        %v506 = vld [vmem:[%s439 + $0x9] sm:$0xff]
        %v507 = vld [vmem:[%s439 + $0x11] sm:$0xff]
        %v508 = vld [vmem:[%s439 + $0x19] sm:$0xff]
        %v509 = vld [vmem:[%s439 + $0x21] sm:$0xff]
        %v510 = vld [vmem:[%s439 + $0x29] sm:$0xff]
        %v511 = vld [vmem:[%s439 + $0x31] sm:$0xff]
        %v512 = vld [vmem:[%s439 + $0x39] sm:$0xff]
        %v513 = vld [vmem:[%s439 + $0x41] sm:$0xff]
        %v514 = vld [vmem:[%s439 + $0x49] sm:$0xff]
        %v515 = vld [vmem:[%s439 + $0x51] sm:$0xff]
        %v516 = vld [vmem:[%s439 + $0x59] sm:$0xff]
        %v517 = vld [vmem:[%s439 + $0x61] sm:$0xff]
        %v518 = vld [vmem:[%s439 + $0x69] sm:$0xff]
        %v519 = vld [vmem:[%s439 + $0x71] sm:$0xff]
        %v520 = vld [vmem:[%s439 + $0x79] sm:$0xff]
        %v521 = vld [vmem:[%s439 + $0x81] sm:$0xff]
        %v522 = vld [vmem:[%s439 + $0x89] sm:$0xff]
        %v523 = vld [vmem:[%s439 + $0x91] sm:$0xff]
        %v524 = vld [vmem:[%s439 + $0x99] sm:$0xff]
        %v525 = vld [vmem:[%s439 + $0xa1] sm:$0xff]
        %v526 = vld [vmem:[%s439 + $0xa9] sm:$0xff]
        %v527 = vld [vmem:[%s439 + $0xb1] sm:$0xff]
        %v528 = vld [vmem:[%s439 + $0xb9] sm:$0xff]
        %v529 = vld [vmem:[%s439 + $0xc1] sm:$0xff]
        %v530 = vld [vmem:[%s439 + $0xc9] sm:$0xff]
        %v531 = vld [vmem:[%s439 + $0xd1] sm:$0xff]
        %v532 = vld [vmem:[%s439 + $0xd9] sm:$0xff]
        %v533 = vld [vmem:[%s439 + $0xe1] sm:$0xff]
        %v534 = vld [vmem:[%s439 + $0xe9] sm:$0xff]
        %v535 = vld [vmem:[%s439 + $0xf1] sm:$0xff]
        %v536 = vld [vmem:[%s439 + $0xf9] sm:$0xf]
        %s537 = scalar_lea.vmem %s1, 256
        %v538 = vld [vmem:[%s537] sm:$0xff]
        %v539 = vld [vmem:[%s537 + $0x8] sm:$0xff]
        %v540 = vld [vmem:[%s537 + $0x10] sm:$0xff]
        %v541 = vld [vmem:[%s537 + $0x18] sm:$0xff]
        %v542 = vld [vmem:[%s537 + $0x20] sm:$0xff]
        %v543 = vld [vmem:[%s537 + $0x28] sm:$0xff]
        %v544 = vld [vmem:[%s537 + $0x30] sm:$0xff]
        %v545 = vld [vmem:[%s537 + $0x38] sm:$0xff]
        %v546 = vld [vmem:[%s537 + $0x40] sm:$0xff]
        %v547 = vld [vmem:[%s537 + $0x48] sm:$0xff]
        %v548 = vld [vmem:[%s537 + $0x50] sm:$0xff]
        %v549 = vld [vmem:[%s537 + $0x58] sm:$0xff]
        %v550 = vld [vmem:[%s537 + $0x60] sm:$0xff]
        %v551 = vld [vmem:[%s537 + $0x68] sm:$0xff]
        %v552 = vld [vmem:[%s537 + $0x70] sm:$0xff]
        %v553 = vld [vmem:[%s537 + $0x78] sm:$0xff]
        %v554 = vld [vmem:[%s537 + $0x80] sm:$0xff]
        %v555 = vld [vmem:[%s537 + $0x88] sm:$0xff]
        %v556 = vld [vmem:[%s537 + $0x90] sm:$0xff]
        %v557 = vld [vmem:[%s537 + $0x98] sm:$0xff]
        %v558 = vld [vmem:[%s537 + $0xa0] sm:$0xff]
        %v559 = vld [vmem:[%s537 + $0xa8] sm:$0xff]
        %v560 = vld [vmem:[%s537 + $0xb0] sm:$0xff]
        %v561 = vld [vmem:[%s537 + $0xb8] sm:$0xff]
        %v562 = vld [vmem:[%s537 + $0xc0] sm:$0xff]
        %v563 = vld [vmem:[%s537 + $0xc8] sm:$0xff]
        %v564 = vld [vmem:[%s537 + $0xd0] sm:$0xff]
        %v565 = vld [vmem:[%s537 + $0xd8] sm:$0xff]
        %v566 = vld [vmem:[%s537 + $0xe0] sm:$0xff]
        %v567 = vld [vmem:[%s537 + $0xe8] sm:$0xff]
        %v568 = vld [vmem:[%s537 + $0xf0] sm:$0xff]
        %v569 = vld [vmem:[%s537 + $0xf8] sm:$0xff]
        %570 = vmatprep.subr.mxu0 %v569
        %571 = vmatpush1.msra.mxu0 %v568
        %572 = vmatprep.subr.mxu0 %v567
        %573 = vmatpush1.msra.mxu0 %v566
        %574 = vmatprep.subr.mxu0 %v565
        %575 = vmatpush1.msra.mxu0 %v564
        %576 = vmatprep.subr.mxu0 %v563
        %577 = vmatpush1.msra.mxu0 %v562
        %578 = vmatprep.subr.mxu0 %v561
        %579 = vmatpush1.msra.mxu0 %v560
        %580 = vmatprep.subr.mxu0 %v559
        %581 = vmatpush1.msra.mxu0 %v558
        %582 = vmatprep.subr.mxu0 %v557
        %583 = vmatpush1.msra.mxu0 %v556
        %584 = vmatprep.subr.mxu0 %v555
        %585 = vmatpush1.msra.mxu0 %v554
        %586 = vmatprep.subr.mxu0 %v553
        %587 = vmatpush1.msra.mxu0 %v552
        %588 = vmatprep.subr.mxu0 %v551
        %589 = vmatpush1.msra.mxu0 %v550
        %590 = vmatprep.subr.mxu0 %v549
        %591 = vmatpush1.msra.mxu0 %v548
        %592 = vmatprep.subr.mxu0 %v547
        %593 = vmatpush1.msra.mxu0 %v546
        %594 = vmatprep.subr.mxu0 %v545
        %595 = vmatpush1.msra.mxu0 %v544
        %596 = vmatprep.subr.mxu0 %v543
        %597 = vmatpush1.msra.mxu0 %v542
        %598 = vmatprep.subr.mxu0 %v541
        %599 = vmatpush1.msra.mxu0 %v540
        %600 = vmatprep.subr.mxu0 %v539
        %601 = vmatpush1.msra.mxu0 %v538
        %602 = vmatprep.subr.mxu0 0.0
        %603 = vmatpush2.msra.mxu0 0.0
        %604 = vmatprep.subr.mxu0 0.0
        %605 = vmatpush2.msra.mxu0 0.0
        %606 = vmatprep.subr.mxu0 0.0
        %607 = vmatpush2.msra.mxu0 0.0
        %608 = vmatprep.subr.mxu0 0.0
        %609 = vmatpush2.msra.mxu0 0.0
        %610 = vmatprep.subr.mxu0 0.0
        %611 = vmatpush2.msra.mxu0 0.0
        %612 = vmatprep.subr.mxu0 0.0
        %613 = vmatpush2.msra.mxu0 0.0
        %614 = vmatprep.subr.mxu0 0.0
        %615 = vmatpush2.msra.mxu0 0.0
        %616 = vmatprep.subr.mxu0 0.0
        %617 = vmatpush2.msra.mxu0 0.0
        %618 = vmatprep.subr.mxu0 0.0
        %619 = vmatpush2.msra.mxu0 0.0
        %620 = vmatprep.subr.mxu0 0.0
        %621 = vmatpush2.msra.mxu0 0.0
        %622 = vmatprep.subr.mxu0 0.0
        %623 = vmatpush2.msra.mxu0 0.0
        %624 = vmatprep.subr.mxu0 0.0
        %625 = vmatpush2.msra.mxu0 0.0
        %626 = vmatprep.subr.mxu0 0.0
        %627 = vmatpush2.msra.mxu0 0.0
        %628 = vmatprep.subr.mxu0 0.0
        %629 = vmatpush2.msra.mxu0 0.0
        %630 = vmatprep.subr.mxu0 0.0
        %631 = vmatpush2.msra.mxu0 0.0
        %632 = vmatprep.subr.mxu0 0.0
        %633 = vmatpush2.msra.mxu0 0.0
        %634 = vmatprep.mubr.f32.mxu0 0.0
        %635 = vmatmul.mubr.f32.gmra.mxu0 %v505
        %v636 = vpop.f32.mrf.mxu0
        %v637 = vadd.f32 0.0, %v636
        %v638 = vpop.f32.mrf.mxu0
        %v639 = vadd.f32 0.0, %v638
        %640 = vmatprep.mubr.f32.mxu0 0.0
        %641 = vmatmul.mubr.f32.gmra.mxu0 %v506
        %v642 = vpop.f32.mrf.mxu0
        %v643 = vadd.f32 0.0, %v642
        %v644 = vpop.f32.mrf.mxu0
        %v645 = vadd.f32 0.0, %v644
        %646 = vmatprep.mubr.f32.mxu0 0.0
        %647 = vmatmul.mubr.f32.gmra.mxu0 %v507
        %v648 = vpop.f32.mrf.mxu0
        %v649 = vadd.f32 0.0, %v648
        %v650 = vpop.f32.mrf.mxu0
        %v651 = vadd.f32 0.0, %v650
        %652 = vmatprep.mubr.f32.mxu0 0.0
        %653 = vmatmul.mubr.f32.gmra.mxu0 %v508
        %v654 = vpop.f32.mrf.mxu0
        %v655 = vadd.f32 0.0, %v654
        %v656 = vpop.f32.mrf.mxu0
        %v657 = vadd.f32 0.0, %v656
        %658 = vmatprep.mubr.f32.mxu0 0.0
        %659 = vmatmul.mubr.f32.gmra.mxu0 %v509
        %v660 = vpop.f32.mrf.mxu0
        %v661 = vadd.f32 0.0, %v660
        %v662 = vpop.f32.mrf.mxu0
        %v663 = vadd.f32 0.0, %v662
        %664 = vmatprep.mubr.f32.mxu0 0.0
        %665 = vmatmul.mubr.f32.gmra.mxu0 %v510
        %v666 = vpop.f32.mrf.mxu0
        %v667 = vadd.f32 0.0, %v666
        %v668 = vpop.f32.mrf.mxu0
        %v669 = vadd.f32 0.0, %v668
        %670 = vmatprep.mubr.f32.mxu0 0.0
        %671 = vmatmul.mubr.f32.gmra.mxu0 %v511
        %v672 = vpop.f32.mrf.mxu0
        %v673 = vadd.f32 0.0, %v672
        %v674 = vpop.f32.mrf.mxu0
        %v675 = vadd.f32 0.0, %v674
        %676 = vmatprep.mubr.f32.mxu0 0.0
        %677 = vmatmul.mubr.f32.gmra.mxu0 %v512
        %v678 = vpop.f32.mrf.mxu0
        %v679 = vadd.f32 0.0, %v678
        %v680 = vpop.f32.mrf.mxu0
        %v681 = vadd.f32 0.0, %v680
        %682 = vmatprep.mubr.f32.mxu0 0.0
        %683 = vmatmul.mubr.f32.gmra.mxu0 %v513
        %v684 = vpop.f32.mrf.mxu0
        %v685 = vadd.f32 0.0, %v684
        %v686 = vpop.f32.mrf.mxu0
        %v687 = vadd.f32 0.0, %v686
        %688 = vmatprep.mubr.f32.mxu0 0.0
        %689 = vmatmul.mubr.f32.gmra.mxu0 %v514
        %v690 = vpop.f32.mrf.mxu0
        %v691 = vadd.f32 0.0, %v690
        %v692 = vpop.f32.mrf.mxu0
        %v693 = vadd.f32 0.0, %v692
        %694 = vmatprep.mubr.f32.mxu0 0.0
        %695 = vmatmul.mubr.f32.gmra.mxu0 %v515
        %v696 = vpop.f32.mrf.mxu0
        %v697 = vadd.f32 0.0, %v696
        %v698 = vpop.f32.mrf.mxu0
        %v699 = vadd.f32 0.0, %v698
        %700 = vmatprep.mubr.f32.mxu0 0.0
        %701 = vmatmul.mubr.f32.gmra.mxu0 %v516
        %v702 = vpop.f32.mrf.mxu0
        %v703 = vadd.f32 0.0, %v702
        %v704 = vpop.f32.mrf.mxu0
        %v705 = vadd.f32 0.0, %v704
        %706 = vmatprep.mubr.f32.mxu0 0.0
        %707 = vmatmul.mubr.f32.gmra.mxu0 %v517
        %v708 = vpop.f32.mrf.mxu0
        %v709 = vadd.f32 0.0, %v708
        %v710 = vpop.f32.mrf.mxu0
        %v711 = vadd.f32 0.0, %v710
        %712 = vmatprep.mubr.f32.mxu0 0.0
        %713 = vmatmul.mubr.f32.gmra.mxu0 %v518
        %v714 = vpop.f32.mrf.mxu0
        %v715 = vadd.f32 0.0, %v714
        %v716 = vpop.f32.mrf.mxu0
        %v717 = vadd.f32 0.0, %v716
        %718 = vmatprep.mubr.f32.mxu0 0.0
        %719 = vmatmul.mubr.f32.gmra.mxu0 %v519
        %v720 = vpop.f32.mrf.mxu0
        %v721 = vadd.f32 0.0, %v720
        %v722 = vpop.f32.mrf.mxu0
        %v723 = vadd.f32 0.0, %v722
        %724 = vmatprep.mubr.f32.mxu0 0.0
        %725 = vmatmul.mubr.f32.gmra.mxu0 %v520
        %v726 = vpop.f32.mrf.mxu0
        %v727 = vadd.f32 0.0, %v726
        %v728 = vpop.f32.mrf.mxu0
        %v729 = vadd.f32 0.0, %v728
        %730 = vmatprep.mubr.f32.mxu0 0.0
        %731 = vmatmul.mubr.f32.gmra.mxu0 %v521
        %v732 = vpop.f32.mrf.mxu0
        %v733 = vadd.f32 0.0, %v732
        %v734 = vpop.f32.mrf.mxu0
        %v735 = vadd.f32 0.0, %v734
        %736 = vmatprep.mubr.f32.mxu0 0.0
        %737 = vmatmul.mubr.f32.gmra.mxu0 %v522
        %v738 = vpop.f32.mrf.mxu0
        %v739 = vadd.f32 0.0, %v738
        %v740 = vpop.f32.mrf.mxu0
        %v741 = vadd.f32 0.0, %v740
        %742 = vmatprep.mubr.f32.mxu0 0.0
        %743 = vmatmul.mubr.f32.gmra.mxu0 %v523
        %v744 = vpop.f32.mrf.mxu0
        %v745 = vadd.f32 0.0, %v744
        %v746 = vpop.f32.mrf.mxu0
        %v747 = vadd.f32 0.0, %v746
        %748 = vmatprep.mubr.f32.mxu0 0.0
        %749 = vmatmul.mubr.f32.gmra.mxu0 %v524
        %v750 = vpop.f32.mrf.mxu0
        %v751 = vadd.f32 0.0, %v750
        %v752 = vpop.f32.mrf.mxu0
        %v753 = vadd.f32 0.0, %v752
        %754 = vmatprep.mubr.f32.mxu0 0.0
        %755 = vmatmul.mubr.f32.gmra.mxu0 %v525
        %v756 = vpop.f32.mrf.mxu0
        %v757 = vadd.f32 0.0, %v756
        %v758 = vpop.f32.mrf.mxu0
        %v759 = vadd.f32 0.0, %v758
        %760 = vmatprep.mubr.f32.mxu0 0.0
        %761 = vmatmul.mubr.f32.gmra.mxu0 %v526
        %v762 = vpop.f32.mrf.mxu0
        %v763 = vadd.f32 0.0, %v762
        %v764 = vpop.f32.mrf.mxu0
        %v765 = vadd.f32 0.0, %v764
        %766 = vmatprep.mubr.f32.mxu0 0.0
        %767 = vmatmul.mubr.f32.gmra.mxu0 %v527
        %v768 = vpop.f32.mrf.mxu0
        %v769 = vadd.f32 0.0, %v768
        %v770 = vpop.f32.mrf.mxu0
        %v771 = vadd.f32 0.0, %v770
        %772 = vmatprep.mubr.f32.mxu0 0.0
        %773 = vmatmul.mubr.f32.gmra.mxu0 %v528
        %v774 = vpop.f32.mrf.mxu0
        %v775 = vadd.f32 0.0, %v774
        %v776 = vpop.f32.mrf.mxu0
        %v777 = vadd.f32 0.0, %v776
        %778 = vmatprep.mubr.f32.mxu0 0.0
        %779 = vmatmul.mubr.f32.gmra.mxu0 %v529
        %v780 = vpop.f32.mrf.mxu0
        %v781 = vadd.f32 0.0, %v780
        %v782 = vpop.f32.mrf.mxu0
        %v783 = vadd.f32 0.0, %v782
        %784 = vmatprep.mubr.f32.mxu0 0.0
        %785 = vmatmul.mubr.f32.gmra.mxu0 %v530
        %v786 = vpop.f32.mrf.mxu0
        %v787 = vadd.f32 0.0, %v786
        %v788 = vpop.f32.mrf.mxu0
        %v789 = vadd.f32 0.0, %v788
        %790 = vmatprep.mubr.f32.mxu0 0.0
        %791 = vmatmul.mubr.f32.gmra.mxu0 %v531
        %v792 = vpop.f32.mrf.mxu0
        %v793 = vadd.f32 0.0, %v792
        %v794 = vpop.f32.mrf.mxu0
        %v795 = vadd.f32 0.0, %v794
        %796 = vmatprep.mubr.f32.mxu0 0.0
        %797 = vmatmul.mubr.f32.gmra.mxu0 %v532
        %v798 = vpop.f32.mrf.mxu0
        %v799 = vadd.f32 0.0, %v798
        %v800 = vpop.f32.mrf.mxu0
        %v801 = vadd.f32 0.0, %v800
        %802 = vmatprep.mubr.f32.mxu0 0.0
        %803 = vmatmul.mubr.f32.gmra.mxu0 %v533
        %v804 = vpop.f32.mrf.mxu0
        %v805 = vadd.f32 0.0, %v804
        %v806 = vpop.f32.mrf.mxu0
        %v807 = vadd.f32 0.0, %v806
        %808 = vmatprep.mubr.f32.mxu0 0.0
        %809 = vmatmul.mubr.f32.gmra.mxu0 %v534
        %v810 = vpop.f32.mrf.mxu0
        %v811 = vadd.f32 0.0, %v810
        %v812 = vpop.f32.mrf.mxu0
        %v813 = vadd.f32 0.0, %v812
        %814 = vmatprep.mubr.f32.mxu0 0.0
        %815 = vmatmul.mubr.f32.gmra.mxu0 %v535
        %v816 = vpop.f32.mrf.mxu0
        %v817 = vadd.f32 0.0, %v816
        %v818 = vpop.f32.mrf.mxu0
        %v819 = vadd.f32 0.0, %v818
        %820 = vmatprep.mubr.f32.mxu0 0.0
        %821 = vmatmul.mubr.f32.gmra.mxu0 %v536
        %v822 = vpop.f32.mrf.mxu0
        %v823 = vadd.f32 0.0, %v822
        %v824 = vpop.f32.mrf.mxu0
        %v825 = vadd.f32 0.0, %v824
        %826 = vdwg.mxu0
        %827 = vmatprep.subr.mxu0 %v504
        %828 = vmatpush1.msra.mxu0 %v503
        %829 = vmatprep.subr.mxu0 %v502
        %830 = vmatpush1.msra.mxu0 %v501
        %831 = vmatprep.subr.mxu0 %v500
        %832 = vmatpush1.msra.mxu0 %v499
        %833 = vmatprep.subr.mxu0 %v498
        %834 = vmatpush1.msra.mxu0 %v497
        %835 = vmatprep.subr.mxu0 %v496
        %836 = vmatpush1.msra.mxu0 %v495
        %837 = vmatprep.subr.mxu0 %v494
        %838 = vmatpush1.msra.mxu0 %v493
        %839 = vmatprep.subr.mxu0 %v492
        %840 = vmatpush1.msra.mxu0 %v491
        %841 = vmatprep.subr.mxu0 %v490
        %842 = vmatpush1.msra.mxu0 %v489
        %843 = vmatprep.subr.mxu0 %v488
        %844 = vmatpush1.msra.mxu0 %v487
        %845 = vmatprep.subr.mxu0 %v486
        %846 = vmatpush1.msra.mxu0 %v485
        %847 = vmatprep.subr.mxu0 %v484
        %848 = vmatpush1.msra.mxu0 %v483
        %849 = vmatprep.subr.mxu0 %v482
        %850 = vmatpush1.msra.mxu0 %v481
        %851 = vmatprep.subr.mxu0 %v480
        %852 = vmatpush1.msra.mxu0 %v479
        %853 = vmatprep.subr.mxu0 %v478
        %854 = vmatpush1.msra.mxu0 %v477
        %855 = vmatprep.subr.mxu0 %v476
        %856 = vmatpush1.msra.mxu0 %v475
        %857 = vmatprep.subr.mxu0 %v474
        %858 = vmatpush1.msra.mxu0 %v473
        %859 = vmatprep.subr.mxu0 0.0
        %860 = vmatpush2.msra.mxu0 0.0
        %861 = vmatprep.subr.mxu0 0.0
        %862 = vmatpush2.msra.mxu0 0.0
        %863 = vmatprep.subr.mxu0 0.0
        %864 = vmatpush2.msra.mxu0 0.0
        %865 = vmatprep.subr.mxu0 0.0
        %866 = vmatpush2.msra.mxu0 0.0
        %867 = vmatprep.subr.mxu0 0.0
        %868 = vmatpush2.msra.mxu0 0.0
        %869 = vmatprep.subr.mxu0 0.0
        %870 = vmatpush2.msra.mxu0 0.0
        %871 = vmatprep.subr.mxu0 0.0
        %872 = vmatpush2.msra.mxu0 0.0
        %873 = vmatprep.subr.mxu0 0.0
        %874 = vmatpush2.msra.mxu0 0.0
        %875 = vmatprep.subr.mxu0 0.0
        %876 = vmatpush2.msra.mxu0 0.0
        %877 = vmatprep.subr.mxu0 0.0
        %878 = vmatpush2.msra.mxu0 0.0
        %879 = vmatprep.subr.mxu0 0.0
        %880 = vmatpush2.msra.mxu0 0.0
        %881 = vmatprep.subr.mxu0 0.0
        %882 = vmatpush2.msra.mxu0 0.0
        %883 = vmatprep.subr.mxu0 0.0
        %884 = vmatpush2.msra.mxu0 0.0
        %885 = vmatprep.subr.mxu0 0.0
        %886 = vmatpush2.msra.mxu0 0.0
        %887 = vmatprep.subr.mxu0 0.0
        %888 = vmatpush2.msra.mxu0 0.0
        %889 = vmatprep.subr.mxu0 0.0
        %890 = vmatpush2.msra.mxu0 0.0
        %891 = vmatprep.mubr.f32.mxu0 0.0
        %892 = vmatmul.mubr.f32.gmra.mxu0 %v441
        %v893 = vpop.f32.mrf.mxu0
        %v894 = vadd.f32 %v637, %v893
        %v895 = vpop.f32.mrf.mxu0
        %v896 = vadd.f32 %v639, %v895
        %897 = vmatprep.mubr.f32.mxu0 0.0
        %898 = vmatmul.mubr.f32.gmra.mxu0 %v442
        %v899 = vpop.f32.mrf.mxu0
        %v900 = vadd.f32 %v643, %v899
        %v901 = vpop.f32.mrf.mxu0
        %v902 = vadd.f32 %v645, %v901
        %903 = vmatprep.mubr.f32.mxu0 0.0
        %904 = vmatmul.mubr.f32.gmra.mxu0 %v443
        %v905 = vpop.f32.mrf.mxu0
        %v906 = vadd.f32 %v649, %v905
        %v907 = vpop.f32.mrf.mxu0
        %v908 = vadd.f32 %v651, %v907
        %909 = vmatprep.mubr.f32.mxu0 0.0
        %910 = vmatmul.mubr.f32.gmra.mxu0 %v444
        %v911 = vpop.f32.mrf.mxu0
        %v912 = vadd.f32 %v655, %v911
        %v913 = vpop.f32.mrf.mxu0
        %v914 = vadd.f32 %v657, %v913
        %915 = vmatprep.mubr.f32.mxu0 0.0
        %916 = vmatmul.mubr.f32.gmra.mxu0 %v445
        %v917 = vpop.f32.mrf.mxu0
        %v918 = vadd.f32 %v661, %v917
        %v919 = vpop.f32.mrf.mxu0
        %v920 = vadd.f32 %v663, %v919
        %921 = vmatprep.mubr.f32.mxu0 0.0
        %922 = vmatmul.mubr.f32.gmra.mxu0 %v446
        %v923 = vpop.f32.mrf.mxu0
        %v924 = vadd.f32 %v667, %v923
        %v925 = vpop.f32.mrf.mxu0
        %v926 = vadd.f32 %v669, %v925
        %927 = vmatprep.mubr.f32.mxu0 0.0
        %928 = vmatmul.mubr.f32.gmra.mxu0 %v447
        %v929 = vpop.f32.mrf.mxu0
        %v930 = vadd.f32 %v673, %v929
        %v931 = vpop.f32.mrf.mxu0
        %v932 = vadd.f32 %v675, %v931
        %933 = vmatprep.mubr.f32.mxu0 0.0
        %934 = vmatmul.mubr.f32.gmra.mxu0 %v448
        %v935 = vpop.f32.mrf.mxu0
        %v936 = vadd.f32 %v679, %v935
        %v937 = vpop.f32.mrf.mxu0
        %v938 = vadd.f32 %v681, %v937
        %939 = vmatprep.mubr.f32.mxu0 0.0
        %940 = vmatmul.mubr.f32.gmra.mxu0 %v449
        %v941 = vpop.f32.mrf.mxu0
        %v942 = vadd.f32 %v685, %v941
        %v943 = vpop.f32.mrf.mxu0
        %v944 = vadd.f32 %v687, %v943
        %945 = vmatprep.mubr.f32.mxu0 0.0
        %946 = vmatmul.mubr.f32.gmra.mxu0 %v450
        %v947 = vpop.f32.mrf.mxu0
        %v948 = vadd.f32 %v691, %v947
        %v949 = vpop.f32.mrf.mxu0
        %v950 = vadd.f32 %v693, %v949
        %951 = vmatprep.mubr.f32.mxu0 0.0
        %952 = vmatmul.mubr.f32.gmra.mxu0 %v451
        %v953 = vpop.f32.mrf.mxu0
        %v954 = vadd.f32 %v697, %v953
        %v955 = vpop.f32.mrf.mxu0
        %v956 = vadd.f32 %v699, %v955
        %957 = vmatprep.mubr.f32.mxu0 0.0
        %958 = vmatmul.mubr.f32.gmra.mxu0 %v452
        %v959 = vpop.f32.mrf.mxu0
        %v960 = vadd.f32 %v703, %v959
        %v961 = vpop.f32.mrf.mxu0
        %v962 = vadd.f32 %v705, %v961
        %963 = vmatprep.mubr.f32.mxu0 0.0
        %964 = vmatmul.mubr.f32.gmra.mxu0 %v453
        %v965 = vpop.f32.mrf.mxu0
        %v966 = vadd.f32 %v709, %v965
        %v967 = vpop.f32.mrf.mxu0
        %v968 = vadd.f32 %v711, %v967
        %969 = vmatprep.mubr.f32.mxu0 0.0
        %970 = vmatmul.mubr.f32.gmra.mxu0 %v454
        %v971 = vpop.f32.mrf.mxu0
        %v972 = vadd.f32 %v715, %v971
        %v973 = vpop.f32.mrf.mxu0
        %v974 = vadd.f32 %v717, %v973
        %975 = vmatprep.mubr.f32.mxu0 0.0
        %976 = vmatmul.mubr.f32.gmra.mxu0 %v455
        %v977 = vpop.f32.mrf.mxu0
        %v978 = vadd.f32 %v721, %v977
        %v979 = vpop.f32.mrf.mxu0
        %v980 = vadd.f32 %v723, %v979
        %981 = vmatprep.mubr.f32.mxu0 0.0
        %982 = vmatmul.mubr.f32.gmra.mxu0 %v456
        %v983 = vpop.f32.mrf.mxu0
        %v984 = vadd.f32 %v727, %v983
        %v985 = vpop.f32.mrf.mxu0
        %v986 = vadd.f32 %v729, %v985
        %987 = vmatprep.mubr.f32.mxu0 0.0
        %988 = vmatmul.mubr.f32.gmra.mxu0 %v457
        %v989 = vpop.f32.mrf.mxu0
        %v990 = vadd.f32 %v733, %v989
        %v991 = vpop.f32.mrf.mxu0
        %v992 = vadd.f32 %v735, %v991
        %993 = vmatprep.mubr.f32.mxu0 0.0
        %994 = vmatmul.mubr.f32.gmra.mxu0 %v458
        %v995 = vpop.f32.mrf.mxu0
        %v996 = vadd.f32 %v739, %v995
        %v997 = vpop.f32.mrf.mxu0
        %v998 = vadd.f32 %v741, %v997
        %999 = vmatprep.mubr.f32.mxu0 0.0
        %1000 = vmatmul.mubr.f32.gmra.mxu0 %v459
        %v1001 = vpop.f32.mrf.mxu0
        %v1002 = vadd.f32 %v745, %v1001
        %v1003 = vpop.f32.mrf.mxu0
        %v1004 = vadd.f32 %v747, %v1003
        %1005 = vmatprep.mubr.f32.mxu0 0.0
        %1006 = vmatmul.mubr.f32.gmra.mxu0 %v460
        %v1007 = vpop.f32.mrf.mxu0
        %v1008 = vadd.f32 %v751, %v1007
        %v1009 = vpop.f32.mrf.mxu0
        %v1010 = vadd.f32 %v753, %v1009
        %1011 = vmatprep.mubr.f32.mxu0 0.0
        %1012 = vmatmul.mubr.f32.gmra.mxu0 %v461
        %v1013 = vpop.f32.mrf.mxu0
        %v1014 = vadd.f32 %v757, %v1013
        %v1015 = vpop.f32.mrf.mxu0
        %v1016 = vadd.f32 %v759, %v1015
        %1017 = vmatprep.mubr.f32.mxu0 0.0
        %1018 = vmatmul.mubr.f32.gmra.mxu0 %v462
        %v1019 = vpop.f32.mrf.mxu0
        %v1020 = vadd.f32 %v763, %v1019
        %v1021 = vpop.f32.mrf.mxu0
        %v1022 = vadd.f32 %v765, %v1021
        %1023 = vmatprep.mubr.f32.mxu0 0.0
        %1024 = vmatmul.mubr.f32.gmra.mxu0 %v463
        %v1025 = vpop.f32.mrf.mxu0
        %v1026 = vadd.f32 %v769, %v1025
        %v1027 = vpop.f32.mrf.mxu0
        %v1028 = vadd.f32 %v771, %v1027
        %1029 = vmatprep.mubr.f32.mxu0 0.0
        %1030 = vmatmul.mubr.f32.gmra.mxu0 %v464
        %v1031 = vpop.f32.mrf.mxu0
        %v1032 = vadd.f32 %v775, %v1031
        %v1033 = vpop.f32.mrf.mxu0
        %v1034 = vadd.f32 %v777, %v1033
        %1035 = vmatprep.mubr.f32.mxu0 0.0
        %1036 = vmatmul.mubr.f32.gmra.mxu0 %v465
        %v1037 = vpop.f32.mrf.mxu0
        %v1038 = vadd.f32 %v781, %v1037
        %v1039 = vpop.f32.mrf.mxu0
        %v1040 = vadd.f32 %v783, %v1039
        %1041 = vmatprep.mubr.f32.mxu0 0.0
        %1042 = vmatmul.mubr.f32.gmra.mxu0 %v466
        %v1043 = vpop.f32.mrf.mxu0
        %v1044 = vadd.f32 %v787, %v1043
        %v1045 = vpop.f32.mrf.mxu0
        %v1046 = vadd.f32 %v789, %v1045
        %1047 = vmatprep.mubr.f32.mxu0 0.0
        %1048 = vmatmul.mubr.f32.gmra.mxu0 %v467
        %v1049 = vpop.f32.mrf.mxu0
        %v1050 = vadd.f32 %v793, %v1049
        %v1051 = vpop.f32.mrf.mxu0
        %v1052 = vadd.f32 %v795, %v1051
        %1053 = vmatprep.mubr.f32.mxu0 0.0
        %1054 = vmatmul.mubr.f32.gmra.mxu0 %v468
        %v1055 = vpop.f32.mrf.mxu0
        %v1056 = vadd.f32 %v799, %v1055
        %v1057 = vpop.f32.mrf.mxu0
        %v1058 = vadd.f32 %v801, %v1057
        %1059 = vmatprep.mubr.f32.mxu0 0.0
        %1060 = vmatmul.mubr.f32.gmra.mxu0 %v469
        %v1061 = vpop.f32.mrf.mxu0
        %v1062 = vadd.f32 %v805, %v1061
        %v1063 = vpop.f32.mrf.mxu0
        %v1064 = vadd.f32 %v807, %v1063
        %1065 = vmatprep.mubr.f32.mxu0 0.0
        %1066 = vmatmul.mubr.f32.gmra.mxu0 %v470
        %v1067 = vpop.f32.mrf.mxu0
        %v1068 = vadd.f32 %v811, %v1067
        %v1069 = vpop.f32.mrf.mxu0
        %v1070 = vadd.f32 %v813, %v1069
        %1071 = vmatprep.mubr.f32.mxu0 0.0
        %1072 = vmatmul.mubr.f32.gmra.mxu0 %v471
        %v1073 = vpop.f32.mrf.mxu0
        %v1074 = vadd.f32 %v817, %v1073
        %v1075 = vpop.f32.mrf.mxu0
        %v1076 = vadd.f32 %v819, %v1075
        %1077 = vmatprep.mubr.f32.mxu0 0.0
        %1078 = vmatmul.mubr.f32.gmra.mxu0 %v472
        %v1079 = vpop.f32.mrf.mxu0
        %v1080 = vadd.f32 %v823, %v1079
        %v1081 = vpop.f32.mrf.mxu0
        %v1082 = vadd.f32 %v825, %v1081
        %1083 = vdwg.mxu0
        %v1084 = vld [vmem:[%s439 + $0x2] sm:$0xff]
        %v1085 = vld [vmem:[%s439 + $0xa] sm:$0xff]
        %v1086 = vld [vmem:[%s439 + $0x12] sm:$0xff]
        %v1087 = vld [vmem:[%s439 + $0x1a] sm:$0xff]
        %v1088 = vld [vmem:[%s439 + $0x22] sm:$0xff]
        %v1089 = vld [vmem:[%s439 + $0x2a] sm:$0xff]
        %v1090 = vld [vmem:[%s439 + $0x32] sm:$0xff]
        %v1091 = vld [vmem:[%s439 + $0x3a] sm:$0xff]
        %v1092 = vld [vmem:[%s439 + $0x42] sm:$0xff]
        %v1093 = vld [vmem:[%s439 + $0x4a] sm:$0xff]
        %v1094 = vld [vmem:[%s439 + $0x52] sm:$0xff]
        %v1095 = vld [vmem:[%s439 + $0x5a] sm:$0xff]
        %v1096 = vld [vmem:[%s439 + $0x62] sm:$0xff]
        %v1097 = vld [vmem:[%s439 + $0x6a] sm:$0xff]
        %v1098 = vld [vmem:[%s439 + $0x72] sm:$0xff]
        %v1099 = vld [vmem:[%s439 + $0x7a] sm:$0xff]
        %v1100 = vld [vmem:[%s439 + $0x82] sm:$0xff]
        %v1101 = vld [vmem:[%s439 + $0x8a] sm:$0xff]
        %v1102 = vld [vmem:[%s439 + $0x92] sm:$0xff]
        %v1103 = vld [vmem:[%s439 + $0x9a] sm:$0xff]
        %v1104 = vld [vmem:[%s439 + $0xa2] sm:$0xff]
        %v1105 = vld [vmem:[%s439 + $0xaa] sm:$0xff]
        %v1106 = vld [vmem:[%s439 + $0xb2] sm:$0xff]
        %v1107 = vld [vmem:[%s439 + $0xba] sm:$0xff]
        %v1108 = vld [vmem:[%s439 + $0xc2] sm:$0xff]
        %v1109 = vld [vmem:[%s439 + $0xca] sm:$0xff]
        %v1110 = vld [vmem:[%s439 + $0xd2] sm:$0xff]
        %v1111 = vld [vmem:[%s439 + $0xda] sm:$0xff]
        %v1112 = vld [vmem:[%s439 + $0xe2] sm:$0xff]
        %v1113 = vld [vmem:[%s439 + $0xea] sm:$0xff]
        %v1114 = vld [vmem:[%s439 + $0xf2] sm:$0xff]
        %v1115 = vld [vmem:[%s439 + $0xfa] sm:$0xf]
        %s1116 = scalar_lea.vmem %s1, 512
        %v1117 = vld [vmem:[%s1116] sm:$0xff]
        %v1118 = vld [vmem:[%s1116 + $0x8] sm:$0xff]
        %v1119 = vld [vmem:[%s1116 + $0x10] sm:$0xff]
        %v1120 = vld [vmem:[%s1116 + $0x18] sm:$0xff]
        %v1121 = vld [vmem:[%s1116 + $0x20] sm:$0xff]
        %v1122 = vld [vmem:[%s1116 + $0x28] sm:$0xff]
        %v1123 = vld [vmem:[%s1116 + $0x30] sm:$0xff]
        %v1124 = vld [vmem:[%s1116 + $0x38] sm:$0xff]
        %v1125 = vld [vmem:[%s1116 + $0x40] sm:$0xff]
        %v1126 = vld [vmem:[%s1116 + $0x48] sm:$0xff]
        %v1127 = vld [vmem:[%s1116 + $0x50] sm:$0xff]
        %v1128 = vld [vmem:[%s1116 + $0x58] sm:$0xff]
        %v1129 = vld [vmem:[%s1116 + $0x60] sm:$0xff]
        %v1130 = vld [vmem:[%s1116 + $0x68] sm:$0xff]
        %v1131 = vld [vmem:[%s1116 + $0x70] sm:$0xff]
        %v1132 = vld [vmem:[%s1116 + $0x78] sm:$0xff]
        %v1133 = vld [vmem:[%s1116 + $0x80] sm:$0xff]
        %v1134 = vld [vmem:[%s1116 + $0x88] sm:$0xff]
        %v1135 = vld [vmem:[%s1116 + $0x90] sm:$0xff]
        %v1136 = vld [vmem:[%s1116 + $0x98] sm:$0xff]
        %v1137 = vld [vmem:[%s1116 + $0xa0] sm:$0xff]
        %v1138 = vld [vmem:[%s1116 + $0xa8] sm:$0xff]
        %v1139 = vld [vmem:[%s1116 + $0xb0] sm:$0xff]
        %v1140 = vld [vmem:[%s1116 + $0xb8] sm:$0xff]
        %v1141 = vld [vmem:[%s1116 + $0xc0] sm:$0xff]
        %v1142 = vld [vmem:[%s1116 + $0xc8] sm:$0xff]
        %v1143 = vld [vmem:[%s1116 + $0xd0] sm:$0xff]
        %v1144 = vld [vmem:[%s1116 + $0xd8] sm:$0xff]
        %v1145 = vld [vmem:[%s1116 + $0xe0] sm:$0xff]
        %v1146 = vld [vmem:[%s1116 + $0xe8] sm:$0xff]
        %v1147 = vld [vmem:[%s1116 + $0xf0] sm:$0xff]
        %v1148 = vld [vmem:[%s1116 + $0xf8] sm:$0xff]
        %1149 = vmatprep.subr.mxu0 %v1148
        %1150 = vmatpush1.msra.mxu0 %v1147
        %1151 = vmatprep.subr.mxu0 %v1146
        %1152 = vmatpush1.msra.mxu0 %v1145
        %1153 = vmatprep.subr.mxu0 %v1144
        %1154 = vmatpush1.msra.mxu0 %v1143
        %1155 = vmatprep.subr.mxu0 %v1142
        %1156 = vmatpush1.msra.mxu0 %v1141
        %1157 = vmatprep.subr.mxu0 %v1140
        %1158 = vmatpush1.msra.mxu0 %v1139
        %1159 = vmatprep.subr.mxu0 %v1138
        %1160 = vmatpush1.msra.mxu0 %v1137
        %1161 = vmatprep.subr.mxu0 %v1136
        %1162 = vmatpush1.msra.mxu0 %v1135
        %1163 = vmatprep.subr.mxu0 %v1134
        %1164 = vmatpush1.msra.mxu0 %v1133
        %1165 = vmatprep.subr.mxu0 %v1132
        %1166 = vmatpush1.msra.mxu0 %v1131
        %1167 = vmatprep.subr.mxu0 %v1130
        %1168 = vmatpush1.msra.mxu0 %v1129
        %1169 = vmatprep.subr.mxu0 %v1128
        %1170 = vmatpush1.msra.mxu0 %v1127
        %1171 = vmatprep.subr.mxu0 %v1126
        %1172 = vmatpush1.msra.mxu0 %v1125
        %1173 = vmatprep.subr.mxu0 %v1124
        %1174 = vmatpush1.msra.mxu0 %v1123
        %1175 = vmatprep.subr.mxu0 %v1122
        %1176 = vmatpush1.msra.mxu0 %v1121
        %1177 = vmatprep.subr.mxu0 %v1120
        %1178 = vmatpush1.msra.mxu0 %v1119
        %1179 = vmatprep.subr.mxu0 %v1118
        %1180 = vmatpush1.msra.mxu0 %v1117
        %1181 = vmatprep.subr.mxu0 0.0
        %1182 = vmatpush2.msra.mxu0 0.0
        %1183 = vmatprep.subr.mxu0 0.0
        %1184 = vmatpush2.msra.mxu0 0.0
        %1185 = vmatprep.subr.mxu0 0.0
        %1186 = vmatpush2.msra.mxu0 0.0
        %1187 = vmatprep.subr.mxu0 0.0
        %1188 = vmatpush2.msra.mxu0 0.0
        %1189 = vmatprep.subr.mxu0 0.0
        %1190 = vmatpush2.msra.mxu0 0.0
        %1191 = vmatprep.subr.mxu0 0.0
        %1192 = vmatpush2.msra.mxu0 0.0
        %1193 = vmatprep.subr.mxu0 0.0
        %1194 = vmatpush2.msra.mxu0 0.0
        %1195 = vmatprep.subr.mxu0 0.0
        %1196 = vmatpush2.msra.mxu0 0.0
        %1197 = vmatprep.subr.mxu0 0.0
        %1198 = vmatpush2.msra.mxu0 0.0
        %1199 = vmatprep.subr.mxu0 0.0
        %1200 = vmatpush2.msra.mxu0 0.0
        %1201 = vmatprep.subr.mxu0 0.0
        %1202 = vmatpush2.msra.mxu0 0.0
        %1203 = vmatprep.subr.mxu0 0.0
        %1204 = vmatpush2.msra.mxu0 0.0
        %1205 = vmatprep.subr.mxu0 0.0
        %1206 = vmatpush2.msra.mxu0 0.0
        %1207 = vmatprep.subr.mxu0 0.0
        %1208 = vmatpush2.msra.mxu0 0.0
        %1209 = vmatprep.subr.mxu0 0.0
        %1210 = vmatpush2.msra.mxu0 0.0
        %1211 = vmatprep.subr.mxu0 0.0
        %1212 = vmatpush2.msra.mxu0 0.0
        %1213 = vmatprep.mubr.f32.mxu0 0.0
        %1214 = vmatmul.mubr.f32.gmra.mxu0 %v1084
        %v1215 = vpop.f32.mrf.mxu0
        %v1216 = vadd.f32 0.0, %v1215
        %v1217 = vpop.f32.mrf.mxu0
        %v1218 = vadd.f32 0.0, %v1217
        %1219 = vmatprep.mubr.f32.mxu0 0.0
        %1220 = vmatmul.mubr.f32.gmra.mxu0 %v1085
        %v1221 = vpop.f32.mrf.mxu0
        %v1222 = vadd.f32 0.0, %v1221
        %v1223 = vpop.f32.mrf.mxu0
        %v1224 = vadd.f32 0.0, %v1223
        %1225 = vmatprep.mubr.f32.mxu0 0.0
        %1226 = vmatmul.mubr.f32.gmra.mxu0 %v1086
        %v1227 = vpop.f32.mrf.mxu0
        %v1228 = vadd.f32 0.0, %v1227
        %v1229 = vpop.f32.mrf.mxu0
        %v1230 = vadd.f32 0.0, %v1229
        %1231 = vmatprep.mubr.f32.mxu0 0.0
        %1232 = vmatmul.mubr.f32.gmra.mxu0 %v1087
        %v1233 = vpop.f32.mrf.mxu0
        %v1234 = vadd.f32 0.0, %v1233
        %v1235 = vpop.f32.mrf.mxu0
        %v1236 = vadd.f32 0.0, %v1235
        %1237 = vmatprep.mubr.f32.mxu0 0.0
        %1238 = vmatmul.mubr.f32.gmra.mxu0 %v1088
        %v1239 = vpop.f32.mrf.mxu0
        %v1240 = vadd.f32 0.0, %v1239
        %v1241 = vpop.f32.mrf.mxu0
        %v1242 = vadd.f32 0.0, %v1241
        %1243 = vmatprep.mubr.f32.mxu0 0.0
        %1244 = vmatmul.mubr.f32.gmra.mxu0 %v1089
        %v1245 = vpop.f32.mrf.mxu0
        %v1246 = vadd.f32 0.0, %v1245
        %v1247 = vpop.f32.mrf.mxu0
        %v1248 = vadd.f32 0.0, %v1247
        %1249 = vmatprep.mubr.f32.mxu0 0.0
        %1250 = vmatmul.mubr.f32.gmra.mxu0 %v1090
        %v1251 = vpop.f32.mrf.mxu0
        %v1252 = vadd.f32 0.0, %v1251
        %v1253 = vpop.f32.mrf.mxu0
        %v1254 = vadd.f32 0.0, %v1253
        %1255 = vmatprep.mubr.f32.mxu0 0.0
        %1256 = vmatmul.mubr.f32.gmra.mxu0 %v1091
        %v1257 = vpop.f32.mrf.mxu0
        %v1258 = vadd.f32 0.0, %v1257
        %v1259 = vpop.f32.mrf.mxu0
        %v1260 = vadd.f32 0.0, %v1259
        %1261 = vmatprep.mubr.f32.mxu0 0.0
        %1262 = vmatmul.mubr.f32.gmra.mxu0 %v1092
        %v1263 = vpop.f32.mrf.mxu0
        %v1264 = vadd.f32 0.0, %v1263
        %v1265 = vpop.f32.mrf.mxu0
        %v1266 = vadd.f32 0.0, %v1265
        %1267 = vmatprep.mubr.f32.mxu0 0.0
        %1268 = vmatmul.mubr.f32.gmra.mxu0 %v1093
        %v1269 = vpop.f32.mrf.mxu0
        %v1270 = vadd.f32 0.0, %v1269
        %v1271 = vpop.f32.mrf.mxu0
        %v1272 = vadd.f32 0.0, %v1271
        %1273 = vmatprep.mubr.f32.mxu0 0.0
        %1274 = vmatmul.mubr.f32.gmra.mxu0 %v1094
        %v1275 = vpop.f32.mrf.mxu0
        %v1276 = vadd.f32 0.0, %v1275
        %v1277 = vpop.f32.mrf.mxu0
        %v1278 = vadd.f32 0.0, %v1277
        %1279 = vmatprep.mubr.f32.mxu0 0.0
        %1280 = vmatmul.mubr.f32.gmra.mxu0 %v1095
        %v1281 = vpop.f32.mrf.mxu0
        %v1282 = vadd.f32 0.0, %v1281
        %v1283 = vpop.f32.mrf.mxu0
        %v1284 = vadd.f32 0.0, %v1283
        %1285 = vmatprep.mubr.f32.mxu0 0.0
        %1286 = vmatmul.mubr.f32.gmra.mxu0 %v1096
        %v1287 = vpop.f32.mrf.mxu0
        %v1288 = vadd.f32 0.0, %v1287
        %v1289 = vpop.f32.mrf.mxu0
        %v1290 = vadd.f32 0.0, %v1289
        %1291 = vmatprep.mubr.f32.mxu0 0.0
        %1292 = vmatmul.mubr.f32.gmra.mxu0 %v1097
        %v1293 = vpop.f32.mrf.mxu0
        %v1294 = vadd.f32 0.0, %v1293
        %v1295 = vpop.f32.mrf.mxu0
        %v1296 = vadd.f32 0.0, %v1295
        %1297 = vmatprep.mubr.f32.mxu0 0.0
        %1298 = vmatmul.mubr.f32.gmra.mxu0 %v1098
        %v1299 = vpop.f32.mrf.mxu0
        %v1300 = vadd.f32 0.0, %v1299
        %v1301 = vpop.f32.mrf.mxu0
        %v1302 = vadd.f32 0.0, %v1301
        %1303 = vmatprep.mubr.f32.mxu0 0.0
        %1304 = vmatmul.mubr.f32.gmra.mxu0 %v1099
        %v1305 = vpop.f32.mrf.mxu0
        %v1306 = vadd.f32 0.0, %v1305
        %v1307 = vpop.f32.mrf.mxu0
        %v1308 = vadd.f32 0.0, %v1307
        %1309 = vmatprep.mubr.f32.mxu0 0.0
        %1310 = vmatmul.mubr.f32.gmra.mxu0 %v1100
        %v1311 = vpop.f32.mrf.mxu0
        %v1312 = vadd.f32 0.0, %v1311
        %v1313 = vpop.f32.mrf.mxu0
        %v1314 = vadd.f32 0.0, %v1313
        %1315 = vmatprep.mubr.f32.mxu0 0.0
        %1316 = vmatmul.mubr.f32.gmra.mxu0 %v1101
        %v1317 = vpop.f32.mrf.mxu0
        %v1318 = vadd.f32 0.0, %v1317
        %v1319 = vpop.f32.mrf.mxu0
        %v1320 = vadd.f32 0.0, %v1319
        %1321 = vmatprep.mubr.f32.mxu0 0.0
        %1322 = vmatmul.mubr.f32.gmra.mxu0 %v1102
        %v1323 = vpop.f32.mrf.mxu0
        %v1324 = vadd.f32 0.0, %v1323
        %v1325 = vpop.f32.mrf.mxu0
        %v1326 = vadd.f32 0.0, %v1325
        %1327 = vmatprep.mubr.f32.mxu0 0.0
        %1328 = vmatmul.mubr.f32.gmra.mxu0 %v1103
        %v1329 = vpop.f32.mrf.mxu0
        %v1330 = vadd.f32 0.0, %v1329
        %v1331 = vpop.f32.mrf.mxu0
        %v1332 = vadd.f32 0.0, %v1331
        %1333 = vmatprep.mubr.f32.mxu0 0.0
        %1334 = vmatmul.mubr.f32.gmra.mxu0 %v1104
        %v1335 = vpop.f32.mrf.mxu0
        %v1336 = vadd.f32 0.0, %v1335
        %v1337 = vpop.f32.mrf.mxu0
        %v1338 = vadd.f32 0.0, %v1337
        %1339 = vmatprep.mubr.f32.mxu0 0.0
        %1340 = vmatmul.mubr.f32.gmra.mxu0 %v1105
        %v1341 = vpop.f32.mrf.mxu0
        %v1342 = vadd.f32 0.0, %v1341
        %v1343 = vpop.f32.mrf.mxu0
        %v1344 = vadd.f32 0.0, %v1343
        %1345 = vmatprep.mubr.f32.mxu0 0.0
        %1346 = vmatmul.mubr.f32.gmra.mxu0 %v1106
        %v1347 = vpop.f32.mrf.mxu0
        %v1348 = vadd.f32 0.0, %v1347
        %v1349 = vpop.f32.mrf.mxu0
        %v1350 = vadd.f32 0.0, %v1349
        %1351 = vmatprep.mubr.f32.mxu0 0.0
        %1352 = vmatmul.mubr.f32.gmra.mxu0 %v1107
        %v1353 = vpop.f32.mrf.mxu0
        %v1354 = vadd.f32 0.0, %v1353
        %v1355 = vpop.f32.mrf.mxu0
        %v1356 = vadd.f32 0.0, %v1355
        %1357 = vmatprep.mubr.f32.mxu0 0.0
        %1358 = vmatmul.mubr.f32.gmra.mxu0 %v1108
        %v1359 = vpop.f32.mrf.mxu0
        %v1360 = vadd.f32 0.0, %v1359
        %v1361 = vpop.f32.mrf.mxu0
        %v1362 = vadd.f32 0.0, %v1361
        %1363 = vmatprep.mubr.f32.mxu0 0.0
        %1364 = vmatmul.mubr.f32.gmra.mxu0 %v1109
        %v1365 = vpop.f32.mrf.mxu0
        %v1366 = vadd.f32 0.0, %v1365
        %v1367 = vpop.f32.mrf.mxu0
        %v1368 = vadd.f32 0.0, %v1367
        %1369 = vmatprep.mubr.f32.mxu0 0.0
        %1370 = vmatmul.mubr.f32.gmra.mxu0 %v1110
        %v1371 = vpop.f32.mrf.mxu0
        %v1372 = vadd.f32 0.0, %v1371
        %v1373 = vpop.f32.mrf.mxu0
        %v1374 = vadd.f32 0.0, %v1373
        %1375 = vmatprep.mubr.f32.mxu0 0.0
        %1376 = vmatmul.mubr.f32.gmra.mxu0 %v1111
        %v1377 = vpop.f32.mrf.mxu0
        %v1378 = vadd.f32 0.0, %v1377
        %v1379 = vpop.f32.mrf.mxu0
        %v1380 = vadd.f32 0.0, %v1379
        %1381 = vmatprep.mubr.f32.mxu0 0.0
        %1382 = vmatmul.mubr.f32.gmra.mxu0 %v1112
        %v1383 = vpop.f32.mrf.mxu0
        %v1384 = vadd.f32 0.0, %v1383
        %v1385 = vpop.f32.mrf.mxu0
        %v1386 = vadd.f32 0.0, %v1385
        %1387 = vmatprep.mubr.f32.mxu0 0.0
        %1388 = vmatmul.mubr.f32.gmra.mxu0 %v1113
        %v1389 = vpop.f32.mrf.mxu0
        %v1390 = vadd.f32 0.0, %v1389
        %v1391 = vpop.f32.mrf.mxu0
        %v1392 = vadd.f32 0.0, %v1391
        %1393 = vmatprep.mubr.f32.mxu0 0.0
        %1394 = vmatmul.mubr.f32.gmra.mxu0 %v1114
        %v1395 = vpop.f32.mrf.mxu0
        %v1396 = vadd.f32 0.0, %v1395
        %v1397 = vpop.f32.mrf.mxu0
        %v1398 = vadd.f32 0.0, %v1397
        %1399 = vmatprep.mubr.f32.mxu0 0.0
        %1400 = vmatmul.mubr.f32.gmra.mxu0 %v1115
        %v1401 = vpop.f32.mrf.mxu0
        %v1402 = vadd.f32 0.0, %v1401
        %v1403 = vpop.f32.mrf.mxu0
        %v1404 = vadd.f32 0.0, %v1403
        %1405 = vdwg.mxu0
        %v1406 = vadd.f32 %v894, %v1216
        %v1407 = vadd.f32 %v896, %v1218
        %v1408 = vadd.f32 %v900, %v1222
        %v1409 = vadd.f32 %v902, %v1224
        %v1410 = vadd.f32 %v906, %v1228
        %v1411 = vadd.f32 %v908, %v1230
        %v1412 = vadd.f32 %v912, %v1234
        %v1413 = vadd.f32 %v914, %v1236
        %v1414 = vadd.f32 %v918, %v1240
        %v1415 = vadd.f32 %v920, %v1242
        %v1416 = vadd.f32 %v924, %v1246
        %v1417 = vadd.f32 %v926, %v1248
        %v1418 = vadd.f32 %v930, %v1252
        %v1419 = vadd.f32 %v932, %v1254
        %v1420 = vadd.f32 %v936, %v1258
        %v1421 = vadd.f32 %v938, %v1260
        %v1422 = vadd.f32 %v942, %v1264
        %v1423 = vadd.f32 %v944, %v1266
        %v1424 = vadd.f32 %v948, %v1270
        %v1425 = vadd.f32 %v950, %v1272
        %v1426 = vadd.f32 %v954, %v1276
        %v1427 = vadd.f32 %v956, %v1278
        %v1428 = vadd.f32 %v960, %v1282
        %v1429 = vadd.f32 %v962, %v1284
        %v1430 = vadd.f32 %v966, %v1288
        %v1431 = vadd.f32 %v968, %v1290
        %v1432 = vadd.f32 %v972, %v1294
        %v1433 = vadd.f32 %v974, %v1296
        %v1434 = vadd.f32 %v978, %v1300
        %v1435 = vadd.f32 %v980, %v1302
        %v1436 = vadd.f32 %v984, %v1306
        %v1437 = vadd.f32 %v986, %v1308
        %v1438 = vadd.f32 %v990, %v1312
        %v1439 = vadd.f32 %v992, %v1314
        %v1440 = vadd.f32 %v996, %v1318
        %v1441 = vadd.f32 %v998, %v1320
        %v1442 = vadd.f32 %v1002, %v1324
        %v1443 = vadd.f32 %v1004, %v1326
        %v1444 = vadd.f32 %v1008, %v1330
        %v1445 = vadd.f32 %v1010, %v1332
        %v1446 = vadd.f32 %v1014, %v1336
        %v1447 = vadd.f32 %v1016, %v1338
        %v1448 = vadd.f32 %v1020, %v1342
        %v1449 = vadd.f32 %v1022, %v1344
        %v1450 = vadd.f32 %v1026, %v1348
        %v1451 = vadd.f32 %v1028, %v1350
        %v1452 = vadd.f32 %v1032, %v1354
        %v1453 = vadd.f32 %v1034, %v1356
        %v1454 = vadd.f32 %v1038, %v1360
        %v1455 = vadd.f32 %v1040, %v1362
        %v1456 = vadd.f32 %v1044, %v1366
        %v1457 = vadd.f32 %v1046, %v1368
        %v1458 = vadd.f32 %v1050, %v1372
        %v1459 = vadd.f32 %v1052, %v1374
        %v1460 = vadd.f32 %v1056, %v1378
        %v1461 = vadd.f32 %v1058, %v1380
        %v1462 = vadd.f32 %v1062, %v1384
        %v1463 = vadd.f32 %v1064, %v1386
        %v1464 = vadd.f32 %v1068, %v1390
        %v1465 = vadd.f32 %v1070, %v1392
        %v1466 = vadd.f32 %v1074, %v1396
        %v1467 = vadd.f32 %v1076, %v1398
        %v1468 = vadd.f32 %v1080, %v1402
        %v1469 = vadd.f32 %v1082, %v1404
        %v1470 = vld [vmem:[%s439 + $0x3] sm:$0xff]
        %v1471 = vld [vmem:[%s439 + $0xb] sm:$0xff]
        %v1472 = vld [vmem:[%s439 + $0x13] sm:$0xff]
        %v1473 = vld [vmem:[%s439 + $0x1b] sm:$0xff]
        %v1474 = vld [vmem:[%s439 + $0x23] sm:$0xff]
        %v1475 = vld [vmem:[%s439 + $0x2b] sm:$0xff]
        %v1476 = vld [vmem:[%s439 + $0x33] sm:$0xff]
        %v1477 = vld [vmem:[%s439 + $0x3b] sm:$0xff]
        %v1478 = vld [vmem:[%s439 + $0x43] sm:$0xff]
        %v1479 = vld [vmem:[%s439 + $0x4b] sm:$0xff]
        %v1480 = vld [vmem:[%s439 + $0x53] sm:$0xff]
        %v1481 = vld [vmem:[%s439 + $0x5b] sm:$0xff]
        %v1482 = vld [vmem:[%s439 + $0x63] sm:$0xff]
        %v1483 = vld [vmem:[%s439 + $0x6b] sm:$0xff]
        %v1484 = vld [vmem:[%s439 + $0x73] sm:$0xff]
        %v1485 = vld [vmem:[%s439 + $0x7b] sm:$0xff]
        %v1486 = vld [vmem:[%s439 + $0x83] sm:$0xff]
        %v1487 = vld [vmem:[%s439 + $0x8b] sm:$0xff]
        %v1488 = vld [vmem:[%s439 + $0x93] sm:$0xff]
        %v1489 = vld [vmem:[%s439 + $0x9b] sm:$0xff]
        %v1490 = vld [vmem:[%s439 + $0xa3] sm:$0xff]
        %v1491 = vld [vmem:[%s439 + $0xab] sm:$0xff]
        %v1492 = vld [vmem:[%s439 + $0xb3] sm:$0xff]
        %v1493 = vld [vmem:[%s439 + $0xbb] sm:$0xff]
        %v1494 = vld [vmem:[%s439 + $0xc3] sm:$0xff]
        %v1495 = vld [vmem:[%s439 + $0xcb] sm:$0xff]
        %v1496 = vld [vmem:[%s439 + $0xd3] sm:$0xff]
        %v1497 = vld [vmem:[%s439 + $0xdb] sm:$0xff]
        %v1498 = vld [vmem:[%s439 + $0xe3] sm:$0xff]
        %v1499 = vld [vmem:[%s439 + $0xeb] sm:$0xff]
        %v1500 = vld [vmem:[%s439 + $0xf3] sm:$0xff]
        %v1501 = vld [vmem:[%s439 + $0xfb] sm:$0xf]
        %s1502 = scalar_lea.vmem %s1, 768
        %v1503 = vld [vmem:[%s1502] sm:$0xff]
        %v1504 = vld [vmem:[%s1502 + $0x8] sm:$0xff]
        %v1505 = vld [vmem:[%s1502 + $0x10] sm:$0xff]
        %v1506 = vld [vmem:[%s1502 + $0x18] sm:$0xff]
        %v1507 = vld [vmem:[%s1502 + $0x20] sm:$0xff]
        %v1508 = vld [vmem:[%s1502 + $0x28] sm:$0xff]
        %v1509 = vld [vmem:[%s1502 + $0x30] sm:$0xff]
        %v1510 = vld [vmem:[%s1502 + $0x38] sm:$0xff]
        %v1511 = vld [vmem:[%s1502 + $0x40] sm:$0xff]
        %v1512 = vld [vmem:[%s1502 + $0x48] sm:$0xff]
        %v1513 = vld [vmem:[%s1502 + $0x50] sm:$0xff]
        %v1514 = vld [vmem:[%s1502 + $0x58] sm:$0xff]
        %v1515 = vld [vmem:[%s1502 + $0x60] sm:$0xff]
        %v1516 = vld [vmem:[%s1502 + $0x68] sm:$0xff]
        %v1517 = vld [vmem:[%s1502 + $0x70] sm:$0xff]
        %v1518 = vld [vmem:[%s1502 + $0x78] sm:$0xff]
        %v1519 = vld [vmem:[%s1502 + $0x80] sm:$0xff]
        %v1520 = vld [vmem:[%s1502 + $0x88] sm:$0xff]
        %v1521 = vld [vmem:[%s1502 + $0x90] sm:$0xff]
        %v1522 = vld [vmem:[%s1502 + $0x98] sm:$0xff]
        %v1523 = vld [vmem:[%s1502 + $0xa0] sm:$0xff]
        %v1524 = vld [vmem:[%s1502 + $0xa8] sm:$0xff]
        %v1525 = vld [vmem:[%s1502 + $0xb0] sm:$0xff]
        %v1526 = vld [vmem:[%s1502 + $0xb8] sm:$0xff]
        %v1527 = vld [vmem:[%s1502 + $0xc0] sm:$0xff]
        %v1528 = vld [vmem:[%s1502 + $0xc8] sm:$0xff]
        %v1529 = vld [vmem:[%s1502 + $0xd0] sm:$0xff]
        %v1530 = vld [vmem:[%s1502 + $0xd8] sm:$0xff]
        %v1531 = vld [vmem:[%s1502 + $0xe0] sm:$0xff]
        %v1532 = vld [vmem:[%s1502 + $0xe8] sm:$0xff]
        %v1533 = vld [vmem:[%s1502 + $0xf0] sm:$0xff]
        %v1534 = vld [vmem:[%s1502 + $0xf8] sm:$0xff]
        %1535 = vmatprep.subr.mxu0 %v1534
        %1536 = vmatpush1.msra.mxu0 %v1533
        %1537 = vmatprep.subr.mxu0 %v1532
        %1538 = vmatpush1.msra.mxu0 %v1531
        %1539 = vmatprep.subr.mxu0 %v1530
        %1540 = vmatpush1.msra.mxu0 %v1529
        %1541 = vmatprep.subr.mxu0 %v1528
        %1542 = vmatpush1.msra.mxu0 %v1527
        %1543 = vmatprep.subr.mxu0 %v1526
        %1544 = vmatpush1.msra.mxu0 %v1525
        %1545 = vmatprep.subr.mxu0 %v1524
        %1546 = vmatpush1.msra.mxu0 %v1523
        %1547 = vmatprep.subr.mxu0 %v1522
        %1548 = vmatpush1.msra.mxu0 %v1521
        %1549 = vmatprep.subr.mxu0 %v1520
        %1550 = vmatpush1.msra.mxu0 %v1519
        %1551 = vmatprep.subr.mxu0 %v1518
        %1552 = vmatpush1.msra.mxu0 %v1517
        %1553 = vmatprep.subr.mxu0 %v1516
        %1554 = vmatpush1.msra.mxu0 %v1515
        %1555 = vmatprep.subr.mxu0 %v1514
        %1556 = vmatpush1.msra.mxu0 %v1513
        %1557 = vmatprep.subr.mxu0 %v1512
        %1558 = vmatpush1.msra.mxu0 %v1511
        %1559 = vmatprep.subr.mxu0 %v1510
        %1560 = vmatpush1.msra.mxu0 %v1509
        %1561 = vmatprep.subr.mxu0 %v1508
        %1562 = vmatpush1.msra.mxu0 %v1507
        %1563 = vmatprep.subr.mxu0 %v1506
        %1564 = vmatpush1.msra.mxu0 %v1505
        %1565 = vmatprep.subr.mxu0 %v1504
        %1566 = vmatpush1.msra.mxu0 %v1503
        %1567 = vmatprep.subr.mxu0 0.0
        %1568 = vmatpush2.msra.mxu0 0.0
        %1569 = vmatprep.subr.mxu0 0.0
        %1570 = vmatpush2.msra.mxu0 0.0
        %1571 = vmatprep.subr.mxu0 0.0
        %1572 = vmatpush2.msra.mxu0 0.0
        %1573 = vmatprep.subr.mxu0 0.0
        %1574 = vmatpush2.msra.mxu0 0.0
        %1575 = vmatprep.subr.mxu0 0.0
        %1576 = vmatpush2.msra.mxu0 0.0
        %1577 = vmatprep.subr.mxu0 0.0
        %1578 = vmatpush2.msra.mxu0 0.0
        %1579 = vmatprep.subr.mxu0 0.0
        %1580 = vmatpush2.msra.mxu0 0.0
        %1581 = vmatprep.subr.mxu0 0.0
        %1582 = vmatpush2.msra.mxu0 0.0
        %1583 = vmatprep.subr.mxu0 0.0
        %1584 = vmatpush2.msra.mxu0 0.0
        %1585 = vmatprep.subr.mxu0 0.0
        %1586 = vmatpush2.msra.mxu0 0.0
        %1587 = vmatprep.subr.mxu0 0.0
        %1588 = vmatpush2.msra.mxu0 0.0
        %1589 = vmatprep.subr.mxu0 0.0
        %1590 = vmatpush2.msra.mxu0 0.0
        %1591 = vmatprep.subr.mxu0 0.0
        %1592 = vmatpush2.msra.mxu0 0.0
        %1593 = vmatprep.subr.mxu0 0.0
        %1594 = vmatpush2.msra.mxu0 0.0
        %1595 = vmatprep.subr.mxu0 0.0
        %1596 = vmatpush2.msra.mxu0 0.0
        %1597 = vmatprep.subr.mxu0 0.0
        %1598 = vmatpush2.msra.mxu0 0.0
        %1599 = vmatprep.mubr.f32.mxu0 0.0
        %1600 = vmatmul.mubr.f32.gmra.mxu0 %v1470
        %v1601 = vpop.f32.mrf.mxu0
        %v1602 = vadd.f32 0.0, %v1601
        %v1603 = vpop.f32.mrf.mxu0
        %v1604 = vadd.f32 0.0, %v1603
        %1605 = vmatprep.mubr.f32.mxu0 0.0
        %1606 = vmatmul.mubr.f32.gmra.mxu0 %v1471
        %v1607 = vpop.f32.mrf.mxu0
        %v1608 = vadd.f32 0.0, %v1607
        %v1609 = vpop.f32.mrf.mxu0
        %v1610 = vadd.f32 0.0, %v1609
        %1611 = vmatprep.mubr.f32.mxu0 0.0
        %1612 = vmatmul.mubr.f32.gmra.mxu0 %v1472
        %v1613 = vpop.f32.mrf.mxu0
        %v1614 = vadd.f32 0.0, %v1613
        %v1615 = vpop.f32.mrf.mxu0
        %v1616 = vadd.f32 0.0, %v1615
        %1617 = vmatprep.mubr.f32.mxu0 0.0
        %1618 = vmatmul.mubr.f32.gmra.mxu0 %v1473
        %v1619 = vpop.f32.mrf.mxu0
        %v1620 = vadd.f32 0.0, %v1619
        %v1621 = vpop.f32.mrf.mxu0
        %v1622 = vadd.f32 0.0, %v1621
        %1623 = vmatprep.mubr.f32.mxu0 0.0
        %1624 = vmatmul.mubr.f32.gmra.mxu0 %v1474
        %v1625 = vpop.f32.mrf.mxu0
        %v1626 = vadd.f32 0.0, %v1625
        %v1627 = vpop.f32.mrf.mxu0
        %v1628 = vadd.f32 0.0, %v1627
        %1629 = vmatprep.mubr.f32.mxu0 0.0
        %1630 = vmatmul.mubr.f32.gmra.mxu0 %v1475
        %v1631 = vpop.f32.mrf.mxu0
        %v1632 = vadd.f32 0.0, %v1631
        %v1633 = vpop.f32.mrf.mxu0
        %v1634 = vadd.f32 0.0, %v1633
        %1635 = vmatprep.mubr.f32.mxu0 0.0
        %1636 = vmatmul.mubr.f32.gmra.mxu0 %v1476
        %v1637 = vpop.f32.mrf.mxu0
        %v1638 = vadd.f32 0.0, %v1637
        %v1639 = vpop.f32.mrf.mxu0
        %v1640 = vadd.f32 0.0, %v1639
        %1641 = vmatprep.mubr.f32.mxu0 0.0
        %1642 = vmatmul.mubr.f32.gmra.mxu0 %v1477
        %v1643 = vpop.f32.mrf.mxu0
        %v1644 = vadd.f32 0.0, %v1643
        %v1645 = vpop.f32.mrf.mxu0
        %v1646 = vadd.f32 0.0, %v1645
        %1647 = vmatprep.mubr.f32.mxu0 0.0
        %1648 = vmatmul.mubr.f32.gmra.mxu0 %v1478
        %v1649 = vpop.f32.mrf.mxu0
        %v1650 = vadd.f32 0.0, %v1649
        %v1651 = vpop.f32.mrf.mxu0
        %v1652 = vadd.f32 0.0, %v1651
        %1653 = vmatprep.mubr.f32.mxu0 0.0
        %1654 = vmatmul.mubr.f32.gmra.mxu0 %v1479
        %v1655 = vpop.f32.mrf.mxu0
        %v1656 = vadd.f32 0.0, %v1655
        %v1657 = vpop.f32.mrf.mxu0
        %v1658 = vadd.f32 0.0, %v1657
        %1659 = vmatprep.mubr.f32.mxu0 0.0
        %1660 = vmatmul.mubr.f32.gmra.mxu0 %v1480
        %v1661 = vpop.f32.mrf.mxu0
        %v1662 = vadd.f32 0.0, %v1661
        %v1663 = vpop.f32.mrf.mxu0
        %v1664 = vadd.f32 0.0, %v1663
        %1665 = vmatprep.mubr.f32.mxu0 0.0
        %1666 = vmatmul.mubr.f32.gmra.mxu0 %v1481
        %v1667 = vpop.f32.mrf.mxu0
        %v1668 = vadd.f32 0.0, %v1667
        %v1669 = vpop.f32.mrf.mxu0
        %v1670 = vadd.f32 0.0, %v1669
        %1671 = vmatprep.mubr.f32.mxu0 0.0
        %1672 = vmatmul.mubr.f32.gmra.mxu0 %v1482
        %v1673 = vpop.f32.mrf.mxu0
        %v1674 = vadd.f32 0.0, %v1673
        %v1675 = vpop.f32.mrf.mxu0
        %v1676 = vadd.f32 0.0, %v1675
        %1677 = vmatprep.mubr.f32.mxu0 0.0
        %1678 = vmatmul.mubr.f32.gmra.mxu0 %v1483
        %v1679 = vpop.f32.mrf.mxu0
        %v1680 = vadd.f32 0.0, %v1679
        %v1681 = vpop.f32.mrf.mxu0
        %v1682 = vadd.f32 0.0, %v1681
        %1683 = vmatprep.mubr.f32.mxu0 0.0
        %1684 = vmatmul.mubr.f32.gmra.mxu0 %v1484
        %v1685 = vpop.f32.mrf.mxu0
        %v1686 = vadd.f32 0.0, %v1685
        %v1687 = vpop.f32.mrf.mxu0
        %v1688 = vadd.f32 0.0, %v1687
        %1689 = vmatprep.mubr.f32.mxu0 0.0
        %1690 = vmatmul.mubr.f32.gmra.mxu0 %v1485
        %v1691 = vpop.f32.mrf.mxu0
        %v1692 = vadd.f32 0.0, %v1691
        %v1693 = vpop.f32.mrf.mxu0
        %v1694 = vadd.f32 0.0, %v1693
        %1695 = vmatprep.mubr.f32.mxu0 0.0
        %1696 = vmatmul.mubr.f32.gmra.mxu0 %v1486
        %v1697 = vpop.f32.mrf.mxu0
        %v1698 = vadd.f32 0.0, %v1697
        %v1699 = vpop.f32.mrf.mxu0
        %v1700 = vadd.f32 0.0, %v1699
        %1701 = vmatprep.mubr.f32.mxu0 0.0
        %1702 = vmatmul.mubr.f32.gmra.mxu0 %v1487
        %v1703 = vpop.f32.mrf.mxu0
        %v1704 = vadd.f32 0.0, %v1703
        %v1705 = vpop.f32.mrf.mxu0
        %v1706 = vadd.f32 0.0, %v1705
        %1707 = vmatprep.mubr.f32.mxu0 0.0
        %1708 = vmatmul.mubr.f32.gmra.mxu0 %v1488
        %v1709 = vpop.f32.mrf.mxu0
        %v1710 = vadd.f32 0.0, %v1709
        %v1711 = vpop.f32.mrf.mxu0
        %v1712 = vadd.f32 0.0, %v1711
        %1713 = vmatprep.mubr.f32.mxu0 0.0
        %1714 = vmatmul.mubr.f32.gmra.mxu0 %v1489
        %v1715 = vpop.f32.mrf.mxu0
        %v1716 = vadd.f32 0.0, %v1715
        %v1717 = vpop.f32.mrf.mxu0
        %v1718 = vadd.f32 0.0, %v1717
        %1719 = vmatprep.mubr.f32.mxu0 0.0
        %1720 = vmatmul.mubr.f32.gmra.mxu0 %v1490
        %v1721 = vpop.f32.mrf.mxu0
        %v1722 = vadd.f32 0.0, %v1721
        %v1723 = vpop.f32.mrf.mxu0
        %v1724 = vadd.f32 0.0, %v1723
        %1725 = vmatprep.mubr.f32.mxu0 0.0
        %1726 = vmatmul.mubr.f32.gmra.mxu0 %v1491
        %v1727 = vpop.f32.mrf.mxu0
        %v1728 = vadd.f32 0.0, %v1727
        %v1729 = vpop.f32.mrf.mxu0
        %v1730 = vadd.f32 0.0, %v1729
        %1731 = vmatprep.mubr.f32.mxu0 0.0
        %1732 = vmatmul.mubr.f32.gmra.mxu0 %v1492
        %v1733 = vpop.f32.mrf.mxu0
        %v1734 = vadd.f32 0.0, %v1733
        %v1735 = vpop.f32.mrf.mxu0
        %v1736 = vadd.f32 0.0, %v1735
        %1737 = vmatprep.mubr.f32.mxu0 0.0
        %1738 = vmatmul.mubr.f32.gmra.mxu0 %v1493
        %v1739 = vpop.f32.mrf.mxu0
        %v1740 = vadd.f32 0.0, %v1739
        %v1741 = vpop.f32.mrf.mxu0
        %v1742 = vadd.f32 0.0, %v1741
        %1743 = vmatprep.mubr.f32.mxu0 0.0
        %1744 = vmatmul.mubr.f32.gmra.mxu0 %v1494
        %v1745 = vpop.f32.mrf.mxu0
        %v1746 = vadd.f32 0.0, %v1745
        %v1747 = vpop.f32.mrf.mxu0
        %v1748 = vadd.f32 0.0, %v1747
        %1749 = vmatprep.mubr.f32.mxu0 0.0
        %1750 = vmatmul.mubr.f32.gmra.mxu0 %v1495
        %v1751 = vpop.f32.mrf.mxu0
        %v1752 = vadd.f32 0.0, %v1751
        %v1753 = vpop.f32.mrf.mxu0
        %v1754 = vadd.f32 0.0, %v1753
        %1755 = vmatprep.mubr.f32.mxu0 0.0
        %1756 = vmatmul.mubr.f32.gmra.mxu0 %v1496
        %v1757 = vpop.f32.mrf.mxu0
        %v1758 = vadd.f32 0.0, %v1757
        %v1759 = vpop.f32.mrf.mxu0
        %v1760 = vadd.f32 0.0, %v1759
        %1761 = vmatprep.mubr.f32.mxu0 0.0
        %1762 = vmatmul.mubr.f32.gmra.mxu0 %v1497
        %v1763 = vpop.f32.mrf.mxu0
        %v1764 = vadd.f32 0.0, %v1763
        %v1765 = vpop.f32.mrf.mxu0
        %v1766 = vadd.f32 0.0, %v1765
        %1767 = vmatprep.mubr.f32.mxu0 0.0
        %1768 = vmatmul.mubr.f32.gmra.mxu0 %v1498
        %v1769 = vpop.f32.mrf.mxu0
        %v1770 = vadd.f32 0.0, %v1769
        %v1771 = vpop.f32.mrf.mxu0
        %v1772 = vadd.f32 0.0, %v1771
        %1773 = vmatprep.mubr.f32.mxu0 0.0
        %1774 = vmatmul.mubr.f32.gmra.mxu0 %v1499
        %v1775 = vpop.f32.mrf.mxu0
        %v1776 = vadd.f32 0.0, %v1775
        %v1777 = vpop.f32.mrf.mxu0
        %v1778 = vadd.f32 0.0, %v1777
        %1779 = vmatprep.mubr.f32.mxu0 0.0
        %1780 = vmatmul.mubr.f32.gmra.mxu0 %v1500
        %v1781 = vpop.f32.mrf.mxu0
        %v1782 = vadd.f32 0.0, %v1781
        %v1783 = vpop.f32.mrf.mxu0
        %v1784 = vadd.f32 0.0, %v1783
        %1785 = vmatprep.mubr.f32.mxu0 0.0
        %1786 = vmatmul.mubr.f32.gmra.mxu0 %v1501
        %v1787 = vpop.f32.mrf.mxu0
        %v1788 = vadd.f32 0.0, %v1787
        %v1789 = vpop.f32.mrf.mxu0
        %v1790 = vadd.f32 0.0, %v1789
        %1791 = vdwg.mxu0
        %v1792 = vadd.f32 %v1406, %v1602
        %v1793 = vadd.f32 %v1407, %v1604
        %v1794 = vadd.f32 %v1408, %v1608
        %v1795 = vadd.f32 %v1409, %v1610
        %v1796 = vadd.f32 %v1410, %v1614
        %v1797 = vadd.f32 %v1411, %v1616
        %v1798 = vadd.f32 %v1412, %v1620
        %v1799 = vadd.f32 %v1413, %v1622
        %v1800 = vadd.f32 %v1414, %v1626
        %v1801 = vadd.f32 %v1415, %v1628
        %v1802 = vadd.f32 %v1416, %v1632
        %v1803 = vadd.f32 %v1417, %v1634
        %v1804 = vadd.f32 %v1418, %v1638
        %v1805 = vadd.f32 %v1419, %v1640
        %v1806 = vadd.f32 %v1420, %v1644
        %v1807 = vadd.f32 %v1421, %v1646
        %v1808 = vadd.f32 %v1422, %v1650
        %v1809 = vadd.f32 %v1423, %v1652
        %v1810 = vadd.f32 %v1424, %v1656
        %v1811 = vadd.f32 %v1425, %v1658
        %v1812 = vadd.f32 %v1426, %v1662
        %v1813 = vadd.f32 %v1427, %v1664
        %v1814 = vadd.f32 %v1428, %v1668
        %v1815 = vadd.f32 %v1429, %v1670
        %v1816 = vadd.f32 %v1430, %v1674
        %v1817 = vadd.f32 %v1431, %v1676
        %v1818 = vadd.f32 %v1432, %v1680
        %v1819 = vadd.f32 %v1433, %v1682
        %v1820 = vadd.f32 %v1434, %v1686
        %v1821 = vadd.f32 %v1435, %v1688
        %v1822 = vadd.f32 %v1436, %v1692
        %v1823 = vadd.f32 %v1437, %v1694
        %v1824 = vadd.f32 %v1438, %v1698
        %v1825 = vadd.f32 %v1439, %v1700
        %v1826 = vadd.f32 %v1440, %v1704
        %v1827 = vadd.f32 %v1441, %v1706
        %v1828 = vadd.f32 %v1442, %v1710
        %v1829 = vadd.f32 %v1443, %v1712
        %v1830 = vadd.f32 %v1444, %v1716
        %v1831 = vadd.f32 %v1445, %v1718
        %v1832 = vadd.f32 %v1446, %v1722
        %v1833 = vadd.f32 %v1447, %v1724
        %v1834 = vadd.f32 %v1448, %v1728
        %v1835 = vadd.f32 %v1449, %v1730
        %v1836 = vadd.f32 %v1450, %v1734
        %v1837 = vadd.f32 %v1451, %v1736
        %v1838 = vadd.f32 %v1452, %v1740
        %v1839 = vadd.f32 %v1453, %v1742
        %v1840 = vadd.f32 %v1454, %v1746
        %v1841 = vadd.f32 %v1455, %v1748
        %v1842 = vadd.f32 %v1456, %v1752
        %v1843 = vadd.f32 %v1457, %v1754
        %v1844 = vadd.f32 %v1458, %v1758
        %v1845 = vadd.f32 %v1459, %v1760
        %v1846 = vadd.f32 %v1460, %v1764
        %v1847 = vadd.f32 %v1461, %v1766
        %v1848 = vadd.f32 %v1462, %v1770
        %v1849 = vadd.f32 %v1463, %v1772
        %v1850 = vadd.f32 %v1464, %v1776
        %v1851 = vadd.f32 %v1465, %v1778
        %v1852 = vadd.f32 %v1466, %v1782
        %v1853 = vadd.f32 %v1467, %v1784
        %v1854 = vadd.f32 %v1468, %v1788
        %v1855 = vadd.f32 %v1469, %v1790
        %v1856 = vld [vmem:[%s439 + $0x4] sm:$0xff]
        %v1857 = vld [vmem:[%s439 + $0xc] sm:$0xff]
        %v1858 = vld [vmem:[%s439 + $0x14] sm:$0xff]
        %v1859 = vld [vmem:[%s439 + $0x1c] sm:$0xff]
        %v1860 = vld [vmem:[%s439 + $0x24] sm:$0xff]
        %v1861 = vld [vmem:[%s439 + $0x2c] sm:$0xff]
        %v1862 = vld [vmem:[%s439 + $0x34] sm:$0xff]
        %v1863 = vld [vmem:[%s439 + $0x3c] sm:$0xff]
        %v1864 = vld [vmem:[%s439 + $0x44] sm:$0xff]
        %v1865 = vld [vmem:[%s439 + $0x4c] sm:$0xff]
        %v1866 = vld [vmem:[%s439 + $0x54] sm:$0xff]
        %v1867 = vld [vmem:[%s439 + $0x5c] sm:$0xff]
        %v1868 = vld [vmem:[%s439 + $0x64] sm:$0xff]
        %v1869 = vld [vmem:[%s439 + $0x6c] sm:$0xff]
        %v1870 = vld [vmem:[%s439 + $0x74] sm:$0xff]
        %v1871 = vld [vmem:[%s439 + $0x7c] sm:$0xff]
        %v1872 = vld [vmem:[%s439 + $0x84] sm:$0xff]
        %v1873 = vld [vmem:[%s439 + $0x8c] sm:$0xff]
        %v1874 = vld [vmem:[%s439 + $0x94] sm:$0xff]
        %v1875 = vld [vmem:[%s439 + $0x9c] sm:$0xff]
        %v1876 = vld [vmem:[%s439 + $0xa4] sm:$0xff]
        %v1877 = vld [vmem:[%s439 + $0xac] sm:$0xff]
        %v1878 = vld [vmem:[%s439 + $0xb4] sm:$0xff]
        %v1879 = vld [vmem:[%s439 + $0xbc] sm:$0xff]
        %v1880 = vld [vmem:[%s439 + $0xc4] sm:$0xff]
        %v1881 = vld [vmem:[%s439 + $0xcc] sm:$0xff]
        %v1882 = vld [vmem:[%s439 + $0xd4] sm:$0xff]
        %v1883 = vld [vmem:[%s439 + $0xdc] sm:$0xff]
        %v1884 = vld [vmem:[%s439 + $0xe4] sm:$0xff]
        %v1885 = vld [vmem:[%s439 + $0xec] sm:$0xff]
        %v1886 = vld [vmem:[%s439 + $0xf4] sm:$0xff]
        %v1887 = vld [vmem:[%s439 + $0xfc] sm:$0xf]
        %s1888 = scalar_lea.vmem %s1, 1024
        %v1889 = vld [vmem:[%s1888] sm:$0xff]
        %v1890 = vld [vmem:[%s1888 + $0x8] sm:$0xff]
        %v1891 = vld [vmem:[%s1888 + $0x10] sm:$0xff]
        %v1892 = vld [vmem:[%s1888 + $0x18] sm:$0xff]
        %v1893 = vld [vmem:[%s1888 + $0x20] sm:$0xff]
        %v1894 = vld [vmem:[%s1888 + $0x28] sm:$0xff]
        %v1895 = vld [vmem:[%s1888 + $0x30] sm:$0xff]
        %v1896 = vld [vmem:[%s1888 + $0x38] sm:$0xff]
        %v1897 = vld [vmem:[%s1888 + $0x40] sm:$0xff]
        %v1898 = vld [vmem:[%s1888 + $0x48] sm:$0xff]
        %v1899 = vld [vmem:[%s1888 + $0x50] sm:$0xff]
        %v1900 = vld [vmem:[%s1888 + $0x58] sm:$0xff]
        %v1901 = vld [vmem:[%s1888 + $0x60] sm:$0xff]
        %v1902 = vld [vmem:[%s1888 + $0x68] sm:$0xff]
        %v1903 = vld [vmem:[%s1888 + $0x70] sm:$0xff]
        %v1904 = vld [vmem:[%s1888 + $0x78] sm:$0xff]
        %v1905 = vld [vmem:[%s1888 + $0x80] sm:$0xff]
        %v1906 = vld [vmem:[%s1888 + $0x88] sm:$0xff]
        %v1907 = vld [vmem:[%s1888 + $0x90] sm:$0xff]
        %v1908 = vld [vmem:[%s1888 + $0x98] sm:$0xff]
        %v1909 = vld [vmem:[%s1888 + $0xa0] sm:$0xff]
        %v1910 = vld [vmem:[%s1888 + $0xa8] sm:$0xff]
        %v1911 = vld [vmem:[%s1888 + $0xb0] sm:$0xff]
        %v1912 = vld [vmem:[%s1888 + $0xb8] sm:$0xff]
        %v1913 = vld [vmem:[%s1888 + $0xc0] sm:$0xff]
        %v1914 = vld [vmem:[%s1888 + $0xc8] sm:$0xff]
        %v1915 = vld [vmem:[%s1888 + $0xd0] sm:$0xff]
        %v1916 = vld [vmem:[%s1888 + $0xd8] sm:$0xff]
        %v1917 = vld [vmem:[%s1888 + $0xe0] sm:$0xff]
        %v1918 = vld [vmem:[%s1888 + $0xe8] sm:$0xff]
        %v1919 = vld [vmem:[%s1888 + $0xf0] sm:$0xff]
        %v1920 = vld [vmem:[%s1888 + $0xf8] sm:$0xff]
        %1921 = vmatprep.subr.mxu0 %v1920
        %1922 = vmatpush1.msra.mxu0 %v1919
        %1923 = vmatprep.subr.mxu0 %v1918
        %1924 = vmatpush1.msra.mxu0 %v1917
        %1925 = vmatprep.subr.mxu0 %v1916
        %1926 = vmatpush1.msra.mxu0 %v1915
        %1927 = vmatprep.subr.mxu0 %v1914
        %1928 = vmatpush1.msra.mxu0 %v1913
        %1929 = vmatprep.subr.mxu0 %v1912
        %1930 = vmatpush1.msra.mxu0 %v1911
        %1931 = vmatprep.subr.mxu0 %v1910
        %1932 = vmatpush1.msra.mxu0 %v1909
        %1933 = vmatprep.subr.mxu0 %v1908
        %1934 = vmatpush1.msra.mxu0 %v1907
        %1935 = vmatprep.subr.mxu0 %v1906
        %1936 = vmatpush1.msra.mxu0 %v1905
        %1937 = vmatprep.subr.mxu0 %v1904
        %1938 = vmatpush1.msra.mxu0 %v1903
        %1939 = vmatprep.subr.mxu0 %v1902
        %1940 = vmatpush1.msra.mxu0 %v1901
        %1941 = vmatprep.subr.mxu0 %v1900
        %1942 = vmatpush1.msra.mxu0 %v1899
        %1943 = vmatprep.subr.mxu0 %v1898
        %1944 = vmatpush1.msra.mxu0 %v1897
        %1945 = vmatprep.subr.mxu0 %v1896
        %1946 = vmatpush1.msra.mxu0 %v1895
        %1947 = vmatprep.subr.mxu0 %v1894
        %1948 = vmatpush1.msra.mxu0 %v1893
        %1949 = vmatprep.subr.mxu0 %v1892
        %1950 = vmatpush1.msra.mxu0 %v1891
        %1951 = vmatprep.subr.mxu0 %v1890
        %1952 = vmatpush1.msra.mxu0 %v1889
        %1953 = vmatprep.subr.mxu0 0.0
        %1954 = vmatpush2.msra.mxu0 0.0
        %1955 = vmatprep.subr.mxu0 0.0
        %1956 = vmatpush2.msra.mxu0 0.0
        %1957 = vmatprep.subr.mxu0 0.0
        %1958 = vmatpush2.msra.mxu0 0.0
        %1959 = vmatprep.subr.mxu0 0.0
        %1960 = vmatpush2.msra.mxu0 0.0
        %1961 = vmatprep.subr.mxu0 0.0
        %1962 = vmatpush2.msra.mxu0 0.0
        %1963 = vmatprep.subr.mxu0 0.0
        %1964 = vmatpush2.msra.mxu0 0.0
        %1965 = vmatprep.subr.mxu0 0.0
        %1966 = vmatpush2.msra.mxu0 0.0
        %1967 = vmatprep.subr.mxu0 0.0
        %1968 = vmatpush2.msra.mxu0 0.0
        %1969 = vmatprep.subr.mxu0 0.0
        %1970 = vmatpush2.msra.mxu0 0.0
        %1971 = vmatprep.subr.mxu0 0.0
        %1972 = vmatpush2.msra.mxu0 0.0
        %1973 = vmatprep.subr.mxu0 0.0
        %1974 = vmatpush2.msra.mxu0 0.0
        %1975 = vmatprep.subr.mxu0 0.0
        %1976 = vmatpush2.msra.mxu0 0.0
        %1977 = vmatprep.subr.mxu0 0.0
        %1978 = vmatpush2.msra.mxu0 0.0
        %1979 = vmatprep.subr.mxu0 0.0
        %1980 = vmatpush2.msra.mxu0 0.0
        %1981 = vmatprep.subr.mxu0 0.0
        %1982 = vmatpush2.msra.mxu0 0.0
        %1983 = vmatprep.subr.mxu0 0.0
        %1984 = vmatpush2.msra.mxu0 0.0
        %1985 = vmatprep.mubr.f32.mxu0 0.0
        %1986 = vmatmul.mubr.f32.gmra.mxu0 %v1856
        %v1987 = vpop.f32.mrf.mxu0
        %v1988 = vadd.f32 0.0, %v1987
        %v1989 = vpop.f32.mrf.mxu0
        %v1990 = vadd.f32 0.0, %v1989
        %1991 = vmatprep.mubr.f32.mxu0 0.0
        %1992 = vmatmul.mubr.f32.gmra.mxu0 %v1857
        %v1993 = vpop.f32.mrf.mxu0
        %v1994 = vadd.f32 0.0, %v1993
        %v1995 = vpop.f32.mrf.mxu0
        %v1996 = vadd.f32 0.0, %v1995
        %1997 = vmatprep.mubr.f32.mxu0 0.0
        %1998 = vmatmul.mubr.f32.gmra.mxu0 %v1858
        %v1999 = vpop.f32.mrf.mxu0
        %v2000 = vadd.f32 0.0, %v1999
        %v2001 = vpop.f32.mrf.mxu0
        %v2002 = vadd.f32 0.0, %v2001
        %2003 = vmatprep.mubr.f32.mxu0 0.0
        %2004 = vmatmul.mubr.f32.gmra.mxu0 %v1859
        %v2005 = vpop.f32.mrf.mxu0
        %v2006 = vadd.f32 0.0, %v2005
        %v2007 = vpop.f32.mrf.mxu0
        %v2008 = vadd.f32 0.0, %v2007
        %2009 = vmatprep.mubr.f32.mxu0 0.0
        %2010 = vmatmul.mubr.f32.gmra.mxu0 %v1860
        %v2011 = vpop.f32.mrf.mxu0
        %v2012 = vadd.f32 0.0, %v2011
        %v2013 = vpop.f32.mrf.mxu0
        %v2014 = vadd.f32 0.0, %v2013
        %2015 = vmatprep.mubr.f32.mxu0 0.0
        %2016 = vmatmul.mubr.f32.gmra.mxu0 %v1861
        %v2017 = vpop.f32.mrf.mxu0
        %v2018 = vadd.f32 0.0, %v2017
        %v2019 = vpop.f32.mrf.mxu0
        %v2020 = vadd.f32 0.0, %v2019
        %2021 = vmatprep.mubr.f32.mxu0 0.0
        %2022 = vmatmul.mubr.f32.gmra.mxu0 %v1862
        %v2023 = vpop.f32.mrf.mxu0
        %v2024 = vadd.f32 0.0, %v2023
        %v2025 = vpop.f32.mrf.mxu0
        %v2026 = vadd.f32 0.0, %v2025
        %2027 = vmatprep.mubr.f32.mxu0 0.0
        %2028 = vmatmul.mubr.f32.gmra.mxu0 %v1863
        %v2029 = vpop.f32.mrf.mxu0
        %v2030 = vadd.f32 0.0, %v2029
        %v2031 = vpop.f32.mrf.mxu0
        %v2032 = vadd.f32 0.0, %v2031
        %2033 = vmatprep.mubr.f32.mxu0 0.0
        %2034 = vmatmul.mubr.f32.gmra.mxu0 %v1864
        %v2035 = vpop.f32.mrf.mxu0
        %v2036 = vadd.f32 0.0, %v2035
        %v2037 = vpop.f32.mrf.mxu0
        %v2038 = vadd.f32 0.0, %v2037
        %2039 = vmatprep.mubr.f32.mxu0 0.0
        %2040 = vmatmul.mubr.f32.gmra.mxu0 %v1865
        %v2041 = vpop.f32.mrf.mxu0
        %v2042 = vadd.f32 0.0, %v2041
        %v2043 = vpop.f32.mrf.mxu0
        %v2044 = vadd.f32 0.0, %v2043
        %2045 = vmatprep.mubr.f32.mxu0 0.0
        %2046 = vmatmul.mubr.f32.gmra.mxu0 %v1866
        %v2047 = vpop.f32.mrf.mxu0
        %v2048 = vadd.f32 0.0, %v2047
        %v2049 = vpop.f32.mrf.mxu0
        %v2050 = vadd.f32 0.0, %v2049
        %2051 = vmatprep.mubr.f32.mxu0 0.0
        %2052 = vmatmul.mubr.f32.gmra.mxu0 %v1867
        %v2053 = vpop.f32.mrf.mxu0
        %v2054 = vadd.f32 0.0, %v2053
        %v2055 = vpop.f32.mrf.mxu0
        %v2056 = vadd.f32 0.0, %v2055
        %2057 = vmatprep.mubr.f32.mxu0 0.0
        %2058 = vmatmul.mubr.f32.gmra.mxu0 %v1868
        %v2059 = vpop.f32.mrf.mxu0
        %v2060 = vadd.f32 0.0, %v2059
        %v2061 = vpop.f32.mrf.mxu0
        %v2062 = vadd.f32 0.0, %v2061
        %2063 = vmatprep.mubr.f32.mxu0 0.0
        %2064 = vmatmul.mubr.f32.gmra.mxu0 %v1869
        %v2065 = vpop.f32.mrf.mxu0
        %v2066 = vadd.f32 0.0, %v2065
        %v2067 = vpop.f32.mrf.mxu0
        %v2068 = vadd.f32 0.0, %v2067
        %2069 = vmatprep.mubr.f32.mxu0 0.0
        %2070 = vmatmul.mubr.f32.gmra.mxu0 %v1870
        %v2071 = vpop.f32.mrf.mxu0
        %v2072 = vadd.f32 0.0, %v2071
        %v2073 = vpop.f32.mrf.mxu0
        %v2074 = vadd.f32 0.0, %v2073
        %2075 = vmatprep.mubr.f32.mxu0 0.0
        %2076 = vmatmul.mubr.f32.gmra.mxu0 %v1871
        %v2077 = vpop.f32.mrf.mxu0
        %v2078 = vadd.f32 0.0, %v2077
        %v2079 = vpop.f32.mrf.mxu0
        %v2080 = vadd.f32 0.0, %v2079
        %2081 = vmatprep.mubr.f32.mxu0 0.0
        %2082 = vmatmul.mubr.f32.gmra.mxu0 %v1872
        %v2083 = vpop.f32.mrf.mxu0
        %v2084 = vadd.f32 0.0, %v2083
        %v2085 = vpop.f32.mrf.mxu0
        %v2086 = vadd.f32 0.0, %v2085
        %2087 = vmatprep.mubr.f32.mxu0 0.0
        %2088 = vmatmul.mubr.f32.gmra.mxu0 %v1873
        %v2089 = vpop.f32.mrf.mxu0
        %v2090 = vadd.f32 0.0, %v2089
        %v2091 = vpop.f32.mrf.mxu0
        %v2092 = vadd.f32 0.0, %v2091
        %2093 = vmatprep.mubr.f32.mxu0 0.0
        %2094 = vmatmul.mubr.f32.gmra.mxu0 %v1874
        %v2095 = vpop.f32.mrf.mxu0
        %v2096 = vadd.f32 0.0, %v2095
        %v2097 = vpop.f32.mrf.mxu0
        %v2098 = vadd.f32 0.0, %v2097
        %2099 = vmatprep.mubr.f32.mxu0 0.0
        %2100 = vmatmul.mubr.f32.gmra.mxu0 %v1875
        %v2101 = vpop.f32.mrf.mxu0
        %v2102 = vadd.f32 0.0, %v2101
        %v2103 = vpop.f32.mrf.mxu0
        %v2104 = vadd.f32 0.0, %v2103
        %2105 = vmatprep.mubr.f32.mxu0 0.0
        %2106 = vmatmul.mubr.f32.gmra.mxu0 %v1876
        %v2107 = vpop.f32.mrf.mxu0
        %v2108 = vadd.f32 0.0, %v2107
        %v2109 = vpop.f32.mrf.mxu0
        %v2110 = vadd.f32 0.0, %v2109
        %2111 = vmatprep.mubr.f32.mxu0 0.0
        %2112 = vmatmul.mubr.f32.gmra.mxu0 %v1877
        %v2113 = vpop.f32.mrf.mxu0
        %v2114 = vadd.f32 0.0, %v2113
        %v2115 = vpop.f32.mrf.mxu0
        %v2116 = vadd.f32 0.0, %v2115
        %2117 = vmatprep.mubr.f32.mxu0 0.0
        %2118 = vmatmul.mubr.f32.gmra.mxu0 %v1878
        %v2119 = vpop.f32.mrf.mxu0
        %v2120 = vadd.f32 0.0, %v2119
        %v2121 = vpop.f32.mrf.mxu0
        %v2122 = vadd.f32 0.0, %v2121
        %2123 = vmatprep.mubr.f32.mxu0 0.0
        %2124 = vmatmul.mubr.f32.gmra.mxu0 %v1879
        %v2125 = vpop.f32.mrf.mxu0
        %v2126 = vadd.f32 0.0, %v2125
        %v2127 = vpop.f32.mrf.mxu0
        %v2128 = vadd.f32 0.0, %v2127
        %2129 = vmatprep.mubr.f32.mxu0 0.0
        %2130 = vmatmul.mubr.f32.gmra.mxu0 %v1880
        %v2131 = vpop.f32.mrf.mxu0
        %v2132 = vadd.f32 0.0, %v2131
        %v2133 = vpop.f32.mrf.mxu0
        %v2134 = vadd.f32 0.0, %v2133
        %2135 = vmatprep.mubr.f32.mxu0 0.0
        %2136 = vmatmul.mubr.f32.gmra.mxu0 %v1881
        %v2137 = vpop.f32.mrf.mxu0
        %v2138 = vadd.f32 0.0, %v2137
        %v2139 = vpop.f32.mrf.mxu0
        %v2140 = vadd.f32 0.0, %v2139
        %2141 = vmatprep.mubr.f32.mxu0 0.0
        %2142 = vmatmul.mubr.f32.gmra.mxu0 %v1882
        %v2143 = vpop.f32.mrf.mxu0
        %v2144 = vadd.f32 0.0, %v2143
        %v2145 = vpop.f32.mrf.mxu0
        %v2146 = vadd.f32 0.0, %v2145
        %2147 = vmatprep.mubr.f32.mxu0 0.0
        %2148 = vmatmul.mubr.f32.gmra.mxu0 %v1883
        %v2149 = vpop.f32.mrf.mxu0
        %v2150 = vadd.f32 0.0, %v2149
        %v2151 = vpop.f32.mrf.mxu0
        %v2152 = vadd.f32 0.0, %v2151
        %2153 = vmatprep.mubr.f32.mxu0 0.0
        %2154 = vmatmul.mubr.f32.gmra.mxu0 %v1884
        %v2155 = vpop.f32.mrf.mxu0
        %v2156 = vadd.f32 0.0, %v2155
        %v2157 = vpop.f32.mrf.mxu0
        %v2158 = vadd.f32 0.0, %v2157
        %2159 = vmatprep.mubr.f32.mxu0 0.0
        %2160 = vmatmul.mubr.f32.gmra.mxu0 %v1885
        %v2161 = vpop.f32.mrf.mxu0
        %v2162 = vadd.f32 0.0, %v2161
        %v2163 = vpop.f32.mrf.mxu0
        %v2164 = vadd.f32 0.0, %v2163
        %2165 = vmatprep.mubr.f32.mxu0 0.0
        %2166 = vmatmul.mubr.f32.gmra.mxu0 %v1886
        %v2167 = vpop.f32.mrf.mxu0
        %v2168 = vadd.f32 0.0, %v2167
        %v2169 = vpop.f32.mrf.mxu0
        %v2170 = vadd.f32 0.0, %v2169
        %2171 = vmatprep.mubr.f32.mxu0 0.0
        %2172 = vmatmul.mubr.f32.gmra.mxu0 %v1887
        %v2173 = vpop.f32.mrf.mxu0
        %v2174 = vadd.f32 0.0, %v2173
        %v2175 = vpop.f32.mrf.mxu0
        %v2176 = vadd.f32 0.0, %v2175
        %2177 = vdwg.mxu0
        %v2178 = vadd.f32 %v1792, %v1988
        %v2179 = vadd.f32 %v1793, %v1990
        %v2180 = vadd.f32 %v1794, %v1994
        %v2181 = vadd.f32 %v1795, %v1996
        %v2182 = vadd.f32 %v1796, %v2000
        %v2183 = vadd.f32 %v1797, %v2002
        %v2184 = vadd.f32 %v1798, %v2006
        %v2185 = vadd.f32 %v1799, %v2008
        %v2186 = vadd.f32 %v1800, %v2012
        %v2187 = vadd.f32 %v1801, %v2014
        %v2188 = vadd.f32 %v1802, %v2018
        %v2189 = vadd.f32 %v1803, %v2020
        %v2190 = vadd.f32 %v1804, %v2024
        %v2191 = vadd.f32 %v1805, %v2026
        %v2192 = vadd.f32 %v1806, %v2030
        %v2193 = vadd.f32 %v1807, %v2032
        %v2194 = vadd.f32 %v1808, %v2036
        %v2195 = vadd.f32 %v1809, %v2038
        %v2196 = vadd.f32 %v1810, %v2042
        %v2197 = vadd.f32 %v1811, %v2044
        %v2198 = vadd.f32 %v1812, %v2048
        %v2199 = vadd.f32 %v1813, %v2050
        %v2200 = vadd.f32 %v1814, %v2054
        %v2201 = vadd.f32 %v1815, %v2056
        %v2202 = vadd.f32 %v1816, %v2060
        %v2203 = vadd.f32 %v1817, %v2062
        %v2204 = vadd.f32 %v1818, %v2066
        %v2205 = vadd.f32 %v1819, %v2068
        %v2206 = vadd.f32 %v1820, %v2072
        %v2207 = vadd.f32 %v1821, %v2074
        %v2208 = vadd.f32 %v1822, %v2078
        %v2209 = vadd.f32 %v1823, %v2080
        %v2210 = vadd.f32 %v1824, %v2084
        %v2211 = vadd.f32 %v1825, %v2086
        %v2212 = vadd.f32 %v1826, %v2090
        %v2213 = vadd.f32 %v1827, %v2092
        %v2214 = vadd.f32 %v1828, %v2096
        %v2215 = vadd.f32 %v1829, %v2098
        %v2216 = vadd.f32 %v1830, %v2102
        %v2217 = vadd.f32 %v1831, %v2104
        %v2218 = vadd.f32 %v1832, %v2108
        %v2219 = vadd.f32 %v1833, %v2110
        %v2220 = vadd.f32 %v1834, %v2114
        %v2221 = vadd.f32 %v1835, %v2116
        %v2222 = vadd.f32 %v1836, %v2120
        %v2223 = vadd.f32 %v1837, %v2122
        %v2224 = vadd.f32 %v1838, %v2126
        %v2225 = vadd.f32 %v1839, %v2128
        %v2226 = vadd.f32 %v1840, %v2132
        %v2227 = vadd.f32 %v1841, %v2134
        %v2228 = vadd.f32 %v1842, %v2138
        %v2229 = vadd.f32 %v1843, %v2140
        %v2230 = vadd.f32 %v1844, %v2144
        %v2231 = vadd.f32 %v1845, %v2146
        %v2232 = vadd.f32 %v1846, %v2150
        %v2233 = vadd.f32 %v1847, %v2152
        %v2234 = vadd.f32 %v1848, %v2156
        %v2235 = vadd.f32 %v1849, %v2158
        %v2236 = vadd.f32 %v1850, %v2162
        %v2237 = vadd.f32 %v1851, %v2164
        %v2238 = vadd.f32 %v1852, %v2168
        %v2239 = vadd.f32 %v1853, %v2170
        %v2240 = vadd.f32 %v1854, %v2174
        %v2241 = vadd.f32 %v1855, %v2176
        %v2242 = vld [vmem:[%s2] sm:$0x3]
        %v2244 = vlaneseq
        %v2245 = vshrl.u32 %v2244, 7
        %v2246 = vsub.s32 0, %v2245
        %v2247 = vrot.slane %v2242, %v2246
        %v2248 = vlaneseq
        %v2249 = vshrl.u32 %v2248, 7
        %v2250 = vsub.s32 1, %v2249
        %v2251 = vrot.slane %v2242, %v2250
        %v2254 = vadd.f32 %v2178, %v2247
        %v2255 = vadd.f32 %v2179, %v2251
        %v2256 = vadd.f32 %v2180, %v2247
        %v2257 = vadd.f32 %v2181, %v2251
        %v2258 = vadd.f32 %v2182, %v2247
        %v2259 = vadd.f32 %v2183, %v2251
        %v2260 = vadd.f32 %v2184, %v2247
        %v2261 = vadd.f32 %v2185, %v2251
        %v2262 = vadd.f32 %v2186, %v2247
        %v2263 = vadd.f32 %v2187, %v2251
        %v2264 = vadd.f32 %v2188, %v2247
        %v2265 = vadd.f32 %v2189, %v2251
        %v2266 = vadd.f32 %v2190, %v2247
        %v2267 = vadd.f32 %v2191, %v2251
        %v2268 = vadd.f32 %v2192, %v2247
        %v2269 = vadd.f32 %v2193, %v2251
        %v2270 = vadd.f32 %v2194, %v2247
        %v2271 = vadd.f32 %v2195, %v2251
        %v2272 = vadd.f32 %v2196, %v2247
        %v2273 = vadd.f32 %v2197, %v2251
        %v2274 = vadd.f32 %v2198, %v2247
        %v2275 = vadd.f32 %v2199, %v2251
        %v2276 = vadd.f32 %v2200, %v2247
        %v2277 = vadd.f32 %v2201, %v2251
        %v2278 = vadd.f32 %v2202, %v2247
        %v2279 = vadd.f32 %v2203, %v2251
        %v2280 = vadd.f32 %v2204, %v2247
        %v2281 = vadd.f32 %v2205, %v2251
        %v2282 = vadd.f32 %v2206, %v2247
        %v2283 = vadd.f32 %v2207, %v2251
        %v2284 = vadd.f32 %v2208, %v2247
        %v2285 = vadd.f32 %v2209, %v2251
        %v2286 = vadd.f32 %v2210, %v2247
        %v2287 = vadd.f32 %v2211, %v2251
        %v2288 = vadd.f32 %v2212, %v2247
        %v2289 = vadd.f32 %v2213, %v2251
        %v2290 = vadd.f32 %v2214, %v2247
        %v2291 = vadd.f32 %v2215, %v2251
        %v2292 = vadd.f32 %v2216, %v2247
        %v2293 = vadd.f32 %v2217, %v2251
        %v2294 = vadd.f32 %v2218, %v2247
        %v2295 = vadd.f32 %v2219, %v2251
        %v2296 = vadd.f32 %v2220, %v2247
        %v2297 = vadd.f32 %v2221, %v2251
        %v2298 = vadd.f32 %v2222, %v2247
        %v2299 = vadd.f32 %v2223, %v2251
        %v2300 = vadd.f32 %v2224, %v2247
        %v2301 = vadd.f32 %v2225, %v2251
        %v2302 = vadd.f32 %v2226, %v2247
        %v2303 = vadd.f32 %v2227, %v2251
        %v2304 = vadd.f32 %v2228, %v2247
        %v2305 = vadd.f32 %v2229, %v2251
        %v2306 = vadd.f32 %v2230, %v2247
        %v2307 = vadd.f32 %v2231, %v2251
        %v2308 = vadd.f32 %v2232, %v2247
        %v2309 = vadd.f32 %v2233, %v2251
        %v2310 = vadd.f32 %v2234, %v2247
        %v2311 = vadd.f32 %v2235, %v2251
        %v2312 = vadd.f32 %v2236, %v2247
        %v2313 = vadd.f32 %v2237, %v2251
        %v2314 = vadd.f32 %v2238, %v2247
        %v2315 = vadd.f32 %v2239, %v2251
        %v2316 = vadd.f32 %v2240, %v2247
        %v2317 = vadd.f32 %v2241, %v2251
        %v2318 = vmax.f32 %v2254, 0.0
        %v2319 = vmax.f32 %v2255, 0.0
        %v2320 = vmax.f32 %v2256, 0.0
        %v2321 = vmax.f32 %v2257, 0.0
        %v2322 = vmax.f32 %v2258, 0.0
        %v2323 = vmax.f32 %v2259, 0.0
        %v2324 = vmax.f32 %v2260, 0.0
        %v2325 = vmax.f32 %v2261, 0.0
        %v2326 = vmax.f32 %v2262, 0.0
        %v2327 = vmax.f32 %v2263, 0.0
        %v2328 = vmax.f32 %v2264, 0.0
        %v2329 = vmax.f32 %v2265, 0.0
        %v2330 = vmax.f32 %v2266, 0.0
        %v2331 = vmax.f32 %v2267, 0.0
        %v2332 = vmax.f32 %v2268, 0.0
        %v2333 = vmax.f32 %v2269, 0.0
        %v2334 = vmax.f32 %v2270, 0.0
        %v2335 = vmax.f32 %v2271, 0.0
        %v2336 = vmax.f32 %v2272, 0.0
        %v2337 = vmax.f32 %v2273, 0.0
        %v2338 = vmax.f32 %v2274, 0.0
        %v2339 = vmax.f32 %v2275, 0.0
        %v2340 = vmax.f32 %v2276, 0.0
        %v2341 = vmax.f32 %v2277, 0.0
        %v2342 = vmax.f32 %v2278, 0.0
        %v2343 = vmax.f32 %v2279, 0.0
        %v2344 = vmax.f32 %v2280, 0.0
        %v2345 = vmax.f32 %v2281, 0.0
        %v2346 = vmax.f32 %v2282, 0.0
        %v2347 = vmax.f32 %v2283, 0.0
        %v2348 = vmax.f32 %v2284, 0.0
        %v2349 = vmax.f32 %v2285, 0.0
        %v2350 = vmax.f32 %v2286, 0.0
        %v2351 = vmax.f32 %v2287, 0.0
        %v2352 = vmax.f32 %v2288, 0.0
        %v2353 = vmax.f32 %v2289, 0.0
        %v2354 = vmax.f32 %v2290, 0.0
        %v2355 = vmax.f32 %v2291, 0.0
        %v2356 = vmax.f32 %v2292, 0.0
        %v2357 = vmax.f32 %v2293, 0.0
        %v2358 = vmax.f32 %v2294, 0.0
        %v2359 = vmax.f32 %v2295, 0.0
        %v2360 = vmax.f32 %v2296, 0.0
        %v2361 = vmax.f32 %v2297, 0.0
        %v2362 = vmax.f32 %v2298, 0.0
        %v2363 = vmax.f32 %v2299, 0.0
        %v2364 = vmax.f32 %v2300, 0.0
        %v2365 = vmax.f32 %v2301, 0.0
        %v2366 = vmax.f32 %v2302, 0.0
        %v2367 = vmax.f32 %v2303, 0.0
        %v2368 = vmax.f32 %v2304, 0.0
        %v2369 = vmax.f32 %v2305, 0.0
        %v2370 = vmax.f32 %v2306, 0.0
        %v2371 = vmax.f32 %v2307, 0.0
        %v2372 = vmax.f32 %v2308, 0.0
        %v2373 = vmax.f32 %v2309, 0.0
        %v2374 = vmax.f32 %v2310, 0.0
        %v2375 = vmax.f32 %v2311, 0.0
        %v2376 = vmax.f32 %v2312, 0.0
        %v2377 = vmax.f32 %v2313, 0.0
        %v2378 = vmax.f32 %v2314, 0.0
        %v2379 = vmax.f32 %v2315, 0.0
        %v2380 = vmax.f32 %v2316, 0.0
        %v2381 = vmax.f32 %v2317, 0.0
        %v2382 = vmax.f32 %v2318, %v2319
        %v2383 = vmax.f32 %v2320, %v2321
        %v2384 = vmax.f32 %v2322, %v2323
        %v2385 = vmax.f32 %v2324, %v2325
        %v2386 = vmax.f32 %v2326, %v2327
        %v2387 = vmax.f32 %v2328, %v2329
        %v2388 = vmax.f32 %v2330, %v2331
        %v2389 = vmax.f32 %v2332, %v2333
        %v2390 = vmax.f32 %v2334, %v2335
        %v2391 = vmax.f32 %v2336, %v2337
        %v2392 = vmax.f32 %v2338, %v2339
        %v2393 = vmax.f32 %v2340, %v2341
        %v2394 = vmax.f32 %v2342, %v2343
        %v2395 = vmax.f32 %v2344, %v2345
        %v2396 = vmax.f32 %v2346, %v2347
        %v2397 = vmax.f32 %v2348, %v2349
        %v2398 = vmax.f32 %v2350, %v2351
        %v2399 = vmax.f32 %v2352, %v2353
        %v2400 = vmax.f32 %v2354, %v2355
        %v2401 = vmax.f32 %v2356, %v2357
        %v2402 = vmax.f32 %v2358, %v2359
        %v2403 = vmax.f32 %v2360, %v2361
        %v2404 = vmax.f32 %v2362, %v2363
        %v2405 = vmax.f32 %v2364, %v2365
        %v2406 = vmax.f32 %v2366, %v2367
        %v2407 = vmax.f32 %v2368, %v2369
        %v2408 = vmax.f32 %v2370, %v2371
        %v2409 = vmax.f32 %v2372, %v2373
        %v2410 = vmax.f32 %v2374, %v2375
        %v2411 = vmax.f32 %v2376, %v2377
        %v2412 = vmax.f32 %v2378, %v2379
        %v2413 = vmax.f32 %v2380, %v2381
        %vm2446 = vcmask 1046528
        %v2447 = vrot.slane %v2382, 1
        %v2448 = vrot.slane %v2383, 1
        %v2449 = vsel %vm2446, %v2447, %v2448
        %v2450 = vrot.slane %v2384, 1
        %v2451 = vsel %vm2446, %v2448, %v2450
        %v2452 = vrot.slane %v2385, 1
        %v2453 = vsel %vm2446, %v2450, %v2452
        %v2454 = vrot.slane %v2386, 1
        %v2455 = vsel %vm2446, %v2452, %v2454
        %v2456 = vrot.slane %v2387, 1
        %v2457 = vsel %vm2446, %v2454, %v2456
        %v2458 = vrot.slane %v2388, 1
        %v2459 = vsel %vm2446, %v2456, %v2458
        %v2460 = vrot.slane %v2389, 1
        %v2461 = vsel %vm2446, %v2458, %v2460
        %v2462 = vrot.slane %v2390, 1
        %v2463 = vsel %vm2446, %v2460, %v2462
        %v2464 = vrot.slane %v2391, 1
        %v2465 = vsel %vm2446, %v2462, %v2464
        %v2466 = vrot.slane %v2392, 1
        %v2467 = vsel %vm2446, %v2464, %v2466
        %v2468 = vrot.slane %v2393, 1
        %v2469 = vsel %vm2446, %v2466, %v2468
        %v2470 = vrot.slane %v2394, 1
        %v2471 = vsel %vm2446, %v2468, %v2470
        %v2472 = vrot.slane %v2395, 1
        %v2473 = vsel %vm2446, %v2470, %v2472
        %v2474 = vrot.slane %v2396, 1
        %v2475 = vsel %vm2446, %v2472, %v2474
        %v2476 = vrot.slane %v2397, 1
        %v2477 = vsel %vm2446, %v2474, %v2476
        %v2478 = vrot.slane %v2398, 1
        %v2479 = vsel %vm2446, %v2476, %v2478
        %v2480 = vrot.slane %v2399, 1
        %v2481 = vsel %vm2446, %v2478, %v2480
        %v2482 = vrot.slane %v2400, 1
        %v2483 = vsel %vm2446, %v2480, %v2482
        %v2484 = vrot.slane %v2401, 1
        %v2485 = vsel %vm2446, %v2482, %v2484
        %v2486 = vrot.slane %v2402, 1
        %v2487 = vsel %vm2446, %v2484, %v2486
        %v2488 = vrot.slane %v2403, 1
        %v2489 = vsel %vm2446, %v2486, %v2488
        %v2490 = vrot.slane %v2404, 1
        %v2491 = vsel %vm2446, %v2488, %v2490
        %v2492 = vrot.slane %v2405, 1
        %v2493 = vsel %vm2446, %v2490, %v2492
        %v2494 = vrot.slane %v2406, 1
        %v2495 = vsel %vm2446, %v2492, %v2494
        %v2496 = vrot.slane %v2407, 1
        %v2497 = vsel %vm2446, %v2494, %v2496
        %v2498 = vrot.slane %v2408, 1
        %v2499 = vsel %vm2446, %v2496, %v2498
        %v2500 = vrot.slane %v2409, 1
        %v2501 = vsel %vm2446, %v2498, %v2500
        %v2502 = vrot.slane %v2410, 1
        %v2503 = vsel %vm2446, %v2500, %v2502
        %v2504 = vrot.slane %v2411, 1
        %v2505 = vsel %vm2446, %v2502, %v2504
        %v2506 = vrot.slane %v2412, 1
        %v2507 = vsel %vm2446, %v2504, %v2506
        %v2508 = vrot.slane %v2413, 1
        %v2509 = vsel %vm2446, %v2506, %v2508
        %v2542 = vmax.f32 %v2382, %v2449
        %v2543 = vmax.f32 %v2383, %v2451
        %v2544 = vmax.f32 %v2384, %v2453
        %v2545 = vmax.f32 %v2385, %v2455
        %v2546 = vmax.f32 %v2386, %v2457
        %v2547 = vmax.f32 %v2387, %v2459
        %v2548 = vmax.f32 %v2388, %v2461
        %v2549 = vmax.f32 %v2389, %v2463
        %v2550 = vmax.f32 %v2390, %v2465
        %v2551 = vmax.f32 %v2391, %v2467
        %v2552 = vmax.f32 %v2392, %v2469
        %v2553 = vmax.f32 %v2393, %v2471
        %v2554 = vmax.f32 %v2394, %v2473
        %v2555 = vmax.f32 %v2395, %v2475
        %v2556 = vmax.f32 %v2396, %v2477
        %v2557 = vmax.f32 %v2397, %v2479
        %v2558 = vmax.f32 %v2398, %v2481
        %v2559 = vmax.f32 %v2399, %v2483
        %v2560 = vmax.f32 %v2400, %v2485
        %v2561 = vmax.f32 %v2401, %v2487
        %v2562 = vmax.f32 %v2402, %v2489
        %v2563 = vmax.f32 %v2403, %v2491
        %v2564 = vmax.f32 %v2404, %v2493
        %v2565 = vmax.f32 %v2405, %v2495
        %v2566 = vmax.f32 %v2406, %v2497
        %v2567 = vmax.f32 %v2407, %v2499
        %v2568 = vmax.f32 %v2408, %v2501
        %v2569 = vmax.f32 %v2409, %v2503
        %v2570 = vmax.f32 %v2410, %v2505
        %v2571 = vmax.f32 %v2411, %v2507
        %v2572 = vmax.f32 %v2412, %v2509
        %v2573 = vmax.f32 %v2413, %v2508
        %v2574 = vld [vmem:[%s3] sm:$0xff]
        %v2575 = vld [vmem:[%s3 + $0x8] sm:$0xff]
        %v2576 = vld [vmem:[%s3 + $0x10] sm:$0xff]
        %v2577 = vld [vmem:[%s3 + $0x18] sm:$0xff]
        %v2578 = vld [vmem:[%s3 + $0x20] sm:$0xff]
        %v2579 = vld [vmem:[%s3 + $0x28] sm:$0xff]
        %v2580 = vld [vmem:[%s3 + $0x30] sm:$0xff]
        %v2581 = vld [vmem:[%s3 + $0x38] sm:$0xff]
        %v2582 = vld [vmem:[%s3 + $0x40] sm:$0xff]
        %v2583 = vld [vmem:[%s3 + $0x48] sm:$0xff]
        %v2584 = vld [vmem:[%s3 + $0x50] sm:$0xff]
        %v2585 = vld [vmem:[%s3 + $0x58] sm:$0xff]
        %v2586 = vld [vmem:[%s3 + $0x60] sm:$0xff]
        %v2587 = vld [vmem:[%s3 + $0x68] sm:$0xff]
        %v2588 = vld [vmem:[%s3 + $0x70] sm:$0xff]
        %v2589 = vld [vmem:[%s3 + $0x78] sm:$0xff]
        %v2590 = vld [vmem:[%s3 + $0x80] sm:$0xff]
        %v2591 = vld [vmem:[%s3 + $0x88] sm:$0xff]
        %v2592 = vld [vmem:[%s3 + $0x90] sm:$0xff]
        %v2593 = vld [vmem:[%s3 + $0x98] sm:$0xff]
        %v2594 = vld [vmem:[%s3 + $0xa0] sm:$0xff]
        %v2595 = vld [vmem:[%s3 + $0xa8] sm:$0xff]
        %v2596 = vld [vmem:[%s3 + $0xb0] sm:$0xff]
        %v2597 = vld [vmem:[%s3 + $0xb8] sm:$0xff]
        %v2598 = vld [vmem:[%s3 + $0xc0] sm:$0xff]
        %v2599 = vld [vmem:[%s3 + $0xc8] sm:$0xff]
        %v2600 = vld [vmem:[%s3 + $0xd0] sm:$0xff]
        %v2601 = vld [vmem:[%s3 + $0xd8] sm:$0xff]
        %vm2602 = vcmask 1006592
        %v2604 = vsel %vm2602, %v2575, 0
        %v2607 = vsel %vm2602, %v2577, 0
        %v2610 = vsel %vm2602, %v2579, 0
        %v2613 = vsel %vm2602, %v2581, 0
        %v2616 = vsel %vm2602, %v2583, 0
        %v2619 = vsel %vm2602, %v2585, 0
        %v2622 = vsel %vm2602, %v2587, 0
        %v2625 = vsel %vm2602, %v2589, 0
        %v2628 = vsel %vm2602, %v2591, 0
        %v2631 = vsel %vm2602, %v2593, 0
        %v2634 = vsel %vm2602, %v2595, 0
        %v2637 = vsel %vm2602, %v2597, 0
        %v2640 = vsel %vm2602, %v2599, 0
        %v2643 = vsel %vm2602, %v2601, 0
        %vm2645 = vcmask 1042432
        %v2647 = vsel %vm2645, %v2573, 0
        %2649 = vmatprep.subr.mxu0 0.0
        %2650 = vmatpush1.msra.mxu0 %v2557
        %2651 = vmatprep.subr.mxu0 0.0
        %2652 = vmatpush1.msra.mxu0 %v2556
        %2653 = vmatprep.subr.mxu0 0.0
        %2654 = vmatpush1.msra.mxu0 %v2555
        %2655 = vmatprep.subr.mxu0 0.0
        %2656 = vmatpush1.msra.mxu0 %v2554
        %2657 = vmatprep.subr.mxu0 0.0
        %2658 = vmatpush1.msra.mxu0 %v2553
        %2659 = vmatprep.subr.mxu0 0.0
        %2660 = vmatpush1.msra.mxu0 %v2552
        %2661 = vmatprep.subr.mxu0 0.0
        %2662 = vmatpush1.msra.mxu0 %v2551
        %2663 = vmatprep.subr.mxu0 0.0
        %2664 = vmatpush1.msra.mxu0 %v2550
        %2665 = vmatprep.subr.mxu0 0.0
        %2666 = vmatpush1.msra.mxu0 %v2549
        %2667 = vmatprep.subr.mxu0 0.0
        %2668 = vmatpush1.msra.mxu0 %v2548
        %2669 = vmatprep.subr.mxu0 0.0
        %2670 = vmatpush1.msra.mxu0 %v2547
        %2671 = vmatprep.subr.mxu0 0.0
        %2672 = vmatpush1.msra.mxu0 %v2546
        %2673 = vmatprep.subr.mxu0 0.0
        %2674 = vmatpush1.msra.mxu0 %v2545
        %2675 = vmatprep.subr.mxu0 0.0
        %2676 = vmatpush1.msra.mxu0 %v2544
        %2677 = vmatprep.subr.mxu0 0.0
        %2678 = vmatpush1.msra.mxu0 %v2543
        %2679 = vmatprep.subr.mxu0 0.0
        %2680 = vmatpush1.msra.mxu0 %v2542
        %2681 = vmatprep.subr.mxu0 0.0
        %2682 = vmatpush2.msra.mxu0 %v2647
        %2683 = vmatprep.subr.mxu0 0.0
        %2684 = vmatpush2.msra.mxu0 %v2572
        %2685 = vmatprep.subr.mxu0 0.0
        %2686 = vmatpush2.msra.mxu0 %v2571
        %2687 = vmatprep.subr.mxu0 0.0
        %2688 = vmatpush2.msra.mxu0 %v2570
        %2689 = vmatprep.subr.mxu0 0.0
        %2690 = vmatpush2.msra.mxu0 %v2569
        %2691 = vmatprep.subr.mxu0 0.0
        %2692 = vmatpush2.msra.mxu0 %v2568
        %2693 = vmatprep.subr.mxu0 0.0
        %2694 = vmatpush2.msra.mxu0 %v2567
        %2695 = vmatprep.subr.mxu0 0.0
        %2696 = vmatpush2.msra.mxu0 %v2566
        %2697 = vmatprep.subr.mxu0 0.0
        %2698 = vmatpush2.msra.mxu0 %v2565
        %2699 = vmatprep.subr.mxu0 0.0
        %2700 = vmatpush2.msra.mxu0 %v2564
        %2701 = vmatprep.subr.mxu0 0.0
        %2702 = vmatpush2.msra.mxu0 %v2563
        %2703 = vmatprep.subr.mxu0 0.0
        %2704 = vmatpush2.msra.mxu0 %v2562
        %2705 = vmatprep.subr.mxu0 0.0
        %2706 = vmatpush2.msra.mxu0 %v2561
        %2707 = vmatprep.subr.mxu0 0.0
        %2708 = vmatpush2.msra.mxu0 %v2560
        %2709 = vmatprep.subr.mxu0 0.0
        %2710 = vmatpush2.msra.mxu0 %v2559
        %2711 = vmatprep.subr.mxu0 0.0
        %2712 = vmatpush2.msra.mxu0 %v2558
        %2713 = vmatprep.mubr.f32.mxu0 %v2604
        %2714 = vmatmul.mubr.f32.gmra.mxu0 %v2574
        %v2715 = vpop.f32.mrf.mxu0
        %v2716 = vadd.f32 0.0, %v2715
        %v2717 = vpop.f32.mrf.mxu0
        %2718 = vmatprep.mubr.f32.mxu0 %v2607
        %2719 = vmatmul.mubr.f32.gmra.mxu0 %v2576
        %v2720 = vpop.f32.mrf.mxu0
        %v2721 = vadd.f32 0.0, %v2720
        %v2722 = vpop.f32.mrf.mxu0
        %2723 = vmatprep.mubr.f32.mxu0 %v2610
        %2724 = vmatmul.mubr.f32.gmra.mxu0 %v2578
        %v2725 = vpop.f32.mrf.mxu0
        %v2726 = vadd.f32 0.0, %v2725
        %v2727 = vpop.f32.mrf.mxu0
        %2728 = vmatprep.mubr.f32.mxu0 %v2613
        %2729 = vmatmul.mubr.f32.gmra.mxu0 %v2580
        %v2730 = vpop.f32.mrf.mxu0
        %v2731 = vadd.f32 0.0, %v2730
        %v2732 = vpop.f32.mrf.mxu0
        %2733 = vmatprep.mubr.f32.mxu0 %v2616
        %2734 = vmatmul.mubr.f32.gmra.mxu0 %v2582
        %v2735 = vpop.f32.mrf.mxu0
        %v2736 = vadd.f32 0.0, %v2735
        %v2737 = vpop.f32.mrf.mxu0
        %2738 = vmatprep.mubr.f32.mxu0 %v2619
        %2739 = vmatmul.mubr.f32.gmra.mxu0 %v2584
        %v2740 = vpop.f32.mrf.mxu0
        %v2741 = vadd.f32 0.0, %v2740
        %v2742 = vpop.f32.mrf.mxu0
        %2743 = vmatprep.mubr.f32.mxu0 %v2622
        %2744 = vmatmul.mubr.f32.gmra.mxu0 %v2586
        %v2745 = vpop.f32.mrf.mxu0
        %v2746 = vadd.f32 0.0, %v2745
        %v2747 = vpop.f32.mrf.mxu0
        %2748 = vmatprep.mubr.f32.mxu0 %v2625
        %2749 = vmatmul.mubr.f32.gmra.mxu0 %v2588
        %v2750 = vpop.f32.mrf.mxu0
        %v2751 = vadd.f32 0.0, %v2750
        %v2752 = vpop.f32.mrf.mxu0
        %2753 = vmatprep.mubr.f32.mxu0 %v2628
        %2754 = vmatmul.mubr.f32.gmra.mxu0 %v2590
        %v2755 = vpop.f32.mrf.mxu0
        %v2756 = vadd.f32 0.0, %v2755
        %v2757 = vpop.f32.mrf.mxu0
        %2758 = vmatprep.mubr.f32.mxu0 %v2631
        %2759 = vmatmul.mubr.f32.gmra.mxu0 %v2592
        %v2760 = vpop.f32.mrf.mxu0
        %v2761 = vadd.f32 0.0, %v2760
        %v2762 = vpop.f32.mrf.mxu0
        %2763 = vmatprep.mubr.f32.mxu0 %v2634
        %2764 = vmatmul.mubr.f32.gmra.mxu0 %v2594
        %v2765 = vpop.f32.mrf.mxu0
        %v2766 = vadd.f32 0.0, %v2765
        %v2767 = vpop.f32.mrf.mxu0
        %2768 = vmatprep.mubr.f32.mxu0 %v2637
        %2769 = vmatmul.mubr.f32.gmra.mxu0 %v2596
        %v2770 = vpop.f32.mrf.mxu0
        %v2771 = vadd.f32 0.0, %v2770
        %v2772 = vpop.f32.mrf.mxu0
        %2773 = vmatprep.mubr.f32.mxu0 %v2640
        %2774 = vmatmul.mubr.f32.gmra.mxu0 %v2598
        %v2775 = vpop.f32.mrf.mxu0
        %v2776 = vadd.f32 0.0, %v2775
        %v2777 = vpop.f32.mrf.mxu0
        %2778 = vmatprep.mubr.f32.mxu0 %v2643
        %2779 = vmatmul.mubr.f32.gmra.mxu0 %v2600
        %v2780 = vpop.f32.mrf.mxu0
        %v2781 = vadd.f32 0.0, %v2780
        %v2782 = vpop.f32.mrf.mxu0
        %2783 = vdwg.mxu0
        %v2784 = vld [vmem:[%s4] sm:$0xff]
        %v2785 = vld [vmem:[%s4 + $0x8] sm:$0xff]
        %v2786 = vld [vmem:[%s4 + $0x10] sm:$0xff]
        %v2787 = vld [vmem:[%s4 + $0x18] sm:$0xff]
        %v2788 = vld [vmem:[%s4 + $0x20] sm:$0xff]
        %v2789 = vld [vmem:[%s4 + $0x28] sm:$0xff]
        %v2790 = vld [vmem:[%s4 + $0x30] sm:$0xff]
        %v2791 = vld [vmem:[%s4 + $0x38] sm:$0xff]
        %v2792 = vld [vmem:[%s4 + $0x40] sm:$0xff]
        %v2793 = vld [vmem:[%s4 + $0x48] sm:$0xff]
        %v2794 = vld [vmem:[%s4 + $0x50] sm:$0xff]
        %v2795 = vld [vmem:[%s4 + $0x58] sm:$0xff]
        %v2796 = vld [vmem:[%s4 + $0x60] sm:$0xff]
        %v2797 = vld [vmem:[%s4 + $0x68] sm:$0xff]
        %v2798 = vld [vmem:[%s4 + $0x70] sm:$0xff]
        %v2799 = vld [vmem:[%s4 + $0x78] sm:$0xff]
        %v2800 = vld [vmem:[%s4 + $0x80] sm:$0xff]
        %v2801 = vld [vmem:[%s4 + $0x88] sm:$0xff]
        %v2802 = vld [vmem:[%s4 + $0x90] sm:$0xff]
        %v2803 = vld [vmem:[%s4 + $0x98] sm:$0xff]
        %v2804 = vld [vmem:[%s4 + $0xa0] sm:$0xff]
        %v2805 = vld [vmem:[%s4 + $0xa8] sm:$0xff]
        %v2806 = vld [vmem:[%s4 + $0xb0] sm:$0xff]
        %v2807 = vld [vmem:[%s4 + $0xb8] sm:$0xff]
        %v2808 = vld [vmem:[%s4 + $0xc0] sm:$0xff]
        %v2809 = vld [vmem:[%s4 + $0xc8] sm:$0xff]
        %v2810 = vld [vmem:[%s4 + $0xd0] sm:$0xff]
        %v2811 = vld [vmem:[%s4 + $0xd8] sm:$0xff]
        %v2812 = vld [vmem:[%s4 + $0xe0] sm:$0xff]
        %v2813 = vld [vmem:[%s4 + $0xe8] sm:$0xff]
        %v2814 = vld [vmem:[%s4 + $0xf0] sm:$0xff]
        %v2815 = vld [vmem:[%s4 + $0xf8] sm:$0xff]
        %s2816 = scalar_lea.vmem %s4, 256
        %v2817 = vld [vmem:[%s2816] sm:$0xff]
        %v2818 = vld [vmem:[%s2816 + $0x8] sm:$0xff]
        %v2819 = vld [vmem:[%s2816 + $0x10] sm:$0xff]
        %v2820 = vld [vmem:[%s2816 + $0x18] sm:$0xff]
        %v2821 = vld [vmem:[%s2816 + $0x20] sm:$0xff]
        %v2822 = vld [vmem:[%s2816 + $0x28] sm:$0xff]
        %v2823 = vld [vmem:[%s2816 + $0x30] sm:$0xff]
        %v2824 = vld [vmem:[%s2816 + $0x38] sm:$0xff]
        %v2825 = vld [vmem:[%s2816 + $0x40] sm:$0xff]
        %v2826 = vld [vmem:[%s2816 + $0x48] sm:$0xff]
        %v2827 = vld [vmem:[%s2816 + $0x50] sm:$0xff]
        %v2828 = vld [vmem:[%s2816 + $0x58] sm:$0xff]
        %v2829 = vld [vmem:[%s2816 + $0x60] sm:$0xff]
        %v2830 = vld [vmem:[%s2816 + $0x68] sm:$0xff]
        %v2831 = vld [vmem:[%s2816 + $0x70] sm:$0xff]
        %v2832 = vld [vmem:[%s2816 + $0x78] sm:$0xff]
        %v2833 = vld [vmem:[%s2816 + $0x80] sm:$0xff]
        %v2834 = vld [vmem:[%s2816 + $0x88] sm:$0xff]
        %v2835 = vld [vmem:[%s2816 + $0x90] sm:$0xff]
        %v2836 = vld [vmem:[%s2816 + $0x98] sm:$0xff]
        %v2837 = vld [vmem:[%s2816 + $0xa0] sm:$0xff]
        %v2838 = vld [vmem:[%s2816 + $0xa8] sm:$0xff]
        %v2839 = vld [vmem:[%s2816 + $0xb0] sm:$0xff]
        %v2840 = vld [vmem:[%s2816 + $0xb8] sm:$0xff]
        %v2841 = vld [vmem:[%s2816 + $0xc0] sm:$0xff]
        %v2842 = vld [vmem:[%s2816 + $0xc8] sm:$0xff]
        %v2843 = vld [vmem:[%s2816 + $0xd0] sm:$0xff]
        %v2844 = vld [vmem:[%s2816 + $0xd8] sm:$0xff]
        %v2845 = vld [vmem:[%s2816 + $0xe0] sm:$0xff]
        %v2846 = vld [vmem:[%s2816 + $0xe8] sm:$0xff]
        %v2847 = vld [vmem:[%s2816 + $0xf0] sm:$0xff]
        %v2848 = vld [vmem:[%s2816 + $0xf8] sm:$0xff]
        %v2863 = vrot.slane %v2716, 1
        %v2864 = vrot.slane %v2721, 1
        %v2865 = vsel %vm2446, %v2863, %v2864
        %v2866 = vrot.slane %v2726, 1
        %v2867 = vsel %vm2446, %v2864, %v2866
        %v2868 = vrot.slane %v2731, 1
        %v2869 = vsel %vm2446, %v2866, %v2868
        %v2870 = vrot.slane %v2736, 1
        %v2871 = vsel %vm2446, %v2868, %v2870
        %v2872 = vrot.slane %v2741, 1
        %v2873 = vsel %vm2446, %v2870, %v2872
        %v2874 = vrot.slane %v2746, 1
        %v2875 = vsel %vm2446, %v2872, %v2874
        %v2876 = vrot.slane %v2751, 1
        %v2877 = vsel %vm2446, %v2874, %v2876
        %v2878 = vrot.slane %v2756, 1
        %v2879 = vsel %vm2446, %v2876, %v2878
        %v2880 = vrot.slane %v2761, 1
        %v2881 = vsel %vm2446, %v2878, %v2880
        %v2882 = vrot.slane %v2766, 1
        %v2883 = vsel %vm2446, %v2880, %v2882
        %v2884 = vrot.slane %v2771, 1
        %v2885 = vsel %vm2446, %v2882, %v2884
        %v2886 = vrot.slane %v2776, 1
        %v2887 = vsel %vm2446, %v2884, %v2886
        %v2888 = vrot.slane %v2781, 1
        %v2889 = vsel %vm2446, %v2886, %v2888
        %2904 = vmatprep.subr.mxu0 %v2848
        %2905 = vmatpush1.msra.mxu0 %v2847
        %2906 = vmatprep.subr.mxu0 %v2846
        %2907 = vmatpush1.msra.mxu0 %v2845
        %2908 = vmatprep.subr.mxu0 %v2844
        %2909 = vmatpush1.msra.mxu0 %v2843
        %2910 = vmatprep.subr.mxu0 %v2842
        %2911 = vmatpush1.msra.mxu0 %v2841
        %2912 = vmatprep.subr.mxu0 %v2840
        %2913 = vmatpush1.msra.mxu0 %v2839
        %2914 = vmatprep.subr.mxu0 %v2838
        %2915 = vmatpush1.msra.mxu0 %v2837
        %2916 = vmatprep.subr.mxu0 %v2836
        %2917 = vmatpush1.msra.mxu0 %v2835
        %2918 = vmatprep.subr.mxu0 %v2834
        %2919 = vmatpush1.msra.mxu0 %v2833
        %2920 = vmatprep.subr.mxu0 %v2832
        %2921 = vmatpush1.msra.mxu0 %v2831
        %2922 = vmatprep.subr.mxu0 %v2830
        %2923 = vmatpush1.msra.mxu0 %v2829
        %2924 = vmatprep.subr.mxu0 %v2828
        %2925 = vmatpush1.msra.mxu0 %v2827
        %2926 = vmatprep.subr.mxu0 %v2826
        %2927 = vmatpush1.msra.mxu0 %v2825
        %2928 = vmatprep.subr.mxu0 %v2824
        %2929 = vmatpush1.msra.mxu0 %v2823
        %2930 = vmatprep.subr.mxu0 %v2822
        %2931 = vmatpush1.msra.mxu0 %v2821
        %2932 = vmatprep.subr.mxu0 %v2820
        %2933 = vmatpush1.msra.mxu0 %v2819
        %2934 = vmatprep.subr.mxu0 %v2818
        %2935 = vmatpush1.msra.mxu0 %v2817
        %2936 = vmatprep.subr.mxu0 0.0
        %2937 = vmatpush2.msra.mxu0 0.0
        %2938 = vmatprep.subr.mxu0 0.0
        %2939 = vmatpush2.msra.mxu0 0.0
        %2940 = vmatprep.subr.mxu0 0.0
        %2941 = vmatpush2.msra.mxu0 0.0
        %2942 = vmatprep.subr.mxu0 0.0
        %2943 = vmatpush2.msra.mxu0 0.0
        %2944 = vmatprep.subr.mxu0 0.0
        %2945 = vmatpush2.msra.mxu0 0.0
        %2946 = vmatprep.subr.mxu0 0.0
        %2947 = vmatpush2.msra.mxu0 0.0
        %2948 = vmatprep.subr.mxu0 0.0
        %2949 = vmatpush2.msra.mxu0 0.0
        %2950 = vmatprep.subr.mxu0 0.0
        %2951 = vmatpush2.msra.mxu0 0.0
        %2952 = vmatprep.subr.mxu0 0.0
        %2953 = vmatpush2.msra.mxu0 0.0
        %2954 = vmatprep.subr.mxu0 0.0
        %2955 = vmatpush2.msra.mxu0 0.0
        %2956 = vmatprep.subr.mxu0 0.0
        %2957 = vmatpush2.msra.mxu0 0.0
        %2958 = vmatprep.subr.mxu0 0.0
        %2959 = vmatpush2.msra.mxu0 0.0
        %2960 = vmatprep.subr.mxu0 0.0
        %2961 = vmatpush2.msra.mxu0 0.0
        %2962 = vmatprep.subr.mxu0 0.0
        %2963 = vmatpush2.msra.mxu0 0.0
        %2964 = vmatprep.subr.mxu0 0.0
        %2965 = vmatpush2.msra.mxu0 0.0
        %2966 = vmatprep.subr.mxu0 0.0
        %2967 = vmatpush2.msra.mxu0 0.0
        %2968 = vmatprep.mubr.f32.mxu0 0.0
        %2969 = vmatmul.mubr.f32.gmra.mxu0 %v2865
        %v2970 = vpop.f32.mrf.mxu0
        %v2971 = vadd.f32 0.0, %v2970
        %v2972 = vpop.f32.mrf.mxu0
        %v2973 = vadd.f32 0.0, %v2972
        %2974 = vmatprep.mubr.f32.mxu0 0.0
        %2975 = vmatmul.mubr.f32.gmra.mxu0 %v2867
        %v2976 = vpop.f32.mrf.mxu0
        %v2977 = vadd.f32 0.0, %v2976
        %v2978 = vpop.f32.mrf.mxu0
        %v2979 = vadd.f32 0.0, %v2978
        %2980 = vmatprep.mubr.f32.mxu0 0.0
        %2981 = vmatmul.mubr.f32.gmra.mxu0 %v2869
        %v2982 = vpop.f32.mrf.mxu0
        %v2983 = vadd.f32 0.0, %v2982
        %v2984 = vpop.f32.mrf.mxu0
        %v2985 = vadd.f32 0.0, %v2984
        %2986 = vmatprep.mubr.f32.mxu0 0.0
        %2987 = vmatmul.mubr.f32.gmra.mxu0 %v2871
        %v2988 = vpop.f32.mrf.mxu0
        %v2989 = vadd.f32 0.0, %v2988
        %v2990 = vpop.f32.mrf.mxu0
        %v2991 = vadd.f32 0.0, %v2990
        %2992 = vmatprep.mubr.f32.mxu0 0.0
        %2993 = vmatmul.mubr.f32.gmra.mxu0 %v2873
        %v2994 = vpop.f32.mrf.mxu0
        %v2995 = vadd.f32 0.0, %v2994
        %v2996 = vpop.f32.mrf.mxu0
        %v2997 = vadd.f32 0.0, %v2996
        %2998 = vmatprep.mubr.f32.mxu0 0.0
        %2999 = vmatmul.mubr.f32.gmra.mxu0 %v2875
        %v3000 = vpop.f32.mrf.mxu0
        %v3001 = vadd.f32 0.0, %v3000
        %v3002 = vpop.f32.mrf.mxu0
        %v3003 = vadd.f32 0.0, %v3002
        %3004 = vmatprep.mubr.f32.mxu0 0.0
        %3005 = vmatmul.mubr.f32.gmra.mxu0 %v2877
        %v3006 = vpop.f32.mrf.mxu0
        %v3007 = vadd.f32 0.0, %v3006
        %v3008 = vpop.f32.mrf.mxu0
        %v3009 = vadd.f32 0.0, %v3008
        %3010 = vmatprep.mubr.f32.mxu0 0.0
        %3011 = vmatmul.mubr.f32.gmra.mxu0 %v2879
        %v3012 = vpop.f32.mrf.mxu0
        %v3013 = vadd.f32 0.0, %v3012
        %v3014 = vpop.f32.mrf.mxu0
        %v3015 = vadd.f32 0.0, %v3014
        %3016 = vmatprep.mubr.f32.mxu0 0.0
        %3017 = vmatmul.mubr.f32.gmra.mxu0 %v2881
        %v3018 = vpop.f32.mrf.mxu0
        %v3019 = vadd.f32 0.0, %v3018
        %v3020 = vpop.f32.mrf.mxu0
        %v3021 = vadd.f32 0.0, %v3020
        %3022 = vmatprep.mubr.f32.mxu0 0.0
        %3023 = vmatmul.mubr.f32.gmra.mxu0 %v2883
        %v3024 = vpop.f32.mrf.mxu0
        %v3025 = vadd.f32 0.0, %v3024
        %v3026 = vpop.f32.mrf.mxu0
        %v3027 = vadd.f32 0.0, %v3026
        %3028 = vmatprep.mubr.f32.mxu0 0.0
        %3029 = vmatmul.mubr.f32.gmra.mxu0 %v2885
        %v3030 = vpop.f32.mrf.mxu0
        %v3031 = vadd.f32 0.0, %v3030
        %v3032 = vpop.f32.mrf.mxu0
        %v3033 = vadd.f32 0.0, %v3032
        %3034 = vmatprep.mubr.f32.mxu0 0.0
        %3035 = vmatmul.mubr.f32.gmra.mxu0 %v2887
        %v3036 = vpop.f32.mrf.mxu0
        %v3037 = vadd.f32 0.0, %v3036
        %v3038 = vpop.f32.mrf.mxu0
        %v3039 = vadd.f32 0.0, %v3038
        %3040 = vmatprep.mubr.f32.mxu0 0.0
        %3041 = vmatmul.mubr.f32.gmra.mxu0 %v2889
        %v3042 = vpop.f32.mrf.mxu0
        %v3043 = vadd.f32 0.0, %v3042
        %v3044 = vpop.f32.mrf.mxu0
        %v3045 = vadd.f32 0.0, %v3044
        %3046 = vmatprep.mubr.f32.mxu0 0.0
        %3047 = vmatmul.mubr.f32.gmra.mxu0 %v2888
        %v3048 = vpop.f32.mrf.mxu0
        %v3049 = vadd.f32 0.0, %v3048
        %v3050 = vpop.f32.mrf.mxu0
        %v3051 = vadd.f32 0.0, %v3050
        %3052 = vdwg.mxu0
        %3053 = vmatprep.subr.mxu0 %v2815
        %3054 = vmatpush1.msra.mxu0 %v2814
        %3055 = vmatprep.subr.mxu0 %v2813
        %3056 = vmatpush1.msra.mxu0 %v2812
        %3057 = vmatprep.subr.mxu0 %v2811
        %3058 = vmatpush1.msra.mxu0 %v2810
        %3059 = vmatprep.subr.mxu0 %v2809
        %3060 = vmatpush1.msra.mxu0 %v2808
        %3061 = vmatprep.subr.mxu0 %v2807
        %3062 = vmatpush1.msra.mxu0 %v2806
        %3063 = vmatprep.subr.mxu0 %v2805
        %3064 = vmatpush1.msra.mxu0 %v2804
        %3065 = vmatprep.subr.mxu0 %v2803
        %3066 = vmatpush1.msra.mxu0 %v2802
        %3067 = vmatprep.subr.mxu0 %v2801
        %3068 = vmatpush1.msra.mxu0 %v2800
        %3069 = vmatprep.subr.mxu0 %v2799
        %3070 = vmatpush1.msra.mxu0 %v2798
        %3071 = vmatprep.subr.mxu0 %v2797
        %3072 = vmatpush1.msra.mxu0 %v2796
        %3073 = vmatprep.subr.mxu0 %v2795
        %3074 = vmatpush1.msra.mxu0 %v2794
        %3075 = vmatprep.subr.mxu0 %v2793
        %3076 = vmatpush1.msra.mxu0 %v2792
        %3077 = vmatprep.subr.mxu0 %v2791
        %3078 = vmatpush1.msra.mxu0 %v2790
        %3079 = vmatprep.subr.mxu0 %v2789
        %3080 = vmatpush1.msra.mxu0 %v2788
        %3081 = vmatprep.subr.mxu0 %v2787
        %3082 = vmatpush1.msra.mxu0 %v2786
        %3083 = vmatprep.subr.mxu0 %v2785
        %3084 = vmatpush1.msra.mxu0 %v2784
        %3085 = vmatprep.subr.mxu0 0.0
        %3086 = vmatpush2.msra.mxu0 0.0
        %3087 = vmatprep.subr.mxu0 0.0
        %3088 = vmatpush2.msra.mxu0 0.0
        %3089 = vmatprep.subr.mxu0 0.0
        %3090 = vmatpush2.msra.mxu0 0.0
        %3091 = vmatprep.subr.mxu0 0.0
        %3092 = vmatpush2.msra.mxu0 0.0
        %3093 = vmatprep.subr.mxu0 0.0
        %3094 = vmatpush2.msra.mxu0 0.0
        %3095 = vmatprep.subr.mxu0 0.0
        %3096 = vmatpush2.msra.mxu0 0.0
        %3097 = vmatprep.subr.mxu0 0.0
        %3098 = vmatpush2.msra.mxu0 0.0
        %3099 = vmatprep.subr.mxu0 0.0
        %3100 = vmatpush2.msra.mxu0 0.0
        %3101 = vmatprep.subr.mxu0 0.0
        %3102 = vmatpush2.msra.mxu0 0.0
        %3103 = vmatprep.subr.mxu0 0.0
        %3104 = vmatpush2.msra.mxu0 0.0
        %3105 = vmatprep.subr.mxu0 0.0
        %3106 = vmatpush2.msra.mxu0 0.0
        %3107 = vmatprep.subr.mxu0 0.0
        %3108 = vmatpush2.msra.mxu0 0.0
        %3109 = vmatprep.subr.mxu0 0.0
        %3110 = vmatpush2.msra.mxu0 0.0
        %3111 = vmatprep.subr.mxu0 0.0
        %3112 = vmatpush2.msra.mxu0 0.0
        %3113 = vmatprep.subr.mxu0 0.0
        %3114 = vmatpush2.msra.mxu0 0.0
        %3115 = vmatprep.subr.mxu0 0.0
        %3116 = vmatpush2.msra.mxu0 0.0
        %3117 = vmatprep.mubr.f32.mxu0 0.0
        %3118 = vmatmul.mubr.f32.gmra.mxu0 %v2716
        %v3119 = vpop.f32.mrf.mxu0
        %v3120 = vadd.f32 %v2971, %v3119
        %v3121 = vpop.f32.mrf.mxu0
        %v3122 = vadd.f32 %v2973, %v3121
        %3123 = vmatprep.mubr.f32.mxu0 0.0
        %3124 = vmatmul.mubr.f32.gmra.mxu0 %v2721
        %v3125 = vpop.f32.mrf.mxu0
        %v3126 = vadd.f32 %v2977, %v3125
        %v3127 = vpop.f32.mrf.mxu0
        %v3128 = vadd.f32 %v2979, %v3127
        %3129 = vmatprep.mubr.f32.mxu0 0.0
        %3130 = vmatmul.mubr.f32.gmra.mxu0 %v2726
        %v3131 = vpop.f32.mrf.mxu0
        %v3132 = vadd.f32 %v2983, %v3131
        %v3133 = vpop.f32.mrf.mxu0
        %v3134 = vadd.f32 %v2985, %v3133
        %3135 = vmatprep.mubr.f32.mxu0 0.0
        %3136 = vmatmul.mubr.f32.gmra.mxu0 %v2731
        %v3137 = vpop.f32.mrf.mxu0
        %v3138 = vadd.f32 %v2989, %v3137
        %v3139 = vpop.f32.mrf.mxu0
        %v3140 = vadd.f32 %v2991, %v3139
        %3141 = vmatprep.mubr.f32.mxu0 0.0
        %3142 = vmatmul.mubr.f32.gmra.mxu0 %v2736
        %v3143 = vpop.f32.mrf.mxu0
        %v3144 = vadd.f32 %v2995, %v3143
        %v3145 = vpop.f32.mrf.mxu0
        %v3146 = vadd.f32 %v2997, %v3145
        %3147 = vmatprep.mubr.f32.mxu0 0.0
        %3148 = vmatmul.mubr.f32.gmra.mxu0 %v2741
        %v3149 = vpop.f32.mrf.mxu0
        %v3150 = vadd.f32 %v3001, %v3149
        %v3151 = vpop.f32.mrf.mxu0
        %v3152 = vadd.f32 %v3003, %v3151
        %3153 = vmatprep.mubr.f32.mxu0 0.0
        %3154 = vmatmul.mubr.f32.gmra.mxu0 %v2746
        %v3155 = vpop.f32.mrf.mxu0
        %v3156 = vadd.f32 %v3007, %v3155
        %v3157 = vpop.f32.mrf.mxu0
        %v3158 = vadd.f32 %v3009, %v3157
        %3159 = vmatprep.mubr.f32.mxu0 0.0
        %3160 = vmatmul.mubr.f32.gmra.mxu0 %v2751
        %v3161 = vpop.f32.mrf.mxu0
        %v3162 = vadd.f32 %v3013, %v3161
        %v3163 = vpop.f32.mrf.mxu0
        %v3164 = vadd.f32 %v3015, %v3163
        %3165 = vmatprep.mubr.f32.mxu0 0.0
        %3166 = vmatmul.mubr.f32.gmra.mxu0 %v2756
        %v3167 = vpop.f32.mrf.mxu0
        %v3168 = vadd.f32 %v3019, %v3167
        %v3169 = vpop.f32.mrf.mxu0
        %v3170 = vadd.f32 %v3021, %v3169
        %3171 = vmatprep.mubr.f32.mxu0 0.0
        %3172 = vmatmul.mubr.f32.gmra.mxu0 %v2761
        %v3173 = vpop.f32.mrf.mxu0
        %v3174 = vadd.f32 %v3025, %v3173
        %v3175 = vpop.f32.mrf.mxu0
        %v3176 = vadd.f32 %v3027, %v3175
        %3177 = vmatprep.mubr.f32.mxu0 0.0
        %3178 = vmatmul.mubr.f32.gmra.mxu0 %v2766
        %v3179 = vpop.f32.mrf.mxu0
        %v3180 = vadd.f32 %v3031, %v3179
        %v3181 = vpop.f32.mrf.mxu0
        %v3182 = vadd.f32 %v3033, %v3181
        %3183 = vmatprep.mubr.f32.mxu0 0.0
        %3184 = vmatmul.mubr.f32.gmra.mxu0 %v2771
        %v3185 = vpop.f32.mrf.mxu0
        %v3186 = vadd.f32 %v3037, %v3185
        %v3187 = vpop.f32.mrf.mxu0
        %v3188 = vadd.f32 %v3039, %v3187
        %3189 = vmatprep.mubr.f32.mxu0 0.0
        %3190 = vmatmul.mubr.f32.gmra.mxu0 %v2776
        %v3191 = vpop.f32.mrf.mxu0
        %v3192 = vadd.f32 %v3043, %v3191
        %v3193 = vpop.f32.mrf.mxu0
        %v3194 = vadd.f32 %v3045, %v3193
        %3195 = vmatprep.mubr.f32.mxu0 0.0
        %3196 = vmatmul.mubr.f32.gmra.mxu0 %v2781
        %v3197 = vpop.f32.mrf.mxu0
        %v3198 = vadd.f32 %v3049, %v3197
        %v3199 = vpop.f32.mrf.mxu0
        %v3200 = vadd.f32 %v3051, %v3199
        %3201 = vdwg.mxu0
        %s3202 = scalar_lea.vmem %s4, 512
        %v3203 = vld [vmem:[%s3202] sm:$0xff]
        %v3204 = vld [vmem:[%s3202 + $0x8] sm:$0xff]
        %v3205 = vld [vmem:[%s3202 + $0x10] sm:$0xff]
        %v3206 = vld [vmem:[%s3202 + $0x18] sm:$0xff]
        %v3207 = vld [vmem:[%s3202 + $0x20] sm:$0xff]
        %v3208 = vld [vmem:[%s3202 + $0x28] sm:$0xff]
        %v3209 = vld [vmem:[%s3202 + $0x30] sm:$0xff]
        %v3210 = vld [vmem:[%s3202 + $0x38] sm:$0xff]
        %v3211 = vld [vmem:[%s3202 + $0x40] sm:$0xff]
        %v3212 = vld [vmem:[%s3202 + $0x48] sm:$0xff]
        %v3213 = vld [vmem:[%s3202 + $0x50] sm:$0xff]
        %v3214 = vld [vmem:[%s3202 + $0x58] sm:$0xff]
        %v3215 = vld [vmem:[%s3202 + $0x60] sm:$0xff]
        %v3216 = vld [vmem:[%s3202 + $0x68] sm:$0xff]
        %v3217 = vld [vmem:[%s3202 + $0x70] sm:$0xff]
        %v3218 = vld [vmem:[%s3202 + $0x78] sm:$0xff]
        %v3219 = vld [vmem:[%s3202 + $0x80] sm:$0xff]
        %v3220 = vld [vmem:[%s3202 + $0x88] sm:$0xff]
        %v3221 = vld [vmem:[%s3202 + $0x90] sm:$0xff]
        %v3222 = vld [vmem:[%s3202 + $0x98] sm:$0xff]
        %v3223 = vld [vmem:[%s3202 + $0xa0] sm:$0xff]
        %v3224 = vld [vmem:[%s3202 + $0xa8] sm:$0xff]
        %v3225 = vld [vmem:[%s3202 + $0xb0] sm:$0xff]
        %v3226 = vld [vmem:[%s3202 + $0xb8] sm:$0xff]
        %v3227 = vld [vmem:[%s3202 + $0xc0] sm:$0xff]
        %v3228 = vld [vmem:[%s3202 + $0xc8] sm:$0xff]
        %v3229 = vld [vmem:[%s3202 + $0xd0] sm:$0xff]
        %v3230 = vld [vmem:[%s3202 + $0xd8] sm:$0xff]
        %v3231 = vld [vmem:[%s3202 + $0xe0] sm:$0xff]
        %v3232 = vld [vmem:[%s3202 + $0xe8] sm:$0xff]
        %v3233 = vld [vmem:[%s3202 + $0xf0] sm:$0xff]
        %v3234 = vld [vmem:[%s3202 + $0xf8] sm:$0xff]
        %vm3235 = vcmask 1045504
        %v3236 = vrot.slane %v2716, 2
        %v3237 = vrot.slane %v2721, 2
        %v3238 = vsel %vm3235, %v3236, %v3237
        %v3239 = vrot.slane %v2726, 2
        %v3240 = vsel %vm3235, %v3237, %v3239
        %v3241 = vrot.slane %v2731, 2
        %v3242 = vsel %vm3235, %v3239, %v3241
        %v3243 = vrot.slane %v2736, 2
        %v3244 = vsel %vm3235, %v3241, %v3243
        %v3245 = vrot.slane %v2741, 2
        %v3246 = vsel %vm3235, %v3243, %v3245
        %v3247 = vrot.slane %v2746, 2
        %v3248 = vsel %vm3235, %v3245, %v3247
        %v3249 = vrot.slane %v2751, 2
        %v3250 = vsel %vm3235, %v3247, %v3249
        %v3251 = vrot.slane %v2756, 2
        %v3252 = vsel %vm3235, %v3249, %v3251
        %v3253 = vrot.slane %v2761, 2
        %v3254 = vsel %vm3235, %v3251, %v3253
        %v3255 = vrot.slane %v2766, 2
        %v3256 = vsel %vm3235, %v3253, %v3255
        %v3257 = vrot.slane %v2771, 2
        %v3258 = vsel %vm3235, %v3255, %v3257
        %v3259 = vrot.slane %v2776, 2
        %v3260 = vsel %vm3235, %v3257, %v3259
        %v3261 = vrot.slane %v2781, 2
        %v3262 = vsel %vm3235, %v3259, %v3261
        %3277 = vmatprep.subr.mxu0 %v3234
        %3278 = vmatpush1.msra.mxu0 %v3233
        %3279 = vmatprep.subr.mxu0 %v3232
        %3280 = vmatpush1.msra.mxu0 %v3231
        %3281 = vmatprep.subr.mxu0 %v3230
        %3282 = vmatpush1.msra.mxu0 %v3229
        %3283 = vmatprep.subr.mxu0 %v3228
        %3284 = vmatpush1.msra.mxu0 %v3227
        %3285 = vmatprep.subr.mxu0 %v3226
        %3286 = vmatpush1.msra.mxu0 %v3225
        %3287 = vmatprep.subr.mxu0 %v3224
        %3288 = vmatpush1.msra.mxu0 %v3223
        %3289 = vmatprep.subr.mxu0 %v3222
        %3290 = vmatpush1.msra.mxu0 %v3221
        %3291 = vmatprep.subr.mxu0 %v3220
        %3292 = vmatpush1.msra.mxu0 %v3219
        %3293 = vmatprep.subr.mxu0 %v3218
        %3294 = vmatpush1.msra.mxu0 %v3217
        %3295 = vmatprep.subr.mxu0 %v3216
        %3296 = vmatpush1.msra.mxu0 %v3215
        %3297 = vmatprep.subr.mxu0 %v3214
        %3298 = vmatpush1.msra.mxu0 %v3213
        %3299 = vmatprep.subr.mxu0 %v3212
        %3300 = vmatpush1.msra.mxu0 %v3211
        %3301 = vmatprep.subr.mxu0 %v3210
        %3302 = vmatpush1.msra.mxu0 %v3209
        %3303 = vmatprep.subr.mxu0 %v3208
        %3304 = vmatpush1.msra.mxu0 %v3207
        %3305 = vmatprep.subr.mxu0 %v3206
        %3306 = vmatpush1.msra.mxu0 %v3205
        %3307 = vmatprep.subr.mxu0 %v3204
        %3308 = vmatpush1.msra.mxu0 %v3203
        %3309 = vmatprep.subr.mxu0 0.0
        %3310 = vmatpush2.msra.mxu0 0.0
        %3311 = vmatprep.subr.mxu0 0.0
        %3312 = vmatpush2.msra.mxu0 0.0
        %3313 = vmatprep.subr.mxu0 0.0
        %3314 = vmatpush2.msra.mxu0 0.0
        %3315 = vmatprep.subr.mxu0 0.0
        %3316 = vmatpush2.msra.mxu0 0.0
        %3317 = vmatprep.subr.mxu0 0.0
        %3318 = vmatpush2.msra.mxu0 0.0
        %3319 = vmatprep.subr.mxu0 0.0
        %3320 = vmatpush2.msra.mxu0 0.0
        %3321 = vmatprep.subr.mxu0 0.0
        %3322 = vmatpush2.msra.mxu0 0.0
        %3323 = vmatprep.subr.mxu0 0.0
        %3324 = vmatpush2.msra.mxu0 0.0
        %3325 = vmatprep.subr.mxu0 0.0
        %3326 = vmatpush2.msra.mxu0 0.0
        %3327 = vmatprep.subr.mxu0 0.0
        %3328 = vmatpush2.msra.mxu0 0.0
        %3329 = vmatprep.subr.mxu0 0.0
        %3330 = vmatpush2.msra.mxu0 0.0
        %3331 = vmatprep.subr.mxu0 0.0
        %3332 = vmatpush2.msra.mxu0 0.0
        %3333 = vmatprep.subr.mxu0 0.0
        %3334 = vmatpush2.msra.mxu0 0.0
        %3335 = vmatprep.subr.mxu0 0.0
        %3336 = vmatpush2.msra.mxu0 0.0
        %3337 = vmatprep.subr.mxu0 0.0
        %3338 = vmatpush2.msra.mxu0 0.0
        %3339 = vmatprep.subr.mxu0 0.0
        %3340 = vmatpush2.msra.mxu0 0.0
        %3341 = vmatprep.mubr.f32.mxu0 0.0
        %3342 = vmatmul.mubr.f32.gmra.mxu0 %v3238
        %v3343 = vpop.f32.mrf.mxu0
        %v3344 = vadd.f32 0.0, %v3343
        %v3345 = vpop.f32.mrf.mxu0
        %v3346 = vadd.f32 0.0, %v3345
        %3347 = vmatprep.mubr.f32.mxu0 0.0
        %3348 = vmatmul.mubr.f32.gmra.mxu0 %v3240
        %v3349 = vpop.f32.mrf.mxu0
        %v3350 = vadd.f32 0.0, %v3349
        %v3351 = vpop.f32.mrf.mxu0
        %v3352 = vadd.f32 0.0, %v3351
        %3353 = vmatprep.mubr.f32.mxu0 0.0
        %3354 = vmatmul.mubr.f32.gmra.mxu0 %v3242
        %v3355 = vpop.f32.mrf.mxu0
        %v3356 = vadd.f32 0.0, %v3355
        %v3357 = vpop.f32.mrf.mxu0
        %v3358 = vadd.f32 0.0, %v3357
        %3359 = vmatprep.mubr.f32.mxu0 0.0
        %3360 = vmatmul.mubr.f32.gmra.mxu0 %v3244
        %v3361 = vpop.f32.mrf.mxu0
        %v3362 = vadd.f32 0.0, %v3361
        %v3363 = vpop.f32.mrf.mxu0
        %v3364 = vadd.f32 0.0, %v3363
        %3365 = vmatprep.mubr.f32.mxu0 0.0
        %3366 = vmatmul.mubr.f32.gmra.mxu0 %v3246
        %v3367 = vpop.f32.mrf.mxu0
        %v3368 = vadd.f32 0.0, %v3367
        %v3369 = vpop.f32.mrf.mxu0
        %v3370 = vadd.f32 0.0, %v3369
        %3371 = vmatprep.mubr.f32.mxu0 0.0
        %3372 = vmatmul.mubr.f32.gmra.mxu0 %v3248
        %v3373 = vpop.f32.mrf.mxu0
        %v3374 = vadd.f32 0.0, %v3373
        %v3375 = vpop.f32.mrf.mxu0
        %v3376 = vadd.f32 0.0, %v3375
        %3377 = vmatprep.mubr.f32.mxu0 0.0
        %3378 = vmatmul.mubr.f32.gmra.mxu0 %v3250
        %v3379 = vpop.f32.mrf.mxu0
        %v3380 = vadd.f32 0.0, %v3379
        %v3381 = vpop.f32.mrf.mxu0
        %v3382 = vadd.f32 0.0, %v3381
        %3383 = vmatprep.mubr.f32.mxu0 0.0
        %3384 = vmatmul.mubr.f32.gmra.mxu0 %v3252
        %v3385 = vpop.f32.mrf.mxu0
        %v3386 = vadd.f32 0.0, %v3385
        %v3387 = vpop.f32.mrf.mxu0
        %v3388 = vadd.f32 0.0, %v3387
        %3389 = vmatprep.mubr.f32.mxu0 0.0
        %3390 = vmatmul.mubr.f32.gmra.mxu0 %v3254
        %v3391 = vpop.f32.mrf.mxu0
        %v3392 = vadd.f32 0.0, %v3391
        %v3393 = vpop.f32.mrf.mxu0
        %v3394 = vadd.f32 0.0, %v3393
        %3395 = vmatprep.mubr.f32.mxu0 0.0
        %3396 = vmatmul.mubr.f32.gmra.mxu0 %v3256
        %v3397 = vpop.f32.mrf.mxu0
        %v3398 = vadd.f32 0.0, %v3397
        %v3399 = vpop.f32.mrf.mxu0
        %v3400 = vadd.f32 0.0, %v3399
        %3401 = vmatprep.mubr.f32.mxu0 0.0
        %3402 = vmatmul.mubr.f32.gmra.mxu0 %v3258
        %v3403 = vpop.f32.mrf.mxu0
        %v3404 = vadd.f32 0.0, %v3403
        %v3405 = vpop.f32.mrf.mxu0
        %v3406 = vadd.f32 0.0, %v3405
        %3407 = vmatprep.mubr.f32.mxu0 0.0
        %3408 = vmatmul.mubr.f32.gmra.mxu0 %v3260
        %v3409 = vpop.f32.mrf.mxu0
        %v3410 = vadd.f32 0.0, %v3409
        %v3411 = vpop.f32.mrf.mxu0
        %v3412 = vadd.f32 0.0, %v3411
        %3413 = vmatprep.mubr.f32.mxu0 0.0
        %3414 = vmatmul.mubr.f32.gmra.mxu0 %v3262
        %v3415 = vpop.f32.mrf.mxu0
        %v3416 = vadd.f32 0.0, %v3415
        %v3417 = vpop.f32.mrf.mxu0
        %v3418 = vadd.f32 0.0, %v3417
        %3419 = vmatprep.mubr.f32.mxu0 0.0
        %3420 = vmatmul.mubr.f32.gmra.mxu0 %v3261
        %v3421 = vpop.f32.mrf.mxu0
        %v3422 = vadd.f32 0.0, %v3421
        %v3423 = vpop.f32.mrf.mxu0
        %v3424 = vadd.f32 0.0, %v3423
        %3425 = vdwg.mxu0
        %v3426 = vadd.f32 %v3120, %v3344
        %v3427 = vadd.f32 %v3122, %v3346
        %v3428 = vadd.f32 %v3126, %v3350
        %v3429 = vadd.f32 %v3128, %v3352
        %v3430 = vadd.f32 %v3132, %v3356
        %v3431 = vadd.f32 %v3134, %v3358
        %v3432 = vadd.f32 %v3138, %v3362
        %v3433 = vadd.f32 %v3140, %v3364
        %v3434 = vadd.f32 %v3144, %v3368
        %v3435 = vadd.f32 %v3146, %v3370
        %v3436 = vadd.f32 %v3150, %v3374
        %v3437 = vadd.f32 %v3152, %v3376
        %v3438 = vadd.f32 %v3156, %v3380
        %v3439 = vadd.f32 %v3158, %v3382
        %v3440 = vadd.f32 %v3162, %v3386
        %v3441 = vadd.f32 %v3164, %v3388
        %v3442 = vadd.f32 %v3168, %v3392
        %v3443 = vadd.f32 %v3170, %v3394
        %v3444 = vadd.f32 %v3174, %v3398
        %v3445 = vadd.f32 %v3176, %v3400
        %v3446 = vadd.f32 %v3180, %v3404
        %v3447 = vadd.f32 %v3182, %v3406
        %v3448 = vadd.f32 %v3186, %v3410
        %v3449 = vadd.f32 %v3188, %v3412
        %v3450 = vadd.f32 %v3192, %v3416
        %v3451 = vadd.f32 %v3194, %v3418
        %v3452 = vadd.f32 %v3198, %v3422
        %v3453 = vadd.f32 %v3200, %v3424
        %s3454 = scalar_lea.vmem %s4, 768
        %v3455 = vld [vmem:[%s3454] sm:$0xff]
        %v3456 = vld [vmem:[%s3454 + $0x8] sm:$0xff]
        %v3457 = vld [vmem:[%s3454 + $0x10] sm:$0xff]
        %v3458 = vld [vmem:[%s3454 + $0x18] sm:$0xff]
        %v3459 = vld [vmem:[%s3454 + $0x20] sm:$0xff]
        %v3460 = vld [vmem:[%s3454 + $0x28] sm:$0xff]
        %v3461 = vld [vmem:[%s3454 + $0x30] sm:$0xff]
        %v3462 = vld [vmem:[%s3454 + $0x38] sm:$0xff]
        %v3463 = vld [vmem:[%s3454 + $0x40] sm:$0xff]
        %v3464 = vld [vmem:[%s3454 + $0x48] sm:$0xff]
        %v3465 = vld [vmem:[%s3454 + $0x50] sm:$0xff]
        %v3466 = vld [vmem:[%s3454 + $0x58] sm:$0xff]
        %v3467 = vld [vmem:[%s3454 + $0x60] sm:$0xff]
        %v3468 = vld [vmem:[%s3454 + $0x68] sm:$0xff]
        %v3469 = vld [vmem:[%s3454 + $0x70] sm:$0xff]
        %v3470 = vld [vmem:[%s3454 + $0x78] sm:$0xff]
        %v3471 = vld [vmem:[%s3454 + $0x80] sm:$0xff]
        %v3472 = vld [vmem:[%s3454 + $0x88] sm:$0xff]
        %v3473 = vld [vmem:[%s3454 + $0x90] sm:$0xff]
        %v3474 = vld [vmem:[%s3454 + $0x98] sm:$0xff]
        %v3475 = vld [vmem:[%s3454 + $0xa0] sm:$0xff]
        %v3476 = vld [vmem:[%s3454 + $0xa8] sm:$0xff]
        %v3477 = vld [vmem:[%s3454 + $0xb0] sm:$0xff]
        %v3478 = vld [vmem:[%s3454 + $0xb8] sm:$0xff]
        %v3479 = vld [vmem:[%s3454 + $0xc0] sm:$0xff]
        %v3480 = vld [vmem:[%s3454 + $0xc8] sm:$0xff]
        %v3481 = vld [vmem:[%s3454 + $0xd0] sm:$0xff]
        %v3482 = vld [vmem:[%s3454 + $0xd8] sm:$0xff]
        %v3483 = vld [vmem:[%s3454 + $0xe0] sm:$0xff]
        %v3484 = vld [vmem:[%s3454 + $0xe8] sm:$0xff]
        %v3485 = vld [vmem:[%s3454 + $0xf0] sm:$0xff]
        %v3486 = vld [vmem:[%s3454 + $0xf8] sm:$0xff]
        %vm3487 = vcmask 1044480
        %v3488 = vrot.slane %v2716, 3
        %v3489 = vrot.slane %v2721, 3
        %v3490 = vsel %vm3487, %v3488, %v3489
        %v3491 = vrot.slane %v2726, 3
        %v3492 = vsel %vm3487, %v3489, %v3491
        %v3493 = vrot.slane %v2731, 3
        %v3494 = vsel %vm3487, %v3491, %v3493
        %v3495 = vrot.slane %v2736, 3
        %v3496 = vsel %vm3487, %v3493, %v3495
        %v3497 = vrot.slane %v2741, 3
        %v3498 = vsel %vm3487, %v3495, %v3497
        %v3499 = vrot.slane %v2746, 3
        %v3500 = vsel %vm3487, %v3497, %v3499
        %v3501 = vrot.slane %v2751, 3
        %v3502 = vsel %vm3487, %v3499, %v3501
        %v3503 = vrot.slane %v2756, 3
        %v3504 = vsel %vm3487, %v3501, %v3503
        %v3505 = vrot.slane %v2761, 3
        %v3506 = vsel %vm3487, %v3503, %v3505
        %v3507 = vrot.slane %v2766, 3
        %v3508 = vsel %vm3487, %v3505, %v3507
        %v3509 = vrot.slane %v2771, 3
        %v3510 = vsel %vm3487, %v3507, %v3509
        %v3511 = vrot.slane %v2776, 3
        %v3512 = vsel %vm3487, %v3509, %v3511
        %v3513 = vrot.slane %v2781, 3
        %v3514 = vsel %vm3487, %v3511, %v3513
        %3529 = vmatprep.subr.mxu0 %v3486
        %3530 = vmatpush1.msra.mxu0 %v3485
        %3531 = vmatprep.subr.mxu0 %v3484
        %3532 = vmatpush1.msra.mxu0 %v3483
        %3533 = vmatprep.subr.mxu0 %v3482
        %3534 = vmatpush1.msra.mxu0 %v3481
        %3535 = vmatprep.subr.mxu0 %v3480
        %3536 = vmatpush1.msra.mxu0 %v3479
        %3537 = vmatprep.subr.mxu0 %v3478
        %3538 = vmatpush1.msra.mxu0 %v3477
        %3539 = vmatprep.subr.mxu0 %v3476
        %3540 = vmatpush1.msra.mxu0 %v3475
        %3541 = vmatprep.subr.mxu0 %v3474
        %3542 = vmatpush1.msra.mxu0 %v3473
        %3543 = vmatprep.subr.mxu0 %v3472
        %3544 = vmatpush1.msra.mxu0 %v3471
        %3545 = vmatprep.subr.mxu0 %v3470
        %3546 = vmatpush1.msra.mxu0 %v3469
        %3547 = vmatprep.subr.mxu0 %v3468
        %3548 = vmatpush1.msra.mxu0 %v3467
        %3549 = vmatprep.subr.mxu0 %v3466
        %3550 = vmatpush1.msra.mxu0 %v3465
        %3551 = vmatprep.subr.mxu0 %v3464
        %3552 = vmatpush1.msra.mxu0 %v3463
        %3553 = vmatprep.subr.mxu0 %v3462
        %3554 = vmatpush1.msra.mxu0 %v3461
        %3555 = vmatprep.subr.mxu0 %v3460
        %3556 = vmatpush1.msra.mxu0 %v3459
        %3557 = vmatprep.subr.mxu0 %v3458
        %3558 = vmatpush1.msra.mxu0 %v3457
        %3559 = vmatprep.subr.mxu0 %v3456
        %3560 = vmatpush1.msra.mxu0 %v3455
        %3561 = vmatprep.subr.mxu0 0.0
        %3562 = vmatpush2.msra.mxu0 0.0
        %3563 = vmatprep.subr.mxu0 0.0
        %3564 = vmatpush2.msra.mxu0 0.0
        %3565 = vmatprep.subr.mxu0 0.0
        %3566 = vmatpush2.msra.mxu0 0.0
        %3567 = vmatprep.subr.mxu0 0.0
        %3568 = vmatpush2.msra.mxu0 0.0
        %3569 = vmatprep.subr.mxu0 0.0
        %3570 = vmatpush2.msra.mxu0 0.0
        %3571 = vmatprep.subr.mxu0 0.0
        %3572 = vmatpush2.msra.mxu0 0.0
        %3573 = vmatprep.subr.mxu0 0.0
        %3574 = vmatpush2.msra.mxu0 0.0
        %3575 = vmatprep.subr.mxu0 0.0
        %3576 = vmatpush2.msra.mxu0 0.0
        %3577 = vmatprep.subr.mxu0 0.0
        %3578 = vmatpush2.msra.mxu0 0.0
        %3579 = vmatprep.subr.mxu0 0.0
        %3580 = vmatpush2.msra.mxu0 0.0
        %3581 = vmatprep.subr.mxu0 0.0
        %3582 = vmatpush2.msra.mxu0 0.0
        %3583 = vmatprep.subr.mxu0 0.0
        %3584 = vmatpush2.msra.mxu0 0.0
        %3585 = vmatprep.subr.mxu0 0.0
        %3586 = vmatpush2.msra.mxu0 0.0
        %3587 = vmatprep.subr.mxu0 0.0
        %3588 = vmatpush2.msra.mxu0 0.0
        %3589 = vmatprep.subr.mxu0 0.0
        %3590 = vmatpush2.msra.mxu0 0.0
        %3591 = vmatprep.subr.mxu0 0.0
        %3592 = vmatpush2.msra.mxu0 0.0
        %3593 = vmatprep.mubr.f32.mxu0 0.0
        %3594 = vmatmul.mubr.f32.gmra.mxu0 %v3490
        %v3595 = vpop.f32.mrf.mxu0
        %v3596 = vadd.f32 0.0, %v3595
        %v3597 = vpop.f32.mrf.mxu0
        %v3598 = vadd.f32 0.0, %v3597
        %3599 = vmatprep.mubr.f32.mxu0 0.0
        %3600 = vmatmul.mubr.f32.gmra.mxu0 %v3492
        %v3601 = vpop.f32.mrf.mxu0
        %v3602 = vadd.f32 0.0, %v3601
        %v3603 = vpop.f32.mrf.mxu0
        %v3604 = vadd.f32 0.0, %v3603
        %3605 = vmatprep.mubr.f32.mxu0 0.0
        %3606 = vmatmul.mubr.f32.gmra.mxu0 %v3494
        %v3607 = vpop.f32.mrf.mxu0
        %v3608 = vadd.f32 0.0, %v3607
        %v3609 = vpop.f32.mrf.mxu0
        %v3610 = vadd.f32 0.0, %v3609
        %3611 = vmatprep.mubr.f32.mxu0 0.0
        %3612 = vmatmul.mubr.f32.gmra.mxu0 %v3496
        %v3613 = vpop.f32.mrf.mxu0
        %v3614 = vadd.f32 0.0, %v3613
        %v3615 = vpop.f32.mrf.mxu0
        %v3616 = vadd.f32 0.0, %v3615
        %3617 = vmatprep.mubr.f32.mxu0 0.0
        %3618 = vmatmul.mubr.f32.gmra.mxu0 %v3498
        %v3619 = vpop.f32.mrf.mxu0
        %v3620 = vadd.f32 0.0, %v3619
        %v3621 = vpop.f32.mrf.mxu0
        %v3622 = vadd.f32 0.0, %v3621
        %3623 = vmatprep.mubr.f32.mxu0 0.0
        %3624 = vmatmul.mubr.f32.gmra.mxu0 %v3500
        %v3625 = vpop.f32.mrf.mxu0
        %v3626 = vadd.f32 0.0, %v3625
        %v3627 = vpop.f32.mrf.mxu0
        %v3628 = vadd.f32 0.0, %v3627
        %3629 = vmatprep.mubr.f32.mxu0 0.0
        %3630 = vmatmul.mubr.f32.gmra.mxu0 %v3502
        %v3631 = vpop.f32.mrf.mxu0
        %v3632 = vadd.f32 0.0, %v3631
        %v3633 = vpop.f32.mrf.mxu0
        %v3634 = vadd.f32 0.0, %v3633
        %3635 = vmatprep.mubr.f32.mxu0 0.0
        %3636 = vmatmul.mubr.f32.gmra.mxu0 %v3504
        %v3637 = vpop.f32.mrf.mxu0
        %v3638 = vadd.f32 0.0, %v3637
        %v3639 = vpop.f32.mrf.mxu0
        %v3640 = vadd.f32 0.0, %v3639
        %3641 = vmatprep.mubr.f32.mxu0 0.0
        %3642 = vmatmul.mubr.f32.gmra.mxu0 %v3506
        %v3643 = vpop.f32.mrf.mxu0
        %v3644 = vadd.f32 0.0, %v3643
        %v3645 = vpop.f32.mrf.mxu0
        %v3646 = vadd.f32 0.0, %v3645
        %3647 = vmatprep.mubr.f32.mxu0 0.0
        %3648 = vmatmul.mubr.f32.gmra.mxu0 %v3508
        %v3649 = vpop.f32.mrf.mxu0
        %v3650 = vadd.f32 0.0, %v3649
        %v3651 = vpop.f32.mrf.mxu0
        %v3652 = vadd.f32 0.0, %v3651
        %3653 = vmatprep.mubr.f32.mxu0 0.0
        %3654 = vmatmul.mubr.f32.gmra.mxu0 %v3510
        %v3655 = vpop.f32.mrf.mxu0
        %v3656 = vadd.f32 0.0, %v3655
        %v3657 = vpop.f32.mrf.mxu0
        %v3658 = vadd.f32 0.0, %v3657
        %3659 = vmatprep.mubr.f32.mxu0 0.0
        %3660 = vmatmul.mubr.f32.gmra.mxu0 %v3512
        %v3661 = vpop.f32.mrf.mxu0
        %v3662 = vadd.f32 0.0, %v3661
        %v3663 = vpop.f32.mrf.mxu0
        %v3664 = vadd.f32 0.0, %v3663
        %3665 = vmatprep.mubr.f32.mxu0 0.0
        %3666 = vmatmul.mubr.f32.gmra.mxu0 %v3514
        %v3667 = vpop.f32.mrf.mxu0
        %v3668 = vadd.f32 0.0, %v3667
        %v3669 = vpop.f32.mrf.mxu0
        %v3670 = vadd.f32 0.0, %v3669
        %3671 = vmatprep.mubr.f32.mxu0 0.0
        %3672 = vmatmul.mubr.f32.gmra.mxu0 %v3513
        %v3673 = vpop.f32.mrf.mxu0
        %v3674 = vadd.f32 0.0, %v3673
        %v3675 = vpop.f32.mrf.mxu0
        %v3676 = vadd.f32 0.0, %v3675
        %3677 = vdwg.mxu0
        %v3678 = vadd.f32 %v3426, %v3596
        %v3679 = vadd.f32 %v3427, %v3598
        %v3680 = vadd.f32 %v3428, %v3602
        %v3681 = vadd.f32 %v3429, %v3604
        %v3682 = vadd.f32 %v3430, %v3608
        %v3683 = vadd.f32 %v3431, %v3610
        %v3684 = vadd.f32 %v3432, %v3614
        %v3685 = vadd.f32 %v3433, %v3616
        %v3686 = vadd.f32 %v3434, %v3620
        %v3687 = vadd.f32 %v3435, %v3622
        %v3688 = vadd.f32 %v3436, %v3626
        %v3689 = vadd.f32 %v3437, %v3628
        %v3690 = vadd.f32 %v3438, %v3632
        %v3691 = vadd.f32 %v3439, %v3634
        %v3692 = vadd.f32 %v3440, %v3638
        %v3693 = vadd.f32 %v3441, %v3640
        %v3694 = vadd.f32 %v3442, %v3644
        %v3695 = vadd.f32 %v3443, %v3646
        %v3696 = vadd.f32 %v3444, %v3650
        %v3697 = vadd.f32 %v3445, %v3652
        %v3698 = vadd.f32 %v3446, %v3656
        %v3699 = vadd.f32 %v3447, %v3658
        %v3700 = vadd.f32 %v3448, %v3662
        %v3701 = vadd.f32 %v3449, %v3664
        %v3702 = vadd.f32 %v3450, %v3668
        %v3703 = vadd.f32 %v3451, %v3670
        %v3704 = vadd.f32 %v3452, %v3674
        %v3705 = vadd.f32 %v3453, %v3676
        %s3706 = scalar_lea.vmem %s4, 1024
        %v3707 = vld [vmem:[%s3706] sm:$0xff]
        %v3708 = vld [vmem:[%s3706 + $0x8] sm:$0xff]
        %v3709 = vld [vmem:[%s3706 + $0x10] sm:$0xff]
        %v3710 = vld [vmem:[%s3706 + $0x18] sm:$0xff]
        %v3711 = vld [vmem:[%s3706 + $0x20] sm:$0xff]
        %v3712 = vld [vmem:[%s3706 + $0x28] sm:$0xff]
        %v3713 = vld [vmem:[%s3706 + $0x30] sm:$0xff]
        %v3714 = vld [vmem:[%s3706 + $0x38] sm:$0xff]
        %v3715 = vld [vmem:[%s3706 + $0x40] sm:$0xff]
        %v3716 = vld [vmem:[%s3706 + $0x48] sm:$0xff]
        %v3717 = vld [vmem:[%s3706 + $0x50] sm:$0xff]
        %v3718 = vld [vmem:[%s3706 + $0x58] sm:$0xff]
        %v3719 = vld [vmem:[%s3706 + $0x60] sm:$0xff]
        %v3720 = vld [vmem:[%s3706 + $0x68] sm:$0xff]
        %v3721 = vld [vmem:[%s3706 + $0x70] sm:$0xff]
        %v3722 = vld [vmem:[%s3706 + $0x78] sm:$0xff]
        %v3723 = vld [vmem:[%s3706 + $0x80] sm:$0xff]
        %v3724 = vld [vmem:[%s3706 + $0x88] sm:$0xff]
        %v3725 = vld [vmem:[%s3706 + $0x90] sm:$0xff]
        %v3726 = vld [vmem:[%s3706 + $0x98] sm:$0xff]
        %v3727 = vld [vmem:[%s3706 + $0xa0] sm:$0xff]
        %v3728 = vld [vmem:[%s3706 + $0xa8] sm:$0xff]
        %v3729 = vld [vmem:[%s3706 + $0xb0] sm:$0xff]
        %v3730 = vld [vmem:[%s3706 + $0xb8] sm:$0xff]
        %v3731 = vld [vmem:[%s3706 + $0xc0] sm:$0xff]
        %v3732 = vld [vmem:[%s3706 + $0xc8] sm:$0xff]
        %v3733 = vld [vmem:[%s3706 + $0xd0] sm:$0xff]
        %v3734 = vld [vmem:[%s3706 + $0xd8] sm:$0xff]
        %v3735 = vld [vmem:[%s3706 + $0xe0] sm:$0xff]
        %v3736 = vld [vmem:[%s3706 + $0xe8] sm:$0xff]
        %v3737 = vld [vmem:[%s3706 + $0xf0] sm:$0xff]
        %v3738 = vld [vmem:[%s3706 + $0xf8] sm:$0xff]
        %vm3739 = vcmask 1043456
        %v3740 = vrot.slane %v2716, 4
        %v3741 = vrot.slane %v2721, 4
        %v3742 = vsel %vm3739, %v3740, %v3741
        %v3743 = vrot.slane %v2726, 4
        %v3744 = vsel %vm3739, %v3741, %v3743
        %v3745 = vrot.slane %v2731, 4
        %v3746 = vsel %vm3739, %v3743, %v3745
        %v3747 = vrot.slane %v2736, 4
        %v3748 = vsel %vm3739, %v3745, %v3747
        %v3749 = vrot.slane %v2741, 4
        %v3750 = vsel %vm3739, %v3747, %v3749
        %v3751 = vrot.slane %v2746, 4
        %v3752 = vsel %vm3739, %v3749, %v3751
        %v3753 = vrot.slane %v2751, 4
        %v3754 = vsel %vm3739, %v3751, %v3753
        %v3755 = vrot.slane %v2756, 4
        %v3756 = vsel %vm3739, %v3753, %v3755
        %v3757 = vrot.slane %v2761, 4
        %v3758 = vsel %vm3739, %v3755, %v3757
        %v3759 = vrot.slane %v2766, 4
        %v3760 = vsel %vm3739, %v3757, %v3759
        %v3761 = vrot.slane %v2771, 4
        %v3762 = vsel %vm3739, %v3759, %v3761
        %v3763 = vrot.slane %v2776, 4
        %v3764 = vsel %vm3739, %v3761, %v3763
        %v3765 = vrot.slane %v2781, 4
        %v3766 = vsel %vm3739, %v3763, %v3765
        %3781 = vmatprep.subr.mxu0 %v3738
        %3782 = vmatpush1.msra.mxu0 %v3737
        %3783 = vmatprep.subr.mxu0 %v3736
        %3784 = vmatpush1.msra.mxu0 %v3735
        %3785 = vmatprep.subr.mxu0 %v3734
        %3786 = vmatpush1.msra.mxu0 %v3733
        %3787 = vmatprep.subr.mxu0 %v3732
        %3788 = vmatpush1.msra.mxu0 %v3731
        %3789 = vmatprep.subr.mxu0 %v3730
        %3790 = vmatpush1.msra.mxu0 %v3729
        %3791 = vmatprep.subr.mxu0 %v3728
        %3792 = vmatpush1.msra.mxu0 %v3727
        %3793 = vmatprep.subr.mxu0 %v3726
        %3794 = vmatpush1.msra.mxu0 %v3725
        %3795 = vmatprep.subr.mxu0 %v3724
        %3796 = vmatpush1.msra.mxu0 %v3723
        %3797 = vmatprep.subr.mxu0 %v3722
        %3798 = vmatpush1.msra.mxu0 %v3721
        %3799 = vmatprep.subr.mxu0 %v3720
        %3800 = vmatpush1.msra.mxu0 %v3719
        %3801 = vmatprep.subr.mxu0 %v3718
        %3802 = vmatpush1.msra.mxu0 %v3717
        %3803 = vmatprep.subr.mxu0 %v3716
        %3804 = vmatpush1.msra.mxu0 %v3715
        %3805 = vmatprep.subr.mxu0 %v3714
        %3806 = vmatpush1.msra.mxu0 %v3713
        %3807 = vmatprep.subr.mxu0 %v3712
        %3808 = vmatpush1.msra.mxu0 %v3711
        %3809 = vmatprep.subr.mxu0 %v3710
        %3810 = vmatpush1.msra.mxu0 %v3709
        %3811 = vmatprep.subr.mxu0 %v3708
        %3812 = vmatpush1.msra.mxu0 %v3707
        %3813 = vmatprep.subr.mxu0 0.0
        %3814 = vmatpush2.msra.mxu0 0.0
        %3815 = vmatprep.subr.mxu0 0.0
        %3816 = vmatpush2.msra.mxu0 0.0
        %3817 = vmatprep.subr.mxu0 0.0
        %3818 = vmatpush2.msra.mxu0 0.0
        %3819 = vmatprep.subr.mxu0 0.0
        %3820 = vmatpush2.msra.mxu0 0.0
        %3821 = vmatprep.subr.mxu0 0.0
        %3822 = vmatpush2.msra.mxu0 0.0
        %3823 = vmatprep.subr.mxu0 0.0
        %3824 = vmatpush2.msra.mxu0 0.0
        %3825 = vmatprep.subr.mxu0 0.0
        %3826 = vmatpush2.msra.mxu0 0.0
        %3827 = vmatprep.subr.mxu0 0.0
        %3828 = vmatpush2.msra.mxu0 0.0
        %3829 = vmatprep.subr.mxu0 0.0
        %3830 = vmatpush2.msra.mxu0 0.0
        %3831 = vmatprep.subr.mxu0 0.0
        %3832 = vmatpush2.msra.mxu0 0.0
        %3833 = vmatprep.subr.mxu0 0.0
        %3834 = vmatpush2.msra.mxu0 0.0
        %3835 = vmatprep.subr.mxu0 0.0
        %3836 = vmatpush2.msra.mxu0 0.0
        %3837 = vmatprep.subr.mxu0 0.0
        %3838 = vmatpush2.msra.mxu0 0.0
        %3839 = vmatprep.subr.mxu0 0.0
        %3840 = vmatpush2.msra.mxu0 0.0
        %3841 = vmatprep.subr.mxu0 0.0
        %3842 = vmatpush2.msra.mxu0 0.0
        %3843 = vmatprep.subr.mxu0 0.0
        %3844 = vmatpush2.msra.mxu0 0.0
        %3845 = vmatprep.mubr.f32.mxu0 0.0
        %3846 = vmatmul.mubr.f32.gmra.mxu0 %v3742
        %v3847 = vpop.f32.mrf.mxu0
        %v3848 = vadd.f32 0.0, %v3847
        %v3849 = vpop.f32.mrf.mxu0
        %v3850 = vadd.f32 0.0, %v3849
        %3851 = vmatprep.mubr.f32.mxu0 0.0
        %3852 = vmatmul.mubr.f32.gmra.mxu0 %v3744
        %v3853 = vpop.f32.mrf.mxu0
        %v3854 = vadd.f32 0.0, %v3853
        %v3855 = vpop.f32.mrf.mxu0
        %v3856 = vadd.f32 0.0, %v3855
        %3857 = vmatprep.mubr.f32.mxu0 0.0
        %3858 = vmatmul.mubr.f32.gmra.mxu0 %v3746
        %v3859 = vpop.f32.mrf.mxu0
        %v3860 = vadd.f32 0.0, %v3859
        %v3861 = vpop.f32.mrf.mxu0
        %v3862 = vadd.f32 0.0, %v3861
        %3863 = vmatprep.mubr.f32.mxu0 0.0
        %3864 = vmatmul.mubr.f32.gmra.mxu0 %v3748
        %v3865 = vpop.f32.mrf.mxu0
        %v3866 = vadd.f32 0.0, %v3865
        %v3867 = vpop.f32.mrf.mxu0
        %v3868 = vadd.f32 0.0, %v3867
        %3869 = vmatprep.mubr.f32.mxu0 0.0
        %3870 = vmatmul.mubr.f32.gmra.mxu0 %v3750
        %v3871 = vpop.f32.mrf.mxu0
        %v3872 = vadd.f32 0.0, %v3871
        %v3873 = vpop.f32.mrf.mxu0
        %v3874 = vadd.f32 0.0, %v3873
        %3875 = vmatprep.mubr.f32.mxu0 0.0
        %3876 = vmatmul.mubr.f32.gmra.mxu0 %v3752
        %v3877 = vpop.f32.mrf.mxu0
        %v3878 = vadd.f32 0.0, %v3877
        %v3879 = vpop.f32.mrf.mxu0
        %v3880 = vadd.f32 0.0, %v3879
        %3881 = vmatprep.mubr.f32.mxu0 0.0
        %3882 = vmatmul.mubr.f32.gmra.mxu0 %v3754
        %v3883 = vpop.f32.mrf.mxu0
        %v3884 = vadd.f32 0.0, %v3883
        %v3885 = vpop.f32.mrf.mxu0
        %v3886 = vadd.f32 0.0, %v3885
        %3887 = vmatprep.mubr.f32.mxu0 0.0
        %3888 = vmatmul.mubr.f32.gmra.mxu0 %v3756
        %v3889 = vpop.f32.mrf.mxu0
        %v3890 = vadd.f32 0.0, %v3889
        %v3891 = vpop.f32.mrf.mxu0
        %v3892 = vadd.f32 0.0, %v3891
        %3893 = vmatprep.mubr.f32.mxu0 0.0
        %3894 = vmatmul.mubr.f32.gmra.mxu0 %v3758
        %v3895 = vpop.f32.mrf.mxu0
        %v3896 = vadd.f32 0.0, %v3895
        %v3897 = vpop.f32.mrf.mxu0
        %v3898 = vadd.f32 0.0, %v3897
        %3899 = vmatprep.mubr.f32.mxu0 0.0
        %3900 = vmatmul.mubr.f32.gmra.mxu0 %v3760
        %v3901 = vpop.f32.mrf.mxu0
        %v3902 = vadd.f32 0.0, %v3901
        %v3903 = vpop.f32.mrf.mxu0
        %v3904 = vadd.f32 0.0, %v3903
        %3905 = vmatprep.mubr.f32.mxu0 0.0
        %3906 = vmatmul.mubr.f32.gmra.mxu0 %v3762
        %v3907 = vpop.f32.mrf.mxu0
        %v3908 = vadd.f32 0.0, %v3907
        %v3909 = vpop.f32.mrf.mxu0
        %v3910 = vadd.f32 0.0, %v3909
        %3911 = vmatprep.mubr.f32.mxu0 0.0
        %3912 = vmatmul.mubr.f32.gmra.mxu0 %v3764
        %v3913 = vpop.f32.mrf.mxu0
        %v3914 = vadd.f32 0.0, %v3913
        %v3915 = vpop.f32.mrf.mxu0
        %v3916 = vadd.f32 0.0, %v3915
        %3917 = vmatprep.mubr.f32.mxu0 0.0
        %3918 = vmatmul.mubr.f32.gmra.mxu0 %v3766
        %v3919 = vpop.f32.mrf.mxu0
        %v3920 = vadd.f32 0.0, %v3919
        %v3921 = vpop.f32.mrf.mxu0
        %v3922 = vadd.f32 0.0, %v3921
        %3923 = vmatprep.mubr.f32.mxu0 0.0
        %3924 = vmatmul.mubr.f32.gmra.mxu0 %v3765
        %v3925 = vpop.f32.mrf.mxu0
        %v3926 = vadd.f32 0.0, %v3925
        %v3927 = vpop.f32.mrf.mxu0
        %v3928 = vadd.f32 0.0, %v3927
        %3929 = vdwg.mxu0
        %v3930 = vadd.f32 %v3678, %v3848
        %v3931 = vadd.f32 %v3679, %v3850
        %v3932 = vadd.f32 %v3680, %v3854
        %v3933 = vadd.f32 %v3681, %v3856
        %v3934 = vadd.f32 %v3682, %v3860
        %v3935 = vadd.f32 %v3683, %v3862
        %v3936 = vadd.f32 %v3684, %v3866
        %v3937 = vadd.f32 %v3685, %v3868
        %v3938 = vadd.f32 %v3686, %v3872
        %v3939 = vadd.f32 %v3687, %v3874
        %v3940 = vadd.f32 %v3688, %v3878
        %v3941 = vadd.f32 %v3689, %v3880
        %v3942 = vadd.f32 %v3690, %v3884
        %v3943 = vadd.f32 %v3691, %v3886
        %v3944 = vadd.f32 %v3692, %v3890
        %v3945 = vadd.f32 %v3693, %v3892
        %v3946 = vadd.f32 %v3694, %v3896
        %v3947 = vadd.f32 %v3695, %v3898
        %v3948 = vadd.f32 %v3696, %v3902
        %v3949 = vadd.f32 %v3697, %v3904
        %v3950 = vadd.f32 %v3698, %v3908
        %v3951 = vadd.f32 %v3699, %v3910
        %v3952 = vadd.f32 %v3700, %v3914
        %v3953 = vadd.f32 %v3701, %v3916
        %v3954 = vadd.f32 %v3702, %v3920
        %v3955 = vadd.f32 %v3703, %v3922
        %v3956 = vadd.f32 %v3704, %v3926
        %v3957 = vadd.f32 %v3705, %v3928
        %v3958 = vld [vmem:[%s5] sm:$0x3]
        %v3960 = vlaneseq
        %v3961 = vshrl.u32 %v3960, 7
        %v3962 = vsub.s32 0, %v3961
        %v3963 = vrot.slane %v3958, %v3962
        %v3964 = vlaneseq
        %v3965 = vshrl.u32 %v3964, 7
        %v3966 = vsub.s32 1, %v3965
        %v3967 = vrot.slane %v3958, %v3966
        %v3970 = vadd.f32 %v3930, %v3963
        %v3971 = vadd.f32 %v3931, %v3967
        %v3972 = vadd.f32 %v3932, %v3963
        %v3973 = vadd.f32 %v3933, %v3967
        %v3974 = vadd.f32 %v3934, %v3963
        %v3975 = vadd.f32 %v3935, %v3967
        %v3976 = vadd.f32 %v3936, %v3963
        %v3977 = vadd.f32 %v3937, %v3967
        %v3978 = vadd.f32 %v3938, %v3963
        %v3979 = vadd.f32 %v3939, %v3967
        %v3980 = vadd.f32 %v3940, %v3963
        %v3981 = vadd.f32 %v3941, %v3967
        %v3982 = vadd.f32 %v3942, %v3963
        %v3983 = vadd.f32 %v3943, %v3967
        %v3984 = vadd.f32 %v3944, %v3963
        %v3985 = vadd.f32 %v3945, %v3967
        %v3986 = vadd.f32 %v3946, %v3963
        %v3987 = vadd.f32 %v3947, %v3967
        %v3988 = vadd.f32 %v3948, %v3963
        %v3989 = vadd.f32 %v3949, %v3967
        %v3990 = vadd.f32 %v3950, %v3963
        %v3991 = vadd.f32 %v3951, %v3967
        %v3992 = vadd.f32 %v3952, %v3963
        %v3993 = vadd.f32 %v3953, %v3967
        %v3994 = vadd.f32 %v3954, %v3963
        %v3995 = vadd.f32 %v3955, %v3967
        %v3996 = vadd.f32 %v3956, %v3963
        %v3997 = vadd.f32 %v3957, %v3967
        %v3998 = vmax.f32 %v3970, 0.0
        %v3999 = vmax.f32 %v3971, 0.0
        %v4000 = vmax.f32 %v3972, 0.0
        %v4001 = vmax.f32 %v3973, 0.0
        %v4002 = vmax.f32 %v3974, 0.0
        %v4003 = vmax.f32 %v3975, 0.0
        %v4004 = vmax.f32 %v3976, 0.0
        %v4005 = vmax.f32 %v3977, 0.0
        %v4006 = vmax.f32 %v3978, 0.0
        %v4007 = vmax.f32 %v3979, 0.0
        %v4008 = vmax.f32 %v3980, 0.0
        %v4009 = vmax.f32 %v3981, 0.0
        %v4010 = vmax.f32 %v3982, 0.0
        %v4011 = vmax.f32 %v3983, 0.0
        %v4012 = vmax.f32 %v3984, 0.0
        %v4013 = vmax.f32 %v3985, 0.0
        %v4014 = vmax.f32 %v3986, 0.0
        %v4015 = vmax.f32 %v3987, 0.0
        %v4016 = vmax.f32 %v3988, 0.0
        %v4017 = vmax.f32 %v3989, 0.0
        %v4018 = vmax.f32 %v3990, 0.0
        %v4019 = vmax.f32 %v3991, 0.0
        %v4020 = vmax.f32 %v3992, 0.0
        %v4021 = vmax.f32 %v3993, 0.0
        %v4022 = vmax.f32 %v3994, 0.0
        %v4023 = vmax.f32 %v3995, 0.0
        %v4024 = vmax.f32 %v3996, 0.0
        %v4025 = vmax.f32 %v3997, 0.0
        %v4026 = vmax.f32 %v3998, %v3999
        %v4027 = vmax.f32 %v4000, %v4001
        %v4028 = vmax.f32 %v4002, %v4003
        %v4029 = vmax.f32 %v4004, %v4005
        %v4030 = vmax.f32 %v4006, %v4007
        %v4031 = vmax.f32 %v4008, %v4009
        %v4032 = vmax.f32 %v4010, %v4011
        %v4033 = vmax.f32 %v4012, %v4013
        %v4034 = vmax.f32 %v4014, %v4015
        %v4035 = vmax.f32 %v4016, %v4017
        %v4036 = vmax.f32 %v4018, %v4019
        %v4037 = vmax.f32 %v4020, %v4021
        %v4038 = vmax.f32 %v4022, %v4023
        %v4039 = vmax.f32 %v4024, %v4025
        %v4054 = vrot.slane %v4026, 1
        %v4055 = vrot.slane %v4027, 1
        %v4056 = vsel %vm2446, %v4054, %v4055
        %v4057 = vrot.slane %v4028, 1
        %v4058 = vsel %vm2446, %v4055, %v4057
        %v4059 = vrot.slane %v4029, 1
        %v4060 = vsel %vm2446, %v4057, %v4059
        %v4061 = vrot.slane %v4030, 1
        %v4062 = vsel %vm2446, %v4059, %v4061
        %v4063 = vrot.slane %v4031, 1
        %v4064 = vsel %vm2446, %v4061, %v4063
        %v4065 = vrot.slane %v4032, 1
        %v4066 = vsel %vm2446, %v4063, %v4065
        %v4067 = vrot.slane %v4033, 1
        %v4068 = vsel %vm2446, %v4065, %v4067
        %v4069 = vrot.slane %v4034, 1
        %v4070 = vsel %vm2446, %v4067, %v4069
        %v4071 = vrot.slane %v4035, 1
        %v4072 = vsel %vm2446, %v4069, %v4071
        %v4073 = vrot.slane %v4036, 1
        %v4074 = vsel %vm2446, %v4071, %v4073
        %v4075 = vrot.slane %v4037, 1
        %v4076 = vsel %vm2446, %v4073, %v4075
        %v4077 = vrot.slane %v4038, 1
        %v4078 = vsel %vm2446, %v4075, %v4077
        %v4079 = vrot.slane %v4039, 1
        %v4080 = vsel %vm2446, %v4077, %v4079
        %v4095 = vmax.f32 %v4026, %v4056
        %v4096 = vmax.f32 %v4027, %v4058
        %v4097 = vmax.f32 %v4028, %v4060
        %v4098 = vmax.f32 %v4029, %v4062
        %v4099 = vmax.f32 %v4030, %v4064
        %v4100 = vmax.f32 %v4031, %v4066
        %v4101 = vmax.f32 %v4032, %v4068
        %v4102 = vmax.f32 %v4033, %v4070
        %v4103 = vmax.f32 %v4034, %v4072
        %v4104 = vmax.f32 %v4035, %v4074
        %v4105 = vmax.f32 %v4036, %v4076
        %v4106 = vmax.f32 %v4037, %v4078
        %v4107 = vmax.f32 %v4038, %v4080
        %v4108 = vmax.f32 %v4039, %v4079
        %v4109 = vld [vmem:[%s6] sm:$0xff]
        %v4110 = vld [vmem:[%s6 + $0x8] sm:$0xff]
        %v4111 = vld [vmem:[%s6 + $0x10] sm:$0xff]
        %v4112 = vld [vmem:[%s6 + $0x18] sm:$0xff]
        %v4113 = vld [vmem:[%s6 + $0x20] sm:$0xff]
        %vm4114 = vcmask 875520
        %v4116 = vsel %vm4114, %v4109, 0
        %v4119 = vsel %vm4114, %v4110, 0
        %v4122 = vsel %vm4114, %v4111, 0
        %v4125 = vsel %vm4114, %v4112, 0
        %v4128 = vsel %vm4114, %v4113, 0
        %v4131 = vsel %vm2645, %v4108, 0
        %4133 = vmatprep.subr.mxu0 0.0
        %4134 = vmatpush1.msra.mxu0 0.0
        %4135 = vmatprep.subr.mxu0 0.0
        %4136 = vmatpush1.msra.mxu0 0.0
        %4137 = vmatprep.subr.mxu0 0.0
        %4138 = vmatpush1.msra.mxu0 %v4131
        %4139 = vmatprep.subr.mxu0 0.0
        %4140 = vmatpush1.msra.mxu0 %v4107
        %4141 = vmatprep.subr.mxu0 0.0
        %4142 = vmatpush1.msra.mxu0 %v4106
        %4143 = vmatprep.subr.mxu0 0.0
        %4144 = vmatpush1.msra.mxu0 %v4105
        %4145 = vmatprep.subr.mxu0 0.0
        %4146 = vmatpush1.msra.mxu0 %v4104
        %4147 = vmatprep.subr.mxu0 0.0
        %4148 = vmatpush1.msra.mxu0 %v4103
        %4149 = vmatprep.subr.mxu0 0.0
        %4150 = vmatpush1.msra.mxu0 %v4102
        %4151 = vmatprep.subr.mxu0 0.0
        %4152 = vmatpush1.msra.mxu0 %v4101
        %4153 = vmatprep.subr.mxu0 0.0
        %4154 = vmatpush1.msra.mxu0 %v4100
        %4155 = vmatprep.subr.mxu0 0.0
        %4156 = vmatpush1.msra.mxu0 %v4099
        %4157 = vmatprep.subr.mxu0 0.0
        %4158 = vmatpush1.msra.mxu0 %v4098
        %4159 = vmatprep.subr.mxu0 0.0
        %4160 = vmatpush1.msra.mxu0 %v4097
        %4161 = vmatprep.subr.mxu0 0.0
        %4162 = vmatpush1.msra.mxu0 %v4096
        %4163 = vmatprep.subr.mxu0 0.0
        %4164 = vmatpush1.msra.mxu0 %v4095
        %4165 = vmatprep.subr.mxu0 0.0
        %4166 = vmatpush2.msra.mxu0 0.0
        %4167 = vmatprep.subr.mxu0 0.0
        %4168 = vmatpush2.msra.mxu0 0.0
        %4169 = vmatprep.subr.mxu0 0.0
        %4170 = vmatpush2.msra.mxu0 0.0
        %4171 = vmatprep.subr.mxu0 0.0
        %4172 = vmatpush2.msra.mxu0 0.0
        %4173 = vmatprep.subr.mxu0 0.0
        %4174 = vmatpush2.msra.mxu0 0.0
        %4175 = vmatprep.subr.mxu0 0.0
        %4176 = vmatpush2.msra.mxu0 0.0
        %4177 = vmatprep.subr.mxu0 0.0
        %4178 = vmatpush2.msra.mxu0 0.0
        %4179 = vmatprep.subr.mxu0 0.0
        %4180 = vmatpush2.msra.mxu0 0.0
        %4181 = vmatprep.subr.mxu0 0.0
        %4182 = vmatpush2.msra.mxu0 0.0
        %4183 = vmatprep.subr.mxu0 0.0
        %4184 = vmatpush2.msra.mxu0 0.0
        %4185 = vmatprep.subr.mxu0 0.0
        %4186 = vmatpush2.msra.mxu0 0.0
        %4187 = vmatprep.subr.mxu0 0.0
        %4188 = vmatpush2.msra.mxu0 0.0
        %4189 = vmatprep.subr.mxu0 0.0
        %4190 = vmatpush2.msra.mxu0 0.0
        %4191 = vmatprep.subr.mxu0 0.0
        %4192 = vmatpush2.msra.mxu0 0.0
        %4193 = vmatprep.subr.mxu0 0.0
        %4194 = vmatpush2.msra.mxu0 0.0
        %4195 = vmatprep.subr.mxu0 0.0
        %4196 = vmatpush2.msra.mxu0 0.0
        %4197 = vmatprep.mubr.f32.mxu0 0.0
        %4198 = vmatmul.mubr.f32.gmra.mxu0 %v4116
        %v4199 = vpop.f32.mrf.mxu0
        %v4200 = vadd.f32 0.0, %v4199
        %v4201 = vpop.f32.mrf.mxu0
        %4202 = vmatprep.mubr.f32.mxu0 0.0
        %4203 = vmatmul.mubr.f32.gmra.mxu0 %v4119
        %v4204 = vpop.f32.mrf.mxu0
        %v4205 = vadd.f32 0.0, %v4204
        %v4206 = vpop.f32.mrf.mxu0
        %4207 = vmatprep.mubr.f32.mxu0 0.0
        %4208 = vmatmul.mubr.f32.gmra.mxu0 %v4122
        %v4209 = vpop.f32.mrf.mxu0
        %v4210 = vadd.f32 0.0, %v4209
        %v4211 = vpop.f32.mrf.mxu0
        %4212 = vmatprep.mubr.f32.mxu0 0.0
        %4213 = vmatmul.mubr.f32.gmra.mxu0 %v4125
        %v4214 = vpop.f32.mrf.mxu0
        %v4215 = vadd.f32 0.0, %v4214
        %v4216 = vpop.f32.mrf.mxu0
        %4217 = vmatprep.mubr.f32.mxu0 0.0
        %4218 = vmatmul.mubr.f32.gmra.mxu0 %v4128
        %v4219 = vpop.f32.mrf.mxu0
        %v4220 = vadd.f32 0.0, %v4219
        %v4221 = vpop.f32.mrf.mxu0
        %4222 = vdwg.mxu0
        %v4223 = vld [vmem:[%s7] sm:$0xff]
        %v4224 = vld [vmem:[%s7 + $0x8] sm:$0xff]
        %v4225 = vld [vmem:[%s7 + $0x10] sm:$0xff]
        %v4226 = vld [vmem:[%s7 + $0x18] sm:$0xff]
        %v4227 = vld [vmem:[%s7 + $0x20] sm:$0xff]
        %v4228 = vld [vmem:[%s7 + $0x28] sm:$0xff]
        %v4229 = vld [vmem:[%s7 + $0x30] sm:$0xff]
        %v4230 = vld [vmem:[%s7 + $0x38] sm:$0xff]
        %v4231 = vld [vmem:[%s7 + $0x40] sm:$0xff]
        %v4232 = vld [vmem:[%s7 + $0x48] sm:$0xff]
        %v4233 = vld [vmem:[%s7 + $0x50] sm:$0xff]
        %v4234 = vld [vmem:[%s7 + $0x58] sm:$0xff]
        %v4235 = vld [vmem:[%s7 + $0x60] sm:$0xff]
        %v4236 = vld [vmem:[%s7 + $0x68] sm:$0xff]
        %v4237 = vld [vmem:[%s7 + $0x70] sm:$0xff]
        %v4238 = vld [vmem:[%s7 + $0x78] sm:$0xff]
        %s4239 = scalar_lea.vmem %s7, 128
        %v4240 = vld [vmem:[%s4239] sm:$0xff]
        %v4241 = vld [vmem:[%s4239 + $0x8] sm:$0xff]
        %v4242 = vld [vmem:[%s4239 + $0x10] sm:$0xff]
        %v4243 = vld [vmem:[%s4239 + $0x18] sm:$0xff]
        %v4244 = vld [vmem:[%s4239 + $0x20] sm:$0xff]
        %v4245 = vld [vmem:[%s4239 + $0x28] sm:$0xff]
        %v4246 = vld [vmem:[%s4239 + $0x30] sm:$0xff]
        %v4247 = vld [vmem:[%s4239 + $0x38] sm:$0xff]
        %v4248 = vld [vmem:[%s4239 + $0x40] sm:$0xff]
        %v4249 = vld [vmem:[%s4239 + $0x48] sm:$0xff]
        %v4250 = vld [vmem:[%s4239 + $0x50] sm:$0xff]
        %v4251 = vld [vmem:[%s4239 + $0x58] sm:$0xff]
        %v4252 = vld [vmem:[%s4239 + $0x60] sm:$0xff]
        %v4253 = vld [vmem:[%s4239 + $0x68] sm:$0xff]
        %v4254 = vld [vmem:[%s4239 + $0x70] sm:$0xff]
        %v4255 = vld [vmem:[%s4239 + $0x78] sm:$0xff]
        %4256 = vmatprep.subr.mxu0 0.0
        %4257 = vmatpush1.msra.mxu0 %v4255
        %4258 = vmatprep.subr.mxu0 0.0
        %4259 = vmatpush1.msra.mxu0 %v4254
        %4260 = vmatprep.subr.mxu0 0.0
        %4261 = vmatpush1.msra.mxu0 %v4253
        %4262 = vmatprep.subr.mxu0 0.0
        %4263 = vmatpush1.msra.mxu0 %v4252
        %4264 = vmatprep.subr.mxu0 0.0
        %4265 = vmatpush1.msra.mxu0 %v4251
        %4266 = vmatprep.subr.mxu0 0.0
        %4267 = vmatpush1.msra.mxu0 %v4250
        %4268 = vmatprep.subr.mxu0 0.0
        %4269 = vmatpush1.msra.mxu0 %v4249
        %4270 = vmatprep.subr.mxu0 0.0
        %4271 = vmatpush1.msra.mxu0 %v4248
        %4272 = vmatprep.subr.mxu0 0.0
        %4273 = vmatpush1.msra.mxu0 %v4247
        %4274 = vmatprep.subr.mxu0 0.0
        %4275 = vmatpush1.msra.mxu0 %v4246
        %4276 = vmatprep.subr.mxu0 0.0
        %4277 = vmatpush1.msra.mxu0 %v4245
        %4278 = vmatprep.subr.mxu0 0.0
        %4279 = vmatpush1.msra.mxu0 %v4244
        %4280 = vmatprep.subr.mxu0 0.0
        %4281 = vmatpush1.msra.mxu0 %v4243
        %4282 = vmatprep.subr.mxu0 0.0
        %4283 = vmatpush1.msra.mxu0 %v4242
        %4284 = vmatprep.subr.mxu0 0.0
        %4285 = vmatpush1.msra.mxu0 %v4241
        %4286 = vmatprep.subr.mxu0 0.0
        %4287 = vmatpush1.msra.mxu0 %v4240
        %4288 = vmatprep.subr.mxu0 0.0
        %4289 = vmatpush2.msra.mxu0 0.0
        %4290 = vmatprep.subr.mxu0 0.0
        %4291 = vmatpush2.msra.mxu0 0.0
        %4292 = vmatprep.subr.mxu0 0.0
        %4293 = vmatpush2.msra.mxu0 0.0
        %4294 = vmatprep.subr.mxu0 0.0
        %4295 = vmatpush2.msra.mxu0 0.0
        %4296 = vmatprep.subr.mxu0 0.0
        %4297 = vmatpush2.msra.mxu0 0.0
        %4298 = vmatprep.subr.mxu0 0.0
        %4299 = vmatpush2.msra.mxu0 0.0
        %4300 = vmatprep.subr.mxu0 0.0
        %4301 = vmatpush2.msra.mxu0 0.0
        %4302 = vmatprep.subr.mxu0 0.0
        %4303 = vmatpush2.msra.mxu0 0.0
        %4304 = vmatprep.subr.mxu0 0.0
        %4305 = vmatpush2.msra.mxu0 0.0
        %4306 = vmatprep.subr.mxu0 0.0
        %4307 = vmatpush2.msra.mxu0 0.0
        %4308 = vmatprep.subr.mxu0 0.0
        %4309 = vmatpush2.msra.mxu0 0.0
        %4310 = vmatprep.subr.mxu0 0.0
        %4311 = vmatpush2.msra.mxu0 0.0
        %4312 = vmatprep.subr.mxu0 0.0
        %4313 = vmatpush2.msra.mxu0 0.0
        %4314 = vmatprep.subr.mxu0 0.0
        %4315 = vmatpush2.msra.mxu0 0.0
        %4316 = vmatprep.subr.mxu0 0.0
        %4317 = vmatpush2.msra.mxu0 0.0
        %4318 = vmatprep.subr.mxu0 0.0
        %4319 = vmatpush2.msra.mxu0 0.0
        %4320 = vmatprep.mubr.f32.mxu0 0.0
        %4321 = vmatmul.mubr.f32.gmra.mxu0 %v4205
        %v4322 = vpop.f32.mrf.mxu0
        %v4323 = vadd.f32 0.0, %v4322
        %v4324 = vpop.f32.mrf.mxu0
        %4325 = vdwg.mxu0
        %4326 = vmatprep.subr.mxu0 0.0
        %4327 = vmatpush1.msra.mxu0 %v4238
        %4328 = vmatprep.subr.mxu0 0.0
        %4329 = vmatpush1.msra.mxu0 %v4237
        %4330 = vmatprep.subr.mxu0 0.0
        %4331 = vmatpush1.msra.mxu0 %v4236
        %4332 = vmatprep.subr.mxu0 0.0
        %4333 = vmatpush1.msra.mxu0 %v4235
        %4334 = vmatprep.subr.mxu0 0.0
        %4335 = vmatpush1.msra.mxu0 %v4234
        %4336 = vmatprep.subr.mxu0 0.0
        %4337 = vmatpush1.msra.mxu0 %v4233
        %4338 = vmatprep.subr.mxu0 0.0
        %4339 = vmatpush1.msra.mxu0 %v4232
        %4340 = vmatprep.subr.mxu0 0.0
        %4341 = vmatpush1.msra.mxu0 %v4231
        %4342 = vmatprep.subr.mxu0 0.0
        %4343 = vmatpush1.msra.mxu0 %v4230
        %4344 = vmatprep.subr.mxu0 0.0
        %4345 = vmatpush1.msra.mxu0 %v4229
        %4346 = vmatprep.subr.mxu0 0.0
        %4347 = vmatpush1.msra.mxu0 %v4228
        %4348 = vmatprep.subr.mxu0 0.0
        %4349 = vmatpush1.msra.mxu0 %v4227
        %4350 = vmatprep.subr.mxu0 0.0
        %4351 = vmatpush1.msra.mxu0 %v4226
        %4352 = vmatprep.subr.mxu0 0.0
        %4353 = vmatpush1.msra.mxu0 %v4225
        %4354 = vmatprep.subr.mxu0 0.0
        %4355 = vmatpush1.msra.mxu0 %v4224
        %4356 = vmatprep.subr.mxu0 0.0
        %4357 = vmatpush1.msra.mxu0 %v4223
        %4358 = vmatprep.subr.mxu0 0.0
        %4359 = vmatpush2.msra.mxu0 0.0
        %4360 = vmatprep.subr.mxu0 0.0
        %4361 = vmatpush2.msra.mxu0 0.0
        %4362 = vmatprep.subr.mxu0 0.0
        %4363 = vmatpush2.msra.mxu0 0.0
        %4364 = vmatprep.subr.mxu0 0.0
        %4365 = vmatpush2.msra.mxu0 0.0
        %4366 = vmatprep.subr.mxu0 0.0
        %4367 = vmatpush2.msra.mxu0 0.0
        %4368 = vmatprep.subr.mxu0 0.0
        %4369 = vmatpush2.msra.mxu0 0.0
        %4370 = vmatprep.subr.mxu0 0.0
        %4371 = vmatpush2.msra.mxu0 0.0
        %4372 = vmatprep.subr.mxu0 0.0
        %4373 = vmatpush2.msra.mxu0 0.0
        %4374 = vmatprep.subr.mxu0 0.0
        %4375 = vmatpush2.msra.mxu0 0.0
        %4376 = vmatprep.subr.mxu0 0.0
        %4377 = vmatpush2.msra.mxu0 0.0
        %4378 = vmatprep.subr.mxu0 0.0
        %4379 = vmatpush2.msra.mxu0 0.0
        %4380 = vmatprep.subr.mxu0 0.0
        %4381 = vmatpush2.msra.mxu0 0.0
        %4382 = vmatprep.subr.mxu0 0.0
        %4383 = vmatpush2.msra.mxu0 0.0
        %4384 = vmatprep.subr.mxu0 0.0
        %4385 = vmatpush2.msra.mxu0 0.0
        %4386 = vmatprep.subr.mxu0 0.0
        %4387 = vmatpush2.msra.mxu0 0.0
        %4388 = vmatprep.subr.mxu0 0.0
        %4389 = vmatpush2.msra.mxu0 0.0
        %4390 = vmatprep.mubr.f32.mxu0 0.0
        %4391 = vmatmul.mubr.f32.gmra.mxu0 %v4200
        %v4392 = vpop.f32.mrf.mxu0
        %v4393 = vadd.f32 %v4323, %v4392
        %v4394 = vpop.f32.mrf.mxu0
        %4395 = vdwg.mxu0
        %s4396 = scalar_lea.vmem %s7, 256
        %v4397 = vld [vmem:[%s4396] sm:$0xff]
        %v4398 = vld [vmem:[%s4396 + $0x8] sm:$0xff]
        %v4399 = vld [vmem:[%s4396 + $0x10] sm:$0xff]
        %v4400 = vld [vmem:[%s4396 + $0x18] sm:$0xff]
        %v4401 = vld [vmem:[%s4396 + $0x20] sm:$0xff]
        %v4402 = vld [vmem:[%s4396 + $0x28] sm:$0xff]
        %v4403 = vld [vmem:[%s4396 + $0x30] sm:$0xff]
        %v4404 = vld [vmem:[%s4396 + $0x38] sm:$0xff]
        %v4405 = vld [vmem:[%s4396 + $0x40] sm:$0xff]
        %v4406 = vld [vmem:[%s4396 + $0x48] sm:$0xff]
        %v4407 = vld [vmem:[%s4396 + $0x50] sm:$0xff]
        %v4408 = vld [vmem:[%s4396 + $0x58] sm:$0xff]
        %v4409 = vld [vmem:[%s4396 + $0x60] sm:$0xff]
        %v4410 = vld [vmem:[%s4396 + $0x68] sm:$0xff]
        %v4411 = vld [vmem:[%s4396 + $0x70] sm:$0xff]
        %v4412 = vld [vmem:[%s4396 + $0x78] sm:$0xff]
        %4413 = vmatprep.subr.mxu0 0.0
        %4414 = vmatpush1.msra.mxu0 %v4412
        %4415 = vmatprep.subr.mxu0 0.0
        %4416 = vmatpush1.msra.mxu0 %v4411
        %4417 = vmatprep.subr.mxu0 0.0
        %4418 = vmatpush1.msra.mxu0 %v4410
        %4419 = vmatprep.subr.mxu0 0.0
        %4420 = vmatpush1.msra.mxu0 %v4409
        %4421 = vmatprep.subr.mxu0 0.0
        %4422 = vmatpush1.msra.mxu0 %v4408
        %4423 = vmatprep.subr.mxu0 0.0
        %4424 = vmatpush1.msra.mxu0 %v4407
        %4425 = vmatprep.subr.mxu0 0.0
        %4426 = vmatpush1.msra.mxu0 %v4406
        %4427 = vmatprep.subr.mxu0 0.0
        %4428 = vmatpush1.msra.mxu0 %v4405
        %4429 = vmatprep.subr.mxu0 0.0
        %4430 = vmatpush1.msra.mxu0 %v4404
        %4431 = vmatprep.subr.mxu0 0.0
        %4432 = vmatpush1.msra.mxu0 %v4403
        %4433 = vmatprep.subr.mxu0 0.0
        %4434 = vmatpush1.msra.mxu0 %v4402
        %4435 = vmatprep.subr.mxu0 0.0
        %4436 = vmatpush1.msra.mxu0 %v4401
        %4437 = vmatprep.subr.mxu0 0.0
        %4438 = vmatpush1.msra.mxu0 %v4400
        %4439 = vmatprep.subr.mxu0 0.0
        %4440 = vmatpush1.msra.mxu0 %v4399
        %4441 = vmatprep.subr.mxu0 0.0
        %4442 = vmatpush1.msra.mxu0 %v4398
        %4443 = vmatprep.subr.mxu0 0.0
        %4444 = vmatpush1.msra.mxu0 %v4397
        %4445 = vmatprep.subr.mxu0 0.0
        %4446 = vmatpush2.msra.mxu0 0.0
        %4447 = vmatprep.subr.mxu0 0.0
        %4448 = vmatpush2.msra.mxu0 0.0
        %4449 = vmatprep.subr.mxu0 0.0
        %4450 = vmatpush2.msra.mxu0 0.0
        %4451 = vmatprep.subr.mxu0 0.0
        %4452 = vmatpush2.msra.mxu0 0.0
        %4453 = vmatprep.subr.mxu0 0.0
        %4454 = vmatpush2.msra.mxu0 0.0
        %4455 = vmatprep.subr.mxu0 0.0
        %4456 = vmatpush2.msra.mxu0 0.0
        %4457 = vmatprep.subr.mxu0 0.0
        %4458 = vmatpush2.msra.mxu0 0.0
        %4459 = vmatprep.subr.mxu0 0.0
        %4460 = vmatpush2.msra.mxu0 0.0
        %4461 = vmatprep.subr.mxu0 0.0
        %4462 = vmatpush2.msra.mxu0 0.0
        %4463 = vmatprep.subr.mxu0 0.0
        %4464 = vmatpush2.msra.mxu0 0.0
        %4465 = vmatprep.subr.mxu0 0.0
        %4466 = vmatpush2.msra.mxu0 0.0
        %4467 = vmatprep.subr.mxu0 0.0
        %4468 = vmatpush2.msra.mxu0 0.0
        %4469 = vmatprep.subr.mxu0 0.0
        %4470 = vmatpush2.msra.mxu0 0.0
        %4471 = vmatprep.subr.mxu0 0.0
        %4472 = vmatpush2.msra.mxu0 0.0
        %4473 = vmatprep.subr.mxu0 0.0
        %4474 = vmatpush2.msra.mxu0 0.0
        %4475 = vmatprep.subr.mxu0 0.0
        %4476 = vmatpush2.msra.mxu0 0.0
        %4477 = vmatprep.mubr.f32.mxu0 0.0
        %4478 = vmatmul.mubr.f32.gmra.mxu0 %v4210
        %v4479 = vpop.f32.mrf.mxu0
        %v4480 = vadd.f32 0.0, %v4479
        %v4481 = vpop.f32.mrf.mxu0
        %4482 = vdwg.mxu0
        %v4483 = vadd.f32 %v4393, %v4480
        %s4484 = scalar_lea.vmem %s7, 384
        %v4485 = vld [vmem:[%s4484] sm:$0xff]
        %v4486 = vld [vmem:[%s4484 + $0x8] sm:$0xff]
        %v4487 = vld [vmem:[%s4484 + $0x10] sm:$0xff]
        %v4488 = vld [vmem:[%s4484 + $0x18] sm:$0xff]
        %v4489 = vld [vmem:[%s4484 + $0x20] sm:$0xff]
        %v4490 = vld [vmem:[%s4484 + $0x28] sm:$0xff]
        %v4491 = vld [vmem:[%s4484 + $0x30] sm:$0xff]
        %v4492 = vld [vmem:[%s4484 + $0x38] sm:$0xff]
        %v4493 = vld [vmem:[%s4484 + $0x40] sm:$0xff]
        %v4494 = vld [vmem:[%s4484 + $0x48] sm:$0xff]
        %v4495 = vld [vmem:[%s4484 + $0x50] sm:$0xff]
        %v4496 = vld [vmem:[%s4484 + $0x58] sm:$0xff]
        %v4497 = vld [vmem:[%s4484 + $0x60] sm:$0xff]
        %v4498 = vld [vmem:[%s4484 + $0x68] sm:$0xff]
        %v4499 = vld [vmem:[%s4484 + $0x70] sm:$0xff]
        %v4500 = vld [vmem:[%s4484 + $0x78] sm:$0xff]
        %4501 = vmatprep.subr.mxu0 0.0
        %4502 = vmatpush1.msra.mxu0 %v4500
        %4503 = vmatprep.subr.mxu0 0.0
        %4504 = vmatpush1.msra.mxu0 %v4499
        %4505 = vmatprep.subr.mxu0 0.0
        %4506 = vmatpush1.msra.mxu0 %v4498
        %4507 = vmatprep.subr.mxu0 0.0
        %4508 = vmatpush1.msra.mxu0 %v4497
        %4509 = vmatprep.subr.mxu0 0.0
        %4510 = vmatpush1.msra.mxu0 %v4496
        %4511 = vmatprep.subr.mxu0 0.0
        %4512 = vmatpush1.msra.mxu0 %v4495
        %4513 = vmatprep.subr.mxu0 0.0
        %4514 = vmatpush1.msra.mxu0 %v4494
        %4515 = vmatprep.subr.mxu0 0.0
        %4516 = vmatpush1.msra.mxu0 %v4493
        %4517 = vmatprep.subr.mxu0 0.0
        %4518 = vmatpush1.msra.mxu0 %v4492
        %4519 = vmatprep.subr.mxu0 0.0
        %4520 = vmatpush1.msra.mxu0 %v4491
        %4521 = vmatprep.subr.mxu0 0.0
        %4522 = vmatpush1.msra.mxu0 %v4490
        %4523 = vmatprep.subr.mxu0 0.0
        %4524 = vmatpush1.msra.mxu0 %v4489
        %4525 = vmatprep.subr.mxu0 0.0
        %4526 = vmatpush1.msra.mxu0 %v4488
        %4527 = vmatprep.subr.mxu0 0.0
        %4528 = vmatpush1.msra.mxu0 %v4487
        %4529 = vmatprep.subr.mxu0 0.0
        %4530 = vmatpush1.msra.mxu0 %v4486
        %4531 = vmatprep.subr.mxu0 0.0
        %4532 = vmatpush1.msra.mxu0 %v4485
        %4533 = vmatprep.subr.mxu0 0.0
        %4534 = vmatpush2.msra.mxu0 0.0
        %4535 = vmatprep.subr.mxu0 0.0
        %4536 = vmatpush2.msra.mxu0 0.0
        %4537 = vmatprep.subr.mxu0 0.0
        %4538 = vmatpush2.msra.mxu0 0.0
        %4539 = vmatprep.subr.mxu0 0.0
        %4540 = vmatpush2.msra.mxu0 0.0
        %4541 = vmatprep.subr.mxu0 0.0
        %4542 = vmatpush2.msra.mxu0 0.0
        %4543 = vmatprep.subr.mxu0 0.0
        %4544 = vmatpush2.msra.mxu0 0.0
        %4545 = vmatprep.subr.mxu0 0.0
        %4546 = vmatpush2.msra.mxu0 0.0
        %4547 = vmatprep.subr.mxu0 0.0
        %4548 = vmatpush2.msra.mxu0 0.0
        %4549 = vmatprep.subr.mxu0 0.0
        %4550 = vmatpush2.msra.mxu0 0.0
        %4551 = vmatprep.subr.mxu0 0.0
        %4552 = vmatpush2.msra.mxu0 0.0
        %4553 = vmatprep.subr.mxu0 0.0
        %4554 = vmatpush2.msra.mxu0 0.0
        %4555 = vmatprep.subr.mxu0 0.0
        %4556 = vmatpush2.msra.mxu0 0.0
        %4557 = vmatprep.subr.mxu0 0.0
        %4558 = vmatpush2.msra.mxu0 0.0
        %4559 = vmatprep.subr.mxu0 0.0
        %4560 = vmatpush2.msra.mxu0 0.0
        %4561 = vmatprep.subr.mxu0 0.0
        %4562 = vmatpush2.msra.mxu0 0.0
        %4563 = vmatprep.subr.mxu0 0.0
        %4564 = vmatpush2.msra.mxu0 0.0
        %4565 = vmatprep.mubr.f32.mxu0 0.0
        %4566 = vmatmul.mubr.f32.gmra.mxu0 %v4215
        %v4567 = vpop.f32.mrf.mxu0
        %v4568 = vadd.f32 0.0, %v4567
        %v4569 = vpop.f32.mrf.mxu0
        %4570 = vdwg.mxu0
        %v4571 = vadd.f32 %v4483, %v4568
        %s4572 = scalar_lea.vmem %s7, 512
        %v4573 = vld [vmem:[%s4572] sm:$0xff]
        %v4574 = vld [vmem:[%s4572 + $0x8] sm:$0xff]
        %v4575 = vld [vmem:[%s4572 + $0x10] sm:$0xff]
        %v4576 = vld [vmem:[%s4572 + $0x18] sm:$0xff]
        %v4577 = vld [vmem:[%s4572 + $0x20] sm:$0xff]
        %v4578 = vld [vmem:[%s4572 + $0x28] sm:$0xff]
        %v4579 = vld [vmem:[%s4572 + $0x30] sm:$0xff]
        %v4580 = vld [vmem:[%s4572 + $0x38] sm:$0xff]
        %v4581 = vld [vmem:[%s4572 + $0x40] sm:$0xff]
        %v4582 = vld [vmem:[%s4572 + $0x48] sm:$0xff]
        %v4583 = vld [vmem:[%s4572 + $0x50] sm:$0xff]
        %v4584 = vld [vmem:[%s4572 + $0x58] sm:$0xff]
        %v4585 = vld [vmem:[%s4572 + $0x60] sm:$0xff]
        %v4586 = vld [vmem:[%s4572 + $0x68] sm:$0xff]
        %v4587 = vld [vmem:[%s4572 + $0x70] sm:$0xff]
        %v4588 = vld [vmem:[%s4572 + $0x78] sm:$0xff]
        %4589 = vmatprep.subr.mxu0 0.0
        %4590 = vmatpush1.msra.mxu0 %v4588
        %4591 = vmatprep.subr.mxu0 0.0
        %4592 = vmatpush1.msra.mxu0 %v4587
        %4593 = vmatprep.subr.mxu0 0.0
        %4594 = vmatpush1.msra.mxu0 %v4586
        %4595 = vmatprep.subr.mxu0 0.0
        %4596 = vmatpush1.msra.mxu0 %v4585
        %4597 = vmatprep.subr.mxu0 0.0
        %4598 = vmatpush1.msra.mxu0 %v4584
        %4599 = vmatprep.subr.mxu0 0.0
        %4600 = vmatpush1.msra.mxu0 %v4583
        %4601 = vmatprep.subr.mxu0 0.0
        %4602 = vmatpush1.msra.mxu0 %v4582
        %4603 = vmatprep.subr.mxu0 0.0
        %4604 = vmatpush1.msra.mxu0 %v4581
        %4605 = vmatprep.subr.mxu0 0.0
        %4606 = vmatpush1.msra.mxu0 %v4580
        %4607 = vmatprep.subr.mxu0 0.0
        %4608 = vmatpush1.msra.mxu0 %v4579
        %4609 = vmatprep.subr.mxu0 0.0
        %4610 = vmatpush1.msra.mxu0 %v4578
        %4611 = vmatprep.subr.mxu0 0.0
        %4612 = vmatpush1.msra.mxu0 %v4577
        %4613 = vmatprep.subr.mxu0 0.0
        %4614 = vmatpush1.msra.mxu0 %v4576
        %4615 = vmatprep.subr.mxu0 0.0
        %4616 = vmatpush1.msra.mxu0 %v4575
        %4617 = vmatprep.subr.mxu0 0.0
        %4618 = vmatpush1.msra.mxu0 %v4574
        %4619 = vmatprep.subr.mxu0 0.0
        %4620 = vmatpush1.msra.mxu0 %v4573
        %4621 = vmatprep.subr.mxu0 0.0
        %4622 = vmatpush2.msra.mxu0 0.0
        %4623 = vmatprep.subr.mxu0 0.0
        %4624 = vmatpush2.msra.mxu0 0.0
        %4625 = vmatprep.subr.mxu0 0.0
        %4626 = vmatpush2.msra.mxu0 0.0
        %4627 = vmatprep.subr.mxu0 0.0
        %4628 = vmatpush2.msra.mxu0 0.0
        %4629 = vmatprep.subr.mxu0 0.0
        %4630 = vmatpush2.msra.mxu0 0.0
        %4631 = vmatprep.subr.mxu0 0.0
        %4632 = vmatpush2.msra.mxu0 0.0
        %4633 = vmatprep.subr.mxu0 0.0
        %4634 = vmatpush2.msra.mxu0 0.0
        %4635 = vmatprep.subr.mxu0 0.0
        %4636 = vmatpush2.msra.mxu0 0.0
        %4637 = vmatprep.subr.mxu0 0.0
        %4638 = vmatpush2.msra.mxu0 0.0
        %4639 = vmatprep.subr.mxu0 0.0
        %4640 = vmatpush2.msra.mxu0 0.0
        %4641 = vmatprep.subr.mxu0 0.0
        %4642 = vmatpush2.msra.mxu0 0.0
        %4643 = vmatprep.subr.mxu0 0.0
        %4644 = vmatpush2.msra.mxu0 0.0
        %4645 = vmatprep.subr.mxu0 0.0
        %4646 = vmatpush2.msra.mxu0 0.0
        %4647 = vmatprep.subr.mxu0 0.0
        %4648 = vmatpush2.msra.mxu0 0.0
        %4649 = vmatprep.subr.mxu0 0.0
        %4650 = vmatpush2.msra.mxu0 0.0
        %4651 = vmatprep.subr.mxu0 0.0
        %4652 = vmatpush2.msra.mxu0 0.0
        %4653 = vmatprep.mubr.f32.mxu0 0.0
        %4654 = vmatmul.mubr.f32.gmra.mxu0 %v4220
        %v4655 = vpop.f32.mrf.mxu0
        %v4656 = vadd.f32 0.0, %v4655
        %v4657 = vpop.f32.mrf.mxu0
        %4658 = vdwg.mxu0
        %v4659 = vadd.f32 %v4571, %v4656
        %v4660 = vld [vmem:[%s8] sm:$0x1]
        %v4662 = vlaneseq
        %v4663 = vshrl.u32 %v4662, 7
        %v4664 = vsub.s32 0, %v4663
        %v4665 = vrot.slane %v4660, %v4664
        %v4667 = vadd.f32 %v4659, %v4665
        %v4668 = vmax.f32 %v4667, 0.0
        %v4669 = vld [vmem:[%s9] sm:$0xff]
        %v4670 = vld [vmem:[%s9 + $0x8] sm:$0xff]
        %v4671 = vld [vmem:[%s9 + $0x10] sm:$0xff]
        %v4672 = vld [vmem:[%s9 + $0x18] sm:$0xff]
        %v4673 = vld [vmem:[%s9 + $0x20] sm:$0xff]
        %v4674 = vld [vmem:[%s9 + $0x28] sm:$0xff]
        %v4675 = vld [vmem:[%s9 + $0x30] sm:$0xff]
        %v4676 = vld [vmem:[%s9 + $0x38] sm:$0xff]
        %v4677 = vld [vmem:[%s9 + $0x40] sm:$0xff]
        %v4678 = vld [vmem:[%s9 + $0x48] sm:$0xff]
        %v4679 = vld [vmem:[%s9 + $0x50] sm:$0xff]
        %v4680 = vld [vmem:[%s9 + $0x58] sm:$0xff]
        %v4681 = vld [vmem:[%s9 + $0x60] sm:$0xff]
        %v4682 = vld [vmem:[%s9 + $0x68] sm:$0xff]
        %v4683 = vld [vmem:[%s9 + $0x70] sm:$0xff]
        %v4684 = vld [vmem:[%s9 + $0x78] sm:$0xff]
        %v4685 = vld [vmem:[%s10] sm:$0x1]
        %v4687 = vlaneseq
        %v4688 = vshrl.u32 %v4687, 7
        %v4689 = vsub.s32 0, %v4688
        %v4690 = vrot.slane %v4685, %v4689
        %4692 = vmatprep.subr.mxu0 0.0
        %4693 = vmatpush1.msra.mxu0 %v4684
        %4694 = vmatprep.subr.mxu0 0.0
        %4695 = vmatpush1.msra.mxu0 %v4683
        %4696 = vmatprep.subr.mxu0 0.0
        %4697 = vmatpush1.msra.mxu0 %v4682
        %4698 = vmatprep.subr.mxu0 0.0
        %4699 = vmatpush1.msra.mxu0 %v4681
        %4700 = vmatprep.subr.mxu0 0.0
        %4701 = vmatpush1.msra.mxu0 %v4680
        %4702 = vmatprep.subr.mxu0 0.0
        %4703 = vmatpush1.msra.mxu0 %v4679
        %4704 = vmatprep.subr.mxu0 0.0
        %4705 = vmatpush1.msra.mxu0 %v4678
        %4706 = vmatprep.subr.mxu0 0.0
        %4707 = vmatpush1.msra.mxu0 %v4677
        %4708 = vmatprep.subr.mxu0 0.0
        %4709 = vmatpush1.msra.mxu0 %v4676
        %4710 = vmatprep.subr.mxu0 0.0
        %4711 = vmatpush1.msra.mxu0 %v4675
        %4712 = vmatprep.subr.mxu0 0.0
        %4713 = vmatpush1.msra.mxu0 %v4674
        %4714 = vmatprep.subr.mxu0 0.0
        %4715 = vmatpush1.msra.mxu0 %v4673
        %4716 = vmatprep.subr.mxu0 0.0
        %4717 = vmatpush1.msra.mxu0 %v4672
        %4718 = vmatprep.subr.mxu0 0.0
        %4719 = vmatpush1.msra.mxu0 %v4671
        %4720 = vmatprep.subr.mxu0 0.0
        %4721 = vmatpush1.msra.mxu0 %v4670
        %4722 = vmatprep.subr.mxu0 0.0
        %4723 = vmatpush1.msra.mxu0 %v4669
        %4724 = vmatprep.subr.mxu0 0.0
        %4725 = vmatpush2.msra.mxu0 0.0
        %4726 = vmatprep.subr.mxu0 0.0
        %4727 = vmatpush2.msra.mxu0 0.0
        %4728 = vmatprep.subr.mxu0 0.0
        %4729 = vmatpush2.msra.mxu0 0.0
        %4730 = vmatprep.subr.mxu0 0.0
        %4731 = vmatpush2.msra.mxu0 0.0
        %4732 = vmatprep.subr.mxu0 0.0
        %4733 = vmatpush2.msra.mxu0 0.0
        %4734 = vmatprep.subr.mxu0 0.0
        %4735 = vmatpush2.msra.mxu0 0.0
        %4736 = vmatprep.subr.mxu0 0.0
        %4737 = vmatpush2.msra.mxu0 0.0
        %4738 = vmatprep.subr.mxu0 0.0
        %4739 = vmatpush2.msra.mxu0 0.0
        %4740 = vmatprep.subr.mxu0 0.0
        %4741 = vmatpush2.msra.mxu0 0.0
        %4742 = vmatprep.subr.mxu0 0.0
        %4743 = vmatpush2.msra.mxu0 0.0
        %4744 = vmatprep.subr.mxu0 0.0
        %4745 = vmatpush2.msra.mxu0 0.0
        %4746 = vmatprep.subr.mxu0 0.0
        %4747 = vmatpush2.msra.mxu0 0.0
        %4748 = vmatprep.subr.mxu0 0.0
        %4749 = vmatpush2.msra.mxu0 0.0
        %4750 = vmatprep.subr.mxu0 0.0
        %4751 = vmatpush2.msra.mxu0 0.0
        %4752 = vmatprep.subr.mxu0 0.0
        %4753 = vmatpush2.msra.mxu0 0.0
        %4754 = vmatprep.subr.mxu0 0.0
        %4755 = vmatpush2.msra.mxu0 0.0
        %4756 = vmatprep.mubr.f32.mxu0 0.0
        %4757 = vmatmul.mubr.f32.gmra.mxu0 %v4668
        %v4758 = vpop.f32.mrf.mxu0
        %v4759 = vadd.f32 %v4690, %v4758
        %v4760 = vpop.f32.mrf.mxu0
        %4761 = vdwg.mxu0
        %v4762 = vmax.f32 %v4759, 0.0
        %v4763 = vld [vmem:[%s11] sm:$0xff]
        %v4764 = vld [vmem:[%s11 + $0x8] sm:$0xff]
        %v4765 = vld [vmem:[%s11 + $0x10] sm:$0xff]
        %v4766 = vld [vmem:[%s11 + $0x18] sm:$0xff]
        %v4767 = vld [vmem:[%s11 + $0x20] sm:$0xff]
        %v4768 = vld [vmem:[%s11 + $0x28] sm:$0xff]
        %v4769 = vld [vmem:[%s11 + $0x30] sm:$0xff]
        %v4770 = vld [vmem:[%s11 + $0x38] sm:$0xff]
        %v4771 = vld [vmem:[%s11 + $0x40] sm:$0xff]
        %v4772 = vld [vmem:[%s11 + $0x48] sm:$0xff]
        %v4773 = vld [vmem:[%s11 + $0x50] sm:$0xff]
        %v4774 = vld [vmem:[%s11 + $0x58] sm:$0xff]
        %v4775 = vld [vmem:[%s11 + $0x60] sm:$0xff]
        %v4776 = vld [vmem:[%s11 + $0x68] sm:$0xff]
        %v4777 = vld [vmem:[%s11 + $0x70] sm:$0xff]
        %v4778 = vld [vmem:[%s11 + $0x78] sm:$0xff]
        %v4779 = vld [vmem:[%s12] sm:$0x1]
        %v4781 = vlaneseq
        %v4782 = vshrl.u32 %v4781, 7
        %v4783 = vsub.s32 0, %v4782
        %v4784 = vrot.slane %v4779, %v4783
        %4786 = vmatprep.subr.mxu0 0.0
        %4787 = vmatpush1.msra.mxu0 %v4778
        %4788 = vmatprep.subr.mxu0 0.0
        %4789 = vmatpush1.msra.mxu0 %v4777
        %4790 = vmatprep.subr.mxu0 0.0
        %4791 = vmatpush1.msra.mxu0 %v4776
        %4792 = vmatprep.subr.mxu0 0.0
        %4793 = vmatpush1.msra.mxu0 %v4775
        %4794 = vmatprep.subr.mxu0 0.0
        %4795 = vmatpush1.msra.mxu0 %v4774
        %4796 = vmatprep.subr.mxu0 0.0
        %4797 = vmatpush1.msra.mxu0 %v4773
        %4798 = vmatprep.subr.mxu0 0.0
        %4799 = vmatpush1.msra.mxu0 %v4772
        %4800 = vmatprep.subr.mxu0 0.0
        %4801 = vmatpush1.msra.mxu0 %v4771
        %4802 = vmatprep.subr.mxu0 0.0
        %4803 = vmatpush1.msra.mxu0 %v4770
        %4804 = vmatprep.subr.mxu0 0.0
        %4805 = vmatpush1.msra.mxu0 %v4769
        %4806 = vmatprep.subr.mxu0 0.0
        %4807 = vmatpush1.msra.mxu0 %v4768
        %4808 = vmatprep.subr.mxu0 0.0
        %4809 = vmatpush1.msra.mxu0 %v4767
        %4810 = vmatprep.subr.mxu0 0.0
        %4811 = vmatpush1.msra.mxu0 %v4766
        %4812 = vmatprep.subr.mxu0 0.0
        %4813 = vmatpush1.msra.mxu0 %v4765
        %4814 = vmatprep.subr.mxu0 0.0
        %4815 = vmatpush1.msra.mxu0 %v4764
        %4816 = vmatprep.subr.mxu0 0.0
        %4817 = vmatpush1.msra.mxu0 %v4763
        %4818 = vmatprep.subr.mxu0 0.0
        %4819 = vmatpush2.msra.mxu0 0.0
        %4820 = vmatprep.subr.mxu0 0.0
        %4821 = vmatpush2.msra.mxu0 0.0
        %4822 = vmatprep.subr.mxu0 0.0
        %4823 = vmatpush2.msra.mxu0 0.0
        %4824 = vmatprep.subr.mxu0 0.0
        %4825 = vmatpush2.msra.mxu0 0.0
        %4826 = vmatprep.subr.mxu0 0.0
        %4827 = vmatpush2.msra.mxu0 0.0
        %4828 = vmatprep.subr.mxu0 0.0
        %4829 = vmatpush2.msra.mxu0 0.0
        %4830 = vmatprep.subr.mxu0 0.0
        %4831 = vmatpush2.msra.mxu0 0.0
        %4832 = vmatprep.subr.mxu0 0.0
        %4833 = vmatpush2.msra.mxu0 0.0
        %4834 = vmatprep.subr.mxu0 0.0
        %4835 = vmatpush2.msra.mxu0 0.0
        %4836 = vmatprep.subr.mxu0 0.0
        %4837 = vmatpush2.msra.mxu0 0.0
        %4838 = vmatprep.subr.mxu0 0.0
        %4839 = vmatpush2.msra.mxu0 0.0
        %4840 = vmatprep.subr.mxu0 0.0
        %4841 = vmatpush2.msra.mxu0 0.0
        %4842 = vmatprep.subr.mxu0 0.0
        %4843 = vmatpush2.msra.mxu0 0.0
        %4844 = vmatprep.subr.mxu0 0.0
        %4845 = vmatpush2.msra.mxu0 0.0
        %4846 = vmatprep.subr.mxu0 0.0
        %4847 = vmatpush2.msra.mxu0 0.0
        %4848 = vmatprep.subr.mxu0 0.0
        %4849 = vmatpush2.msra.mxu0 0.0
        %4850 = vmatprep.mubr.f32.mxu0 0.0
        %4851 = vmatmul.mubr.f32.gmra.mxu0 %v4762
        %v4852 = vpop.f32.mrf.mxu0
        %v4853 = vadd.f32 %v4784, %v4852
        %v4854 = vpop.f32.mrf.mxu0
        %4855 = vdwg.mxu0
        %4856 = vst [vmem:[%s434] sm:$0xff] %v4853
        %s4857 = sand.u32 %s313, 1
        %s4858 = scalar_lea.sflag [#allocation3], %s4857
        %s4859 = sand.u32 %s313, 1
        %s4860 = smul.addr %s4859, 8
        %s4861 = scalar_lea.vmem [#allocation2], %s4860
        // Predicated region
        $region73: #{net_forward.1} parent=71 // pred_check
          %p4862 = pneg %p323
        $region74: #{net_forward.1} parent=71 // pred_check_branch
          %4864 = sbr.rel (%p4862) target = $region76
        $region75: #{net_forward.1} parent=71 // pred_region
          %s4866 = ssub.s32 128, 128
          %4867 = vsyncadd %s4858, %s4866
          %s4868 = smul.addr %s27, 128
          %s4869 = scalar_lea.hbm %s13, %s4868
          %s4871 = sshll.u32 %s4861, 4
          %s4872 = int_to_ptr.vmem [resolvable:$true] %s4871
          %4874 = dma.vmem_to_hbm [thread:$0]  %s4872, 128, %s4869, %s4858
        $region76: #{net_forward.1} parent=71 // pred_fallthru
          _
      $region72: #{net_forward.1} parent=5 // pred_fallthru
        _
      %p4875 = scmp.le.s32.totalorder 2, %s22
      // Predicated region
      $region77: #{net_forward.1} parent=5 // pred_check
        %p4876 = pneg %p4875
      $region78: #{net_forward.1} parent=5 // pred_check_branch
        %4878 = sbr.rel (%p4876) target = $region80
      $region79: #{net_forward.1} parent=5 // pred_region
        %s4879 = ssub.s32 %s22, 2
        // Predicated region
        $region81: #{net_forward.1} parent=79 // pred_check
          %p4880 = pneg %p329
        $region82: #{net_forward.1} parent=79 // pred_check_branch
          %4882 = sbr.rel (%p4880) target = $region84
        $region83: #{net_forward.1} parent=79 // pred_region
          %s4883 = sand.u32 %s314, 1
          %s4884 = scalar_lea.sflag [#allocation3], %s4883
          %s4885 = sand.u32 %s314, 1
          %s4886 = smul.addr %s4885, 8
          %s4887 = scalar_lea.vmem [#allocation2], %s4886
          %4888 = dma.done %s4884, 128
        $region84: #{net_forward.1} parent=79 // pred_fallthru
          _
      $region80: #{net_forward.1} parent=5 // pred_fallthru
        _
    $region6: #{net_forward.1} parent=1 // loop_footer
      %s26 = sadd.s32 1, %s22
    $region7: #{net_forward.1} parent=1 // loop_footer_branch
      %21 = sbr.rel target = $region3
    $region8: #{net_forward.1} parent=1 // loop_exit
      _
    %4889 = vsyncpa [#allocation3], 1
    %s4890 = scalar_lea.sflag [#allocation3], 1
    %4891 = vsyncpa %s4890, 1

</llo_original>
